<compile_context>
chip_gen: v6e
topology: v6e:2x2x1
jax: 0.10.0
libtpu: 0.0.40
codegen_flags: <defaults>
</compile_context>

<pallas_src>
import math
import jax
import jax.numpy as jnp
from jax.experimental import pallas as pl
from jax.experimental.pallas import tpu as pltpu

B, S, D = 2, 8, 128      # batch, seq, d_model (module uses d_model=512; kept small)
H, DK = 4, 32            # heads, head dim (H * DK == D)
F = 64                   # d_ff (as in the module spec)
NLAYERS = 2              # encoder depth (module uses N=8; kept small)
NVEC = 8                 # stacked per-layer vectors: bo, b2, ln1a, ln1b, ln2a, ln2b, fna, fnb
EPS = 1e-6


def _layernorm(v, a, b):
    # annotated-transformer LayerNorm: a*(x-mean)/(std+eps)+b, torch.std is unbiased
    mean = jnp.mean(v, axis=-1, keepdims=True)
    d = v - mean
    var = jnp.sum(d * d, axis=-1, keepdims=True) / (D - 1)
    inv = pl.reciprocal(jnp.sqrt(var) + EPS, approx=False)   # divide -> EUP slot
    return a * d * inv + b


def encoder_kernel(x_ref, mask_ref, wqkv_ref, bqkv_ref, wo_ref,
                   w1_ref, b1_ref, w2_ref, vecs_ref, out_ref):
    l = pl.program_id(0)
    last = pl.num_programs(0) - 1

    @pl.when(l == 0)
    def _():
        out_ref[...] = x_ref[...]

    x = out_ref[...].reshape(B * S, D)     # (16, 128) running state, resident across layers

    vecs = vecs_ref[0]                     # (NVEC, D): stacked small per-layer vectors
    bo, b2 = vecs[0:1], vecs[1:2]
    ln1a, ln1b = vecs[2:3], vecs[3:4]
    ln2a, ln2b = vecs[4:5], vecs[5:6]
    fna, fnb = vecs[6:7], vecs[7:8]

    # ---- sublayer 1: pre-norm multi-head self-attention + residual ----
    xn = _layernorm(x, ln1a, ln1b)
    qkv = jnp.dot(xn, wqkv_ref[0], preferred_element_type=jnp.float32) + bqkv_ref[0]  # (16, 3D)
    q, k, v = qkv[:, 0:D], qkv[:, D:2 * D], qkv[:, 2 * D:3 * D]

    scale = 1.0 / math.sqrt(DK)
    masked = mask_ref[...] == 0.0          # (B, S, S): one compare per layer
    ctxs = []
    for b in range(B):                     # static loop; attention is tiny at S=8
        qb = q[b * S:(b + 1) * S].reshape(S, H, DK)
        kb = k[b * S:(b + 1) * S].reshape(S, H, DK)
        vb = v[b * S:(b + 1) * S].reshape(S, H, DK)
        s = jnp.einsum('qhd,khd->hqk', qb, kb,
                       preferred_element_type=jnp.float32) * scale       # (H, S, S)
        # masked_fill(mask==0, -1e9): replace (not add) to match torch semantics even
        # when a whole row is masked (the module's mask is all zeros).
        s = jnp.where(masked[b:b + 1], jnp.float32(-1e9), s)
        m = jnp.max(s, axis=-1, keepdims=True)
        p = jnp.exp(s - m)
        p = p * pl.reciprocal(jnp.sum(p, axis=-1, keepdims=True), approx=False)
        cb = jnp.einsum('hqk,khd->qhd', p, vb,
                        preferred_element_type=jnp.float32)              # (S, H, DK)
        ctxs.append(cb.reshape(S, D))
    ctx = jnp.concatenate(ctxs, axis=0)                                   # (16, 128)
    x = x + jnp.dot(ctx, wo_ref[0], preferred_element_type=jnp.float32) + bo
    # (dropout p=0.2 -> identity in eval mode)

    # ---- sublayer 2: pre-norm position-wise FFN + residual (true width F=64) ----
    xn2 = _layernorm(x, ln2a, ln2b)
    hdn = jnp.maximum(
        jnp.dot(xn2, w1_ref[0], preferred_element_type=jnp.float32) + b1_ref[0], 0.0)
    x = x + jnp.dot(hdn, w2_ref[0], preferred_element_type=jnp.float32) + b2

    @pl.when(l < last)
    def _():
        out_ref[...] = x.reshape(B, S, D)          # running state for next layer

    @pl.when(l == last)
    def _():
        out_ref[...] = _layernorm(x, fna, fnb).reshape(B, S, D)   # Encoder.norm


def encoder_forward(x, mask, params):
    (wq, bq, wk, bk, wv, bv, wo, bo,
     ln1a, ln1b, w1, b1, w2, b2, ln2a, ln2b, fna, fnb) = params

    # Fuse QKV weights/biases -> one MXU weight load per layer instead of three.
    wqkv = jnp.concatenate([wq, wk, wv], axis=-1)          # (NLAYERS, D, 3D)
    bqkv = jnp.concatenate([bq, bk, bv], axis=-1)          # (NLAYERS, 1, 3D)

    # Stack all small D-vectors into one per-layer tensor (final-norm params duplicated
    # per layer; only used on the last grid step).
    fna_l = jnp.broadcast_to(fna, (NLAYERS, 1, D))
    fnb_l = jnp.broadcast_to(fnb, (NLAYERS, 1, D))
    vecs = jnp.concatenate([bo, b2, ln1a, ln1b, ln2a, ln2b, fna_l, fnb_l],
                           axis=1)                          # (NLAYERS, NVEC, D)

    const3 = lambda l: (0, 0, 0)
    per_layer = lambda l: (l, 0, 0)

    data_x = pl.BlockSpec((B, S, D), const3)               # fetched once (block idx constant)
    data_m = pl.BlockSpec((B, S, S), const3)
    w_qkv = pl.BlockSpec((1, D, 3 * D), per_layer)
    b_qkv = pl.BlockSpec((1, 1, 3 * D), per_layer)
    w_dd = pl.BlockSpec((1, D, D), per_layer)
    w_df = pl.BlockSpec((1, D, F), per_layer)
    b_f = pl.BlockSpec((1, 1, F), per_layer)
    w_fd = pl.BlockSpec((1, F, D), per_layer)
    v_spec = pl.BlockSpec((1, NVEC, D), per_layer)

    grid_spec = pltpu.PrefetchScalarGridSpec(
        num_scalar_prefetch=0,
        grid=(NLAYERS,),                                   # layers serial, B folded in
        in_specs=[data_x, data_m, w_qkv, b_qkv, w_dd, w_df, b_f, w_fd, v_spec],
        out_specs=pl.BlockSpec((B, S, D), const3),         # resident running state
    )
    fn = pl.pallas_call(
        encoder_kernel,
        out_shape=jax.ShapeDtypeStruct((B, S, D), jnp.float32),
        grid_spec=grid_spec,
        compiler_params=pltpu.CompilerParams(
            dimension_semantics=("arbitrary",)),
    )
    return fn(x, mask, wqkv, bqkv, wo, w1, b1, w2, vecs)


def init_params(key):
    # deterministic, PyTorch-default-style init (uniform(+-1/sqrt(fan_in)) for Linear,
    # ones/zeros for LayerNorm). Biases stored as (NLAYERS, 1, dim) for TPU tiling.
    ks = jax.random.split(key, 6)

    def lin(k, fan_in, fan_out):
        k1, k2 = jax.random.split(k)
        bound = 1.0 / math.sqrt(fan_in)
        w = jax.random.uniform(k1, (NLAYERS, fan_in, fan_out), jnp.float32, -bound, bound)
        b = jax.random.uniform(k2, (NLAYERS, 1, fan_out), jnp.float32, -bound, bound)
        return w, b

    wq, bq = lin(ks[0], D, D)
    wk, bk = lin(ks[1], D, D)
    wv, bv = lin(ks[2], D, D)
    wo, bo = lin(ks[3], D, D)
    w1, b1 = lin(ks[4], D, F)
    w2, b2 = lin(ks[5], F, D)
    ones = jnp.ones((NLAYERS, 1, D), jnp.float32)
    zeros = jnp.zeros((NLAYERS, 1, D), jnp.float32)
    fna = jnp.ones((1, 1, D), jnp.float32)
    fnb = jnp.zeros((1, 1, D), jnp.float32)
    return (wq, bq, wk, bk, wv, bv, wo, bo,
            ones, zeros, w1, b1, w2, b2, ones, zeros, fna, fnb)


def encoder_ref(x, mask, params):
    # pure-JAX reference mirroring the PyTorch module (eval mode), unfused weights
    (wq, bq, wk, bk, wv, bv, wo, bo,
     ln1a, ln1b, w1, b1, w2, b2, ln2a, ln2b, fna, fnb) = params

    def ln(v, a, b):
        mean = v.mean(-1, keepdims=True)
        d = v - mean
        std = jnp.sqrt(jnp.sum(d * d, -1, keepdims=True) / (D - 1))
        return a * d / (std + EPS) + b

    for l in range(NLAYERS):
        xn = ln(x, ln1a[l], ln1b[l])
        q = (xn @ wq[l] + bq[l]).reshape(B, S, H, DK).transpose(0, 2, 1, 3)
        k = (xn @ wk[l] + bk[l]).reshape(B, S, H, DK).transpose(0, 2, 1, 3)
        v = (xn @ wv[l] + bv[l]).reshape(B, S, H, DK).transpose(0, 2, 1, 3)
        s = jnp.einsum('bhqd,bhkd->bhqk', q, k) / math.sqrt(DK)
        s = jnp.where(mask[:, None, :, :] == 0.0, -1e9, s)
        p = jax.nn.softmax(s, axis=-1)
        ctx = jnp.einsum('bhqk,bhkd->bhqd', p, v).transpose(0, 2, 1, 3).reshape(B, S, D)
        x = x + (ctx @ wo[l] + bo[l])
        xn2 = ln(x, ln2a[l], ln2b[l])
        x = x + (jnp.maximum(xn2 @ w1[l] + b1[l], 0.0) @ w2[l] + b2[l])
    return ln(x, fna[0], fnb[0])


if __name__ == "__main__":
    key = jax.random.PRNGKey(0)
    kx, kp, km = jax.random.split(key, 3)
    x = jax.random.normal(kx, (B, S, D), jnp.float32)          # pe_result stand-in
    params = init_params(kp)

    # 1) module-spec mask: torch.zeros -> every position masked -> uniform attention
    mask0 = jnp.zeros((B, S, S), jnp.float32)
    out0 = jax.block_until_ready(encoder_forward(x, mask0, params))
    ref0 = encoder_ref(x, mask0, params)
    assert out0.shape == (B, S, D)
    assert jnp.allclose(out0, ref0, atol=2e-4, rtol=2e-4), float(jnp.max(jnp.abs(out0 - ref0)))

    # 2) non-trivial binary mask: exercises the masking / softmax path properly
    mask1 = (jax.random.uniform(km, (B, S, S)) > 0.3).astype(jnp.float32)
    out1 = jax.block_until_ready(encoder_forward(x, mask1, params))
    ref1 = encoder_ref(x, mask1, params)
    assert jnp.allclose(out1, ref1, atol=2e-4, rtol=2e-4), float(jnp.max(jnp.abs(out1 - ref1)))

    print("KERNEL_OK")
</pallas_src>

<mosaic_0001>
module attributes {stable_mosaic.version = 11 : i64} {
  func.func @encoder_kernel(%arg0: i32, %arg1: memref<2x8x128xf32, #tpu.memory_space<vmem>>, %arg2: memref<2x8x8xf32, #tpu.memory_space<vmem>>, %arg3: memref<1x128x384xf32, #tpu.memory_space<vmem>>, %arg4: memref<1x1x384xf32, #tpu.memory_space<vmem>>, %arg5: memref<1x128x128xf32, #tpu.memory_space<vmem>>, %arg6: memref<1x128x64xf32, #tpu.memory_space<vmem>>, %arg7: memref<1x1x64xf32, #tpu.memory_space<vmem>>, %arg8: memref<1x64x128xf32, #tpu.memory_space<vmem>>, %arg9: memref<1x8x128xf32, #tpu.memory_space<vmem>>, %arg10: memref<2x8x128xf32, #tpu.memory_space<vmem>>) attributes {dimension_semantics = [#tpu.dimension_semantics<arbitrary>], iteration_bounds = array<i64: 2>, scalar_prefetch = 0 : i64, scratch_operands = 0 : i64, tpu.core_type = #tpu.core_type<tc>, window_params = [{pipeline_mode = #tpu.pipeline_mode<synchronous>, transform_indices = @transform_0, window_bounds = array<i64: 2, 8, 128>}, {pipeline_mode = #tpu.pipeline_mode<synchronous>, transform_indices = @transform_1, window_bounds = array<i64: 2, 8, 8>}, {transform_indices = @transform_2, window_bounds = array<i64: 1, 128, 384>}, {transform_indices = @transform_3, window_bounds = array<i64: 1, 1, 384>}, {transform_indices = @transform_4, window_bounds = array<i64: 1, 128, 128>}, {transform_indices = @transform_5, window_bounds = array<i64: 1, 128, 64>}, {transform_indices = @transform_6, window_bounds = array<i64: 1, 1, 64>}, {transform_indices = @transform_7, window_bounds = array<i64: 1, 64, 128>}, {transform_indices = @transform_8, window_bounds = array<i64: 1, 8, 128>}, {pipeline_mode = #tpu.pipeline_mode<synchronous>, transform_indices = @transform_9, window_bounds = array<i64: 2, 8, 128>}]} {
    %c0_i32 = arith.constant 0 : i32
    %0 = arith.cmpi eq, %arg0, %c0_i32 : i32
    %1 = arith.extui %0 : i1 to i32
    %c0_i32_0 = arith.constant 0 : i32
    %2 = arith.cmpi ne, %1, %c0_i32_0 : i32
    scf.if %2 {
      %c0_57 = arith.constant 0 : index
      %c0_58 = arith.constant 0 : index
      %c0_59 = arith.constant 0 : index
      %152 = vector.load %arg1[%c0_57, %c0_58, %c0_59] : memref<2x8x128xf32, #tpu.memory_space<vmem>>, vector<2x8x128xf32>
      %c0_60 = arith.constant 0 : index
      %c0_61 = arith.constant 0 : index
      %c0_62 = arith.constant 0 : index
      %153 = vector.load %arg10[%c0_60, %c0_61, %c0_62] : memref<2x8x128xf32, #tpu.memory_space<vmem>>, vector<2x8x128xf32>
      tpu.vector_store %arg10[%c0_60, %c0_61, %c0_62], %152 {strides = array<i32>} : memref<2x8x128xf32, #tpu.memory_space<vmem>>, vector<2x8x128xf32>,
    } else {
    }
    %c0 = arith.constant 0 : index
    %c0_1 = arith.constant 0 : index
    %c0_2 = arith.constant 0 : index
    %3 = vector.load %arg10[%c0, %c0_1, %c0_2] : memref<2x8x128xf32, #tpu.memory_space<vmem>>, vector<2x8x128xf32>
    %4 = vector.shape_cast %3 : vector<2x8x128xf32> to vector<16x128xf32>
    %c0_3 = arith.constant 0 : index
    %c0_4 = arith.constant 0 : index
    %c0_5 = arith.constant 0 : index
    %5 = vector.load %arg9[%c0_3, %c0_4, %c0_5] : memref<1x8x128xf32, #tpu.memory_space<vmem>>, vector<1x8x128xf32>
    %6 = vector.shape_cast %5 : vector<1x8x128xf32> to vector<8x128xf32>
    %7 = vector.extract_strided_slice %6 {offsets = [0, 0], sizes = [1, 128], strides = [1, 1]} : vector<8x128xf32> to vector<1x128xf32>
    %8 = vector.extract_strided_slice %6 {offsets = [1, 0], sizes = [1, 128], strides = [1, 1]} : vector<8x128xf32> to vector<1x128xf32>
    %9 = vector.extract_strided_slice %6 {offsets = [2, 0], sizes = [1, 128], strides = [1, 1]} : vector<8x128xf32> to vector<1x128xf32>
    %10 = vector.extract_strided_slice %6 {offsets = [3, 0], sizes = [1, 128], strides = [1, 1]} : vector<8x128xf32> to vector<1x128xf32>
    %11 = vector.extract_strided_slice %6 {offsets = [4, 0], sizes = [1, 128], strides = [1, 1]} : vector<8x128xf32> to vector<1x128xf32>
    %12 = vector.extract_strided_slice %6 {offsets = [5, 0], sizes = [1, 128], strides = [1, 1]} : vector<8x128xf32> to vector<1x128xf32>
    %13 = vector.extract_strided_slice %6 {offsets = [6, 0], sizes = [1, 128], strides = [1, 1]} : vector<8x128xf32> to vector<1x128xf32>
    %14 = vector.extract_strided_slice %6 {offsets = [7, 0], sizes = [1, 128], strides = [1, 1]} : vector<8x128xf32> to vector<1x128xf32>
    %cst = arith.constant dense<0.000000e+00> : vector<16xf32>
    %15 = vector.multi_reduction <add>, %4, %cst [1] : vector<16x128xf32> to vector<16xf32>
    %16 = vector.shape_cast %15 : vector<16xf32> to vector<16x1xf32>
    %cst_6 = arith.constant 1.280000e+02 : f32
    %17 = vector.broadcast %cst_6 : f32 to vector<16x1xf32>
    %18 = arith.divf %16, %17 : vector<16x1xf32>
    %19 = vector.broadcast %18 : vector<16x1xf32> to vector<16x128xf32>
    %20 = arith.subf %4, %19 : vector<16x128xf32>
    %21 = arith.mulf %20, %20 : vector<16x128xf32>
    %cst_7 = arith.constant dense<0.000000e+00> : vector<16xf32>
    %22 = vector.multi_reduction <add>, %21, %cst_7 [1] : vector<16x128xf32> to vector<16xf32>
    %23 = vector.shape_cast %22 : vector<16xf32> to vector<16x1xf32>
    %cst_8 = arith.constant 1.270000e+02 : f32
    %24 = vector.broadcast %cst_8 : f32 to vector<16x1xf32>
    %25 = arith.divf %23, %24 : vector<16x1xf32>
    %26 = math.sqrt %25 : vector<16x1xf32>
    %cst_9 = arith.constant 9.99999997E-7 : f32
    %27 = vector.broadcast %cst_9 : f32 to vector<16x1xf32>
    %28 = arith.addf %26, %27 : vector<16x1xf32>
    %29 = tpu.reciprocal %28 : vector<16x1xf32> -> vector<16x1xf32>
    %30 = vector.broadcast %9 : vector<1x128xf32> to vector<16x128xf32>
    %31 = arith.mulf %30, %20 : vector<16x128xf32>
    %32 = vector.broadcast %29 : vector<16x1xf32> to vector<16x128xf32>
    %33 = arith.mulf %31, %32 : vector<16x128xf32>
    %34 = vector.broadcast %10 : vector<1x128xf32> to vector<16x128xf32>
    %35 = arith.addf %33, %34 : vector<16x128xf32>
    %c0_10 = arith.constant 0 : index
    %c0_11 = arith.constant 0 : index
    %c0_12 = arith.constant 0 : index
    %36 = vector.load %arg3[%c0_10, %c0_11, %c0_12] : memref<1x128x384xf32, #tpu.memory_space<vmem>>, vector<1x128x384xf32>
    %37 = vector.shape_cast %36 : vector<1x128x384xf32> to vector<128x384xf32>
    %cst_13 = arith.constant dense<0.000000e+00> : vector<16x384xf32>
    %38 = tpu.matmul %35, %37, %cst_13 {dimension_numbers = #tpu.dot_dimension_numbers<[1], [0], [0], [1], [0, 0, 1, 1], [], []>} : vector<16x128xf32>, vector<128x384xf32>, vector<16x384xf32> -> vector<16x384xf32>
    %c0_14 = arith.constant 0 : index
    %c0_15 = arith.constant 0 : index
    %c0_16 = arith.constant 0 : index
    %39 = vector.load %arg4[%c0_14, %c0_15, %c0_16] : memref<1x1x384xf32, #tpu.memory_space<vmem>>, vector<1x1x384xf32>
    %40 = vector.shape_cast %39 : vector<1x1x384xf32> to vector<1x384xf32>
    %41 = vector.broadcast %40 : vector<1x384xf32> to vector<16x384xf32>
    %42 = arith.addf %38, %41 : vector<16x384xf32>
    %43 = vector.extract_strided_slice %42 {offsets = [0, 0], sizes = [16, 128], strides = [1, 1]} : vector<16x384xf32> to vector<16x128xf32>
    %44 = vector.extract_strided_slice %42 {offsets = [0, 128], sizes = [16, 128], strides = [1, 1]} : vector<16x384xf32> to vector<16x128xf32>
    %45 = vector.extract_strided_slice %42 {offsets = [0, 256], sizes = [16, 128], strides = [1, 1]} : vector<16x384xf32> to vector<16x128xf32>
    %c0_17 = arith.constant 0 : index
    %c0_18 = arith.constant 0 : index
    %c0_19 = arith.constant 0 : index
    %46 = vector.load %arg2[%c0_17, %c0_18, %c0_19] : memref<2x8x8xf32, #tpu.memory_space<vmem>>, vector<2x8x8xf32>
    %cst_20 = arith.constant 0.000000e+00 : f32
    %47 = vector.broadcast %cst_20 : f32 to vector<2x8x8xf32>
    %48 = arith.cmpf oeq, %46, %47 : vector<2x8x8xf32>
    %49 = vector.extract_strided_slice %43 {offsets = [0, 0], sizes = [8, 128], strides = [1, 1]} : vector<16x128xf32> to vector<8x128xf32>
    %50 = vector.shape_cast %49 : vector<8x128xf32> to vector<8x4x32xf32>
    %51 = vector.extract_strided_slice %44 {offsets = [0, 0], sizes = [8, 128], strides = [1, 1]} : vector<16x128xf32> to vector<8x128xf32>
    %52 = vector.shape_cast %51 : vector<8x128xf32> to vector<8x4x32xf32>
    %53 = vector.extract_strided_slice %45 {offsets = [0, 0], sizes = [8, 128], strides = [1, 1]} : vector<16x128xf32> to vector<8x128xf32>
    %54 = vector.shape_cast %53 : vector<8x128xf32> to vector<8x4x32xf32>
    "tpu.trace_start"() <{level = 10 : i32, message = "qhd,khd->hqk"}> : () -> ()
    %cst_21 = arith.constant dense<0.000000e+00> : vector<4x8x8xf32>
    %55 = tpu.matmul %50, %52, %cst_21 {dimension_numbers = #tpu.dot_dimension_numbers<[2], [2], [0], [0], [0, 1, 0, 0, 1, 0], [1], [1]>} : vector<8x4x32xf32>, vector<8x4x32xf32>, vector<4x8x8xf32> -> vector<4x8x8xf32>
    "tpu.trace_stop"() : () -> ()
    %cst_22 = arith.constant 0.176776692 : f32
    %56 = vector.broadcast %cst_22 : f32 to vector<4x8x8xf32>
    %57 = arith.mulf %55, %56 : vector<4x8x8xf32>
    %58 = vector.extract_strided_slice %48 {offsets = [0, 0, 0], sizes = [1, 8, 8], strides = [1, 1, 1]} : vector<2x8x8xi1> to vector<1x8x8xi1>
    %cst_23 = arith.constant -1.000000e+09 : f32
    %59 = vector.shape_cast %58 : vector<1x8x8xi1> to vector<1x8x8xi1>
    %60 = vector.broadcast %59 : vector<1x8x8xi1> to vector<4x8x8xi1>
    %61 = vector.broadcast %cst_23 : f32 to vector<4x8x8xf32>
    %62 = arith.select %60, %61, %57 : vector<4x8x8xi1>, vector<4x8x8xf32>
    %cst_24 = arith.constant dense<0xFF800000> : vector<4x8xf32>
    %63 = vector.multi_reduction <maximumf>, %62, %cst_24 [2] : vector<4x8x8xf32> to vector<4x8xf32>
    %64 = vector.shape_cast %63 : vector<4x8xf32> to vector<4x8x1xf32>
    %65 = vector.broadcast %64 : vector<4x8x1xf32> to vector<4x8x8xf32>
    %66 = arith.subf %62, %65 : vector<4x8x8xf32>
    %67 = math.exp %66 : vector<4x8x8xf32>
    %cst_25 = arith.constant dense<0.000000e+00> : vector<4x8xf32>
    %68 = vector.multi_reduction <add>, %67, %cst_25 [2] : vector<4x8x8xf32> to vector<4x8xf32>
    %69 = vector.shape_cast %68 : vector<4x8xf32> to vector<4x8x1xf32>
    %70 = tpu.reciprocal %69 : vector<4x8x1xf32> -> vector<4x8x1xf32>
    %71 = vector.broadcast %70 : vector<4x8x1xf32> to vector<4x8x8xf32>
    %72 = arith.mulf %67, %71 : vector<4x8x8xf32>
    "tpu.trace_start"() <{level = 10 : i32, message = "hqk,khd->qhd"}> : () -> ()
    %cst_26 = arith.constant dense<0.000000e+00> : vector<4x32x8xf32>
    %73 = tpu.matmul %54, %72, %cst_26 {dimension_numbers = #tpu.dot_dimension_numbers<[0], [2], [2], [1], [0, 1, 0, 2, 1, 1], [1], [0]>} : vector<8x4x32xf32>, vector<4x8x8xf32>, vector<4x32x8xf32> -> vector<4x32x8xf32>
    %74 = tpu.transpose %73, [2, 0, 1] : vector<4x32x8xf32> -> vector<8x4x32xf32>
    "tpu.trace_stop"() : () -> ()
    %75 = vector.shape_cast %74 : vector<8x4x32xf32> to vector<8x128xf32>
    %76 = vector.extract_strided_slice %43 {offsets = [8, 0], sizes = [8, 128], strides = [1, 1]} : vector<16x128xf32> to vector<8x128xf32>
    %77 = vector.shape_cast %76 : vector<8x128xf32> to vector<8x4x32xf32>
    %78 = vector.extract_strided_slice %44 {offsets = [8, 0], sizes = [8, 128], strides = [1, 1]} : vector<16x128xf32> to vector<8x128xf32>
    %79 = vector.shape_cast %78 : vector<8x128xf32> to vector<8x4x32xf32>
    %80 = vector.extract_strided_slice %45 {offsets = [8, 0], sizes = [8, 128], strides = [1, 1]} : vector<16x128xf32> to vector<8x128xf32>
    %81 = vector.shape_cast %80 : vector<8x128xf32> to vector<8x4x32xf32>
    "tpu.trace_start"() <{level = 10 : i32, message = "qhd,khd->hqk"}> : () -> ()
    %cst_27 = arith.constant dense<0.000000e+00> : vector<4x8x8xf32>
    %82 = tpu.matmul %77, %79, %cst_27 {dimension_numbers = #tpu.dot_dimension_numbers<[2], [2], [0], [0], [0, 1, 0, 0, 1, 0], [1], [1]>} : vector<8x4x32xf32>, vector<8x4x32xf32>, vector<4x8x8xf32> -> vector<4x8x8xf32>
    "tpu.trace_stop"() : () -> ()
    %cst_28 = arith.constant 0.176776692 : f32
    %83 = vector.broadcast %cst_28 : f32 to vector<4x8x8xf32>
    %84 = arith.mulf %82, %83 : vector<4x8x8xf32>
    %85 = vector.extract_strided_slice %48 {offsets = [1, 0, 0], sizes = [1, 8, 8], strides = [1, 1, 1]} : vector<2x8x8xi1> to vector<1x8x8xi1>
    %cst_29 = arith.constant -1.000000e+09 : f32
    %86 = vector.shape_cast %85 : vector<1x8x8xi1> to vector<1x8x8xi1>
    %87 = vector.broadcast %86 : vector<1x8x8xi1> to vector<4x8x8xi1>
    %88 = vector.broadcast %cst_29 : f32 to vector<4x8x8xf32>
    %89 = arith.select %87, %88, %84 : vector<4x8x8xi1>, vector<4x8x8xf32>
    %cst_30 = arith.constant dense<0xFF800000> : vector<4x8xf32>
    %90 = vector.multi_reduction <maximumf>, %89, %cst_30 [2] : vector<4x8x8xf32> to vector<4x8xf32>
    %91 = vector.shape_cast %90 : vector<4x8xf32> to vector<4x8x1xf32>
    %92 = vector.broadcast %91 : vector<4x8x1xf32> to vector<4x8x8xf32>
    %93 = arith.subf %89, %92 : vector<4x8x8xf32>
    %94 = math.exp %93 : vector<4x8x8xf32>
    %cst_31 = arith.constant dense<0.000000e+00> : vector<4x8xf32>
    %95 = vector.multi_reduction <add>, %94, %cst_31 [2] : vector<4x8x8xf32> to vector<4x8xf32>
    %96 = vector.shape_cast %95 : vector<4x8xf32> to vector<4x8x1xf32>
    %97 = tpu.reciprocal %96 : vector<4x8x1xf32> -> vector<4x8x1xf32>
    %98 = vector.broadcast %97 : vector<4x8x1xf32> to vector<4x8x8xf32>
    %99 = arith.mulf %94, %98 : vector<4x8x8xf32>
    "tpu.trace_start"() <{level = 10 : i32, message = "hqk,khd->qhd"}> : () -> ()
    %cst_32 = arith.constant dense<0.000000e+00> : vector<4x32x8xf32>
    %100 = tpu.matmul %81, %99, %cst_32 {dimension_numbers = #tpu.dot_dimension_numbers<[0], [2], [2], [1], [0, 1, 0, 2, 1, 1], [1], [0]>} : vector<8x4x32xf32>, vector<4x8x8xf32>, vector<4x32x8xf32> -> vector<4x32x8xf32>
    %101 = tpu.transpose %100, [2, 0, 1] : vector<4x32x8xf32> -> vector<8x4x32xf32>
    "tpu.trace_stop"() : () -> ()
    %102 = vector.shape_cast %101 : vector<8x4x32xf32> to vector<8x128xf32>
    %103 = tpu.concatenate %75, %102 in 0 : vector<8x128xf32>, vector<8x128xf32> -> vector<16x128xf32>
    %c0_33 = arith.constant 0 : index
    %c0_34 = arith.constant 0 : index
    %c0_35 = arith.constant 0 : index
    %104 = vector.load %arg5[%c0_33, %c0_34, %c0_35] : memref<1x128x128xf32, #tpu.memory_space<vmem>>, vector<1x128x128xf32>
    %105 = vector.shape_cast %104 : vector<1x128x128xf32> to vector<128x128xf32>
    %cst_36 = arith.constant dense<0.000000e+00> : vector<16x128xf32>
    %106 = tpu.matmul %103, %105, %cst_36 {dimension_numbers = #tpu.dot_dimension_numbers<[1], [0], [0], [1], [0, 0, 1, 1], [], []>} : vector<16x128xf32>, vector<128x128xf32>, vector<16x128xf32> -> vector<16x128xf32>
    %107 = arith.addf %4, %106 : vector<16x128xf32>
    %108 = vector.broadcast %7 : vector<1x128xf32> to vector<16x128xf32>
    %109 = arith.addf %107, %108 : vector<16x128xf32>
    %cst_37 = arith.constant dense<0.000000e+00> : vector<16xf32>
    %110 = vector.multi_reduction <add>, %109, %cst_37 [1] : vector<16x128xf32> to vector<16xf32>
    %111 = vector.shape_cast %110 : vector<16xf32> to vector<16x1xf32>
    %cst_38 = arith.constant 1.280000e+02 : f32
    %112 = vector.broadcast %cst_38 : f32 to vector<16x1xf32>
    %113 = arith.divf %111, %112 : vector<16x1xf32>
    %114 = vector.broadcast %113 : vector<16x1xf32> to vector<16x128xf32>
    %115 = arith.subf %109, %114 : vector<16x128xf32>
    %116 = arith.mulf %115, %115 : vector<16x128xf32>
    %cst_39 = arith.constant dense<0.000000e+00> : vector<16xf32>
    %117 = vector.multi_reduction <add>, %116, %cst_39 [1] : vector<16x128xf32> to vector<16xf32>
    %118 = vector.shape_cast %117 : vector<16xf32> to vector<16x1xf32>
    %cst_40 = arith.constant 1.270000e+02 : f32
    %119 = vector.broadcast %cst_40 : f32 to vector<16x1xf32>
    %120 = arith.divf %118, %119 : vector<16x1xf32>
    %121 = math.sqrt %120 : vector<16x1xf32>
    %cst_41 = arith.constant 9.99999997E-7 : f32
    %122 = vector.broadcast %cst_41 : f32 to vector<16x1xf32>
    %123 = arith.addf %121, %122 : vector<16x1xf32>
    %124 = tpu.reciprocal %123 : vector<16x1xf32> -> vector<16x1xf32>
    %125 = vector.broadcast %11 : vector<1x128xf32> to vector<16x128xf32>
    %126 = arith.mulf %125, %115 : vector<16x128xf32>
    %127 = vector.broadcast %124 : vector<16x1xf32> to vector<16x128xf32>
    %128 = arith.mulf %126, %127 : vector<16x128xf32>
    %129 = vector.broadcast %12 : vector<1x128xf32> to vector<16x128xf32>
    %130 = arith.addf %128, %129 : vector<16x128xf32>
    %c0_42 = arith.constant 0 : index
    %c0_43 = arith.constant 0 : index
    %c0_44 = arith.constant 0 : index
    %131 = vector.load %arg6[%c0_42, %c0_43, %c0_44] : memref<1x128x64xf32, #tpu.memory_space<vmem>>, vector<1x128x64xf32>
    %132 = vector.shape_cast %131 : vector<1x128x64xf32> to vector<128x64xf32>
    %cst_45 = arith.constant dense<0.000000e+00> : vector<16x64xf32>
    %133 = tpu.matmul %130, %132, %cst_45 {dimension_numbers = #tpu.dot_dimension_numbers<[1], [0], [0], [1], [0, 0, 1, 1], [], []>} : vector<16x128xf32>, vector<128x64xf32>, vector<16x64xf32> -> vector<16x64xf32>
    %c0_46 = arith.constant 0 : index
    %c0_47 = arith.constant 0 : index
    %c0_48 = arith.constant 0 : index
    %134 = vector.load %arg7[%c0_46, %c0_47, %c0_48] : memref<1x1x64xf32, #tpu.memory_space<vmem>>, vector<1x1x64xf32>
    %135 = vector.shape_cast %134 : vector<1x1x64xf32> to vector<1x64xf32>
    %136 = vector.broadcast %135 : vector<1x64xf32> to vector<16x64xf32>
    %137 = arith.addf %133, %136 : vector<16x64xf32>
    %cst_49 = arith.constant 0.000000e+00 : f32
    %138 = vector.broadcast %cst_49 : f32 to vector<16x64xf32>
    %139 = arith.maximumf %137, %138 : vector<16x64xf32>
    %c0_50 = arith.constant 0 : index
    %c0_51 = arith.constant 0 : index
    %c0_52 = arith.constant 0 : index
    %140 = vector.load %arg8[%c0_50, %c0_51, %c0_52] : memref<1x64x128xf32, #tpu.memory_space<vmem>>, vector<1x64x128xf32>
    %141 = vector.shape_cast %140 : vector<1x64x128xf32> to vector<64x128xf32>
    %cst_53 = arith.constant dense<0.000000e+00> : vector<16x128xf32>
    %142 = tpu.matmul %139, %141, %cst_53 {dimension_numbers = #tpu.dot_dimension_numbers<[1], [0], [0], [1], [0, 0, 1, 1], [], []>} : vector<16x64xf32>, vector<64x128xf32>, vector<16x128xf32> -> vector<16x128xf32>
    %143 = arith.addf %109, %142 : vector<16x128xf32>
    %144 = vector.broadcast %8 : vector<1x128xf32> to vector<16x128xf32>
    %145 = arith.addf %143, %144 : vector<16x128xf32>
    %c1_i32 = arith.constant 1 : i32
    %146 = arith.cmpi slt, %arg0, %c1_i32 : i32
    %147 = arith.extui %146 : i1 to i32
    %c0_i32_54 = arith.constant 0 : i32
    %148 = arith.cmpi ne, %147, %c0_i32_54 : i32
    scf.if %148 {
      %152 = vector.shape_cast %145 : vector<16x128xf32> to vector<2x8x128xf32>
      %c0_57 = arith.constant 0 : index
      %c0_58 = arith.constant 0 : index
      %c0_59 = arith.constant 0 : index
      %153 = vector.load %arg10[%c0_57, %c0_58, %c0_59] : memref<2x8x128xf32, #tpu.memory_space<vmem>>, vector<2x8x128xf32>
      tpu.vector_store %arg10[%c0_57, %c0_58, %c0_59], %152 {strides = array<i32>} : memref<2x8x128xf32, #tpu.memory_space<vmem>>, vector<2x8x128xf32>,
    } else {
    }
    %c1_i32_55 = arith.constant 1 : i32
    %149 = arith.cmpi eq, %arg0, %c1_i32_55 : i32
    %150 = arith.extui %149 : i1 to i32
    %c0_i32_56 = arith.constant 0 : i32
    %151 = arith.cmpi ne, %150, %c0_i32_56 : i32
    scf.if %151 {
      %cst_57 = arith.constant dense<0.000000e+00> : vector<16xf32>
      %152 = vector.multi_reduction <add>, %145, %cst_57 [1] : vector<16x128xf32> to vector<16xf32>
      %153 = vector.shape_cast %152 : vector<16xf32> to vector<16x1xf32>
      %cst_58 = arith.constant 1.280000e+02 : f32
      %154 = vector.broadcast %cst_58 : f32 to vector<16x1xf32>
      %155 = arith.divf %153, %154 : vector<16x1xf32>
      %156 = vector.broadcast %155 : vector<16x1xf32> to vector<16x128xf32>
      %157 = arith.subf %145, %156 : vector<16x128xf32>
      %158 = arith.mulf %157, %157 : vector<16x128xf32>
      %cst_59 = arith.constant dense<0.000000e+00> : vector<16xf32>
      %159 = vector.multi_reduction <add>, %158, %cst_59 [1] : vector<16x128xf32> to vector<16xf32>
      %160 = vector.shape_cast %159 : vector<16xf32> to vector<16x1xf32>
      %cst_60 = arith.constant 1.270000e+02 : f32
      %161 = vector.broadcast %cst_60 : f32 to vector<16x1xf32>
      %162 = arith.divf %160, %161 : vector<16x1xf32>
      %163 = math.sqrt %162 : vector<16x1xf32>
      %cst_61 = arith.constant 9.99999997E-7 : f32
      %164 = vector.broadcast %cst_61 : f32 to vector<16x1xf32>
      %165 = arith.addf %163, %164 : vector<16x1xf32>
      %166 = tpu.reciprocal %165 : vector<16x1xf32> -> vector<16x1xf32>
      %167 = vector.broadcast %13 : vector<1x128xf32> to vector<16x128xf32>
      %168 = arith.mulf %167, %157 : vector<16x128xf32>
      %169 = vector.broadcast %166 : vector<16x1xf32> to vector<16x128xf32>
      %170 = arith.mulf %168, %169 : vector<16x128xf32>
      %171 = vector.broadcast %14 : vector<1x128xf32> to vector<16x128xf32>
      %172 = arith.addf %170, %171 : vector<16x128xf32>
      %173 = vector.shape_cast %172 : vector<16x128xf32> to vector<2x8x128xf32>
      %c0_62 = arith.constant 0 : index
      %c0_63 = arith.constant 0 : index
      %c0_64 = arith.constant 0 : index
      %174 = vector.load %arg10[%c0_62, %c0_63, %c0_64] : memref<2x8x128xf32, #tpu.memory_space<vmem>>, vector<2x8x128xf32>
      tpu.vector_store %arg10[%c0_62, %c0_63, %c0_64], %173 {strides = array<i32>} : memref<2x8x128xf32, #tpu.memory_space<vmem>>, vector<2x8x128xf32>,
    } else {
    }
    return
  }
  func.func @transform_0(%arg0: i32) -> (i32, i32, i32) {
    %c0_i32 = arith.constant 0 : i32
    %c0_i32_0 = arith.constant 0 : i32
    %c0_i32_1 = arith.constant 0 : i32
    %c0_i32_2 = arith.constant 0 : i32
    return %c0_i32, %c0_i32_0, %c0_i32_1 : i32, i32, i32
  }
  func.func @transform_1(%arg0: i32) -> (i32, i32, i32) {
    %c0_i32 = arith.constant 0 : i32
    %c0_i32_0 = arith.constant 0 : i32
    %c0_i32_1 = arith.constant 0 : i32
    %c0_i32_2 = arith.constant 0 : i32
    return %c0_i32, %c0_i32_0, %c0_i32_1 : i32, i32, i32
  }
  func.func @transform_2(%arg0: i32) -> (i32, i32, i32) {
    %c0_i32 = arith.constant 0 : i32
    %c0_i32_0 = arith.constant 0 : i32
    %c0_i32_1 = arith.constant 0 : i32
    return %arg0, %c0_i32, %c0_i32_0 : i32, i32, i32
  }
  func.func @transform_3(%arg0: i32) -> (i32, i32, i32) {
    %c0_i32 = arith.constant 0 : i32
    %c0_i32_0 = arith.constant 0 : i32
    %c0_i32_1 = arith.constant 0 : i32
    return %arg0, %c0_i32, %c0_i32_0 : i32, i32, i32
  }
  func.func @transform_4(%arg0: i32) -> (i32, i32, i32) {
    %c0_i32 = arith.constant 0 : i32
    %c0_i32_0 = arith.constant 0 : i32
    %c0_i32_1 = arith.constant 0 : i32
    return %arg0, %c0_i32, %c0_i32_0 : i32, i32, i32
  }
  func.func @transform_5(%arg0: i32) -> (i32, i32, i32) {
    %c0_i32 = arith.constant 0 : i32
    %c0_i32_0 = arith.constant 0 : i32
    %c0_i32_1 = arith.constant 0 : i32
    return %arg0, %c0_i32, %c0_i32_0 : i32, i32, i32
  }
  func.func @transform_6(%arg0: i32) -> (i32, i32, i32) {
    %c0_i32 = arith.constant 0 : i32
    %c0_i32_0 = arith.constant 0 : i32
    %c0_i32_1 = arith.constant 0 : i32
    return %arg0, %c0_i32, %c0_i32_0 : i32, i32, i32
  }
  func.func @transform_7(%arg0: i32) -> (i32, i32, i32) {
    %c0_i32 = arith.constant 0 : i32
    %c0_i32_0 = arith.constant 0 : i32
    %c0_i32_1 = arith.constant 0 : i32
    return %arg0, %c0_i32, %c0_i32_0 : i32, i32, i32
  }
  func.func @transform_8(%arg0: i32) -> (i32, i32, i32) {
    %c0_i32 = arith.constant 0 : i32
    %c0_i32_0 = arith.constant 0 : i32
    %c0_i32_1 = arith.constant 0 : i32
    return %arg0, %c0_i32, %c0_i32_0 : i32, i32, i32
  }
  func.func @transform_9(%arg0: i32) -> (i32, i32, i32) {
    %c0_i32 = arith.constant 0 : i32
    %c0_i32_0 = arith.constant 0 : i32
    %c0_i32_1 = arith.constant 0 : i32
    %c0_i32_2 = arith.constant 0 : i32
    return %c0_i32, %c0_i32_0, %c0_i32_1 : i32, i32, i32
  }
}

</mosaic_0001>

<llo_original>
// kernel: tpu_custom_call.1
$region0: #{tpu_custom_call.1}
  #allocation0 [shape = 'u32[]', space=smem, size = 0x4, offset = 0x4, fixed_abs, tag = 'smem constant byte address 0x4 - core index']
  #allocation1 [shape = 'u32[144,128]{1,0:T(1,128)}', space=vmem, size = 0x12000, scoped, tag = 'internal scratch']
  %s0 = inlined_call_operand.hbm [shape: f32[2,8,128], index: 0, kind: input, shape index: {}]
  %s1 = inlined_call_operand.hbm [shape: f32[2,8,8], index: 1, kind: input, shape index: {}]
  %s2 = inlined_call_operand.hbm [shape: f32[2,128,384], index: 2, kind: input, shape index: {}]
  %s3 = inlined_call_operand.vmem [shape: f32[2,1,384], index: 3, kind: input, shape index: {}]
  %s4 = inlined_call_operand.vmem [shape: f32[2,128,128], index: 4, kind: input, shape index: {}]
  %s5 = inlined_call_operand.vmem [shape: f32[2,128,64], index: 5, kind: input, shape index: {}]
  %s6 = inlined_call_operand.vmem [shape: f32[2,1,64], index: 6, kind: input, shape index: {}]
  %s7 = inlined_call_operand.vmem [shape: f32[2,64,128], index: 7, kind: input, shape index: {}]
  %s8 = inlined_call_operand.hbm [shape: f32[2,8,128], index: 8, kind: input, shape index: {}]
  %s9 = inlined_call_operand.hbm [shape: f32[2,8,128], index: 9, kind: output, shape index: {}]
  %s10 = sld [smem:[#allocation0]]
  $region97: #{tpu_custom_call.1} parent=0
    _
  %s12 = ssub.s32 1, %s10
  %s13 = scalar_select 0, %s12, %s10
  $region1: #{tpu_custom_call.1} parent=0
    #allocation2 [shape = 'u8[8192]{0}', space=vmem, size = 0x2000, scoped, tag = 'input window, operand 0, single buffered']
    #allocation3 [shape = 's32[2]{0}', space=sflag, size = 0x8, scoped, tag = 'scoped memory for tpu_custom_call.1']
    #allocation4 [shape = 's32[2]{0}', space=sflag, size = 0x8, scoped, tag = 'scoped memory for tpu_custom_call.1']
    #allocation5 [shape = 'u8[8192]{0}', space=vmem, size = 0x2000, scoped, tag = 'input window, operand 1, single buffered']
    #allocation6 [shape = 's32[1]{0}', space=sflag, size = 0x4, scoped, tag = 'scoped memory for tpu_custom_call.1']
    #allocation7 [shape = 'u8[393216]{0}', space=vmem, size = 0x60000, scoped, tag = 'input window, operand 2']
    #allocation8 [shape = 'u8[8192]{0}', space=vmem, size = 0x2000, scoped, tag = 'input window, operand 8']
    #allocation9 [shape = 'u8[8192]{0}', space=vmem, size = 0x2000, scoped, tag = 'output window, operand 0, single buffered']
    %14 = vsyncpa [#allocation3], 0
    %15 = vsyncpa [#allocation6], 0
    %16 = vsyncpa [#allocation4], 0
    loop: start=0, step=1, limit=4
    $region2: #{tpu_custom_call.1} parent=1 // loop_pre_header
      _
    $region3: #{tpu_custom_call.1} parent=1 // loop_header
      %s18 = sphi 0, %s22
      %p19 = scmp.ge.s32.totalorder %s18, 4
      %s26 = sphi 0, %s26
      %s28 = sphi 0, %s26
      %s29 = sphi 0, %s28
      %s43 = sphi 0, %s29
      %s47 = sphi 0, %s47
      %s49 = sphi 0, %s47
      %s50 = sphi 0, %s49
      %s64 = sphi 0, %s50
      %s70 = sphi 0, %s72
      %s73 = sphi 0, %s70
      %s74 = sphi 0, %s73
      %s90 = sphi 0, %s74
      %s96 = sphi 0, %s98
      %s99 = sphi 0, %s96
      %s100 = sphi 0, %s99
      %s116 = sphi 0, %s100
      %s122 = sphi 0, %s124
      %s125 = sphi 0, %s122
      %s126 = sphi 0, %s125
      %s142 = sphi 0, %s126
      %s148 = sphi 0, %s150
      %s151 = sphi 0, %s148
      %s152 = sphi 0, %s151
      %s168 = sphi 0, %s152
      %s174 = sphi 0, %s176
      %s177 = sphi 0, %s174
      %s178 = sphi 0, %s177
      %s194 = sphi 0, %s178
      %s200 = sphi 0, %s202
      %s203 = sphi 0, %s200
      %s204 = sphi 0, %s203
      %s220 = sphi 0, %s204
      %s226 = sphi 0, %s228
      %s229 = sphi 0, %s226
      %s230 = sphi 0, %s229
      %s246 = sphi 0, %s230
      %s250 = sphi 0, %s250
      %s252 = sphi 0, %s250
      %s253 = sphi 0, %s252
      %s267 = sphi 0, %s253
    $region4: #{tpu_custom_call.1} parent=1 // loop_header_branch
      %21 = sbr.rel (%p19) target = $region8
    $region5: #{tpu_custom_call.1} parent=1 // loop_body
      %s23 = ssub.s32 %s18, 1
      %s24 = ssub.s32 %s18, 2
      %s25 = sadd.s32 %s18, 1
      %s27 = sadd.s32 %s26, 1
      %p30 = scmp.eq.s32.totalorder %s18, 1
      %p31 = scmp.ne.s32.totalorder %s26, %s28
      %p32 = scmp.eq.s32.totalorder %s18, 0
      %p33 = por %p31, %p32
      %p34 = scmp.ne.s32.totalorder %s26, %s28
      %p35 = scmp.eq.s32.totalorder %s23, 1
      %p36 = por %p34, %p35
      %p37 = scmp.ne.s32.totalorder %s28, %s29
      %p38 = scmp.eq.s32.totalorder %s23, 0
      %p39 = por %p37, %p38
      %p40 = scmp.ne.s32.totalorder %s28, %s29
      %p41 = scmp.eq.s32.totalorder %s24, 1
      %p42 = por %p40, %p41
      %p44 = scmp.ne.s32.totalorder %s29, %s43
      %p45 = scmp.eq.s32.totalorder %s24, 0
      %p46 = por %p44, %p45
      %s48 = sadd.s32 %s47, 1
      %p51 = scmp.eq.s32.totalorder %s18, 1
      %p52 = scmp.ne.s32.totalorder %s47, %s49
      %p53 = scmp.eq.s32.totalorder %s18, 0
      %p54 = por %p52, %p53
      %p55 = scmp.ne.s32.totalorder %s47, %s49
      %p56 = scmp.eq.s32.totalorder %s23, 1
      %p57 = por %p55, %p56
      %p58 = scmp.ne.s32.totalorder %s49, %s50
      %p59 = scmp.eq.s32.totalorder %s23, 0
      %p60 = por %p58, %p59
      %p61 = scmp.ne.s32.totalorder %s49, %s50
      %p62 = scmp.eq.s32.totalorder %s24, 1
      %p63 = por %p61, %p62
      %p65 = scmp.ne.s32.totalorder %s50, %s64
      %p66 = scmp.eq.s32.totalorder %s24, 0
      %p67 = por %p65, %p66
      %s68 = ssub.s32 %s18, %s25
      %p69 = scmp.eq.s32.totalorder %s68, 0
      %s71 = sadd.s32 %s70, 1
      %s72 = scalar_select %p69, %s70, %s71
      %p75 = pneg %p69
      %p76 = scmp.eq.s32.totalorder %s18, 1
      %p77 = por %p75, %p76
      %p78 = scmp.ne.s32.totalorder %s70, %s73
      %p79 = scmp.eq.s32.totalorder %s18, 0
      %p80 = por %p78, %p79
      %p81 = scmp.ne.s32.totalorder %s70, %s73
      %p82 = scmp.eq.s32.totalorder %s23, 1
      %p83 = por %p81, %p82
      %p84 = scmp.ne.s32.totalorder %s73, %s74
      %p85 = scmp.eq.s32.totalorder %s23, 0
      %p86 = por %p84, %p85
      %p87 = scmp.ne.s32.totalorder %s73, %s74
      %p88 = scmp.eq.s32.totalorder %s24, 1
      %p89 = por %p87, %p88
      %p91 = scmp.ne.s32.totalorder %s74, %s90
      %p92 = scmp.eq.s32.totalorder %s24, 0
      %p93 = por %p91, %p92
      %s94 = ssub.s32 %s18, %s25
      %p95 = scmp.eq.s32.totalorder %s94, 0
      %s97 = sadd.s32 %s96, 1
      %s98 = scalar_select %p95, %s96, %s97
      %p101 = pneg %p95
      %p102 = scmp.eq.s32.totalorder %s18, 1
      %p103 = por %p101, %p102
      %p104 = scmp.ne.s32.totalorder %s96, %s99
      %p105 = scmp.eq.s32.totalorder %s18, 0
      %p106 = por %p104, %p105
      %p107 = scmp.ne.s32.totalorder %s96, %s99
      %p108 = scmp.eq.s32.totalorder %s23, 1
      %p109 = por %p107, %p108
      %p110 = scmp.ne.s32.totalorder %s99, %s100
      %p111 = scmp.eq.s32.totalorder %s23, 0
      %p112 = por %p110, %p111
      %p113 = scmp.ne.s32.totalorder %s99, %s100
      %p114 = scmp.eq.s32.totalorder %s24, 1
      %p115 = por %p113, %p114
      %p117 = scmp.ne.s32.totalorder %s100, %s116
      %p118 = scmp.eq.s32.totalorder %s24, 0
      %p119 = por %p117, %p118
      %s120 = ssub.s32 %s18, %s25
      %p121 = scmp.eq.s32.totalorder %s120, 0
      %s123 = sadd.s32 %s122, 1
      %s124 = scalar_select %p121, %s122, %s123
      %p127 = pneg %p121
      %p128 = scmp.eq.s32.totalorder %s18, 1
      %p129 = por %p127, %p128
      %p130 = scmp.ne.s32.totalorder %s122, %s125
      %p131 = scmp.eq.s32.totalorder %s18, 0
      %p132 = por %p130, %p131
      %p133 = scmp.ne.s32.totalorder %s122, %s125
      %p134 = scmp.eq.s32.totalorder %s23, 1
      %p135 = por %p133, %p134
      %p136 = scmp.ne.s32.totalorder %s125, %s126
      %p137 = scmp.eq.s32.totalorder %s23, 0
      %p138 = por %p136, %p137
      %p139 = scmp.ne.s32.totalorder %s125, %s126
      %p140 = scmp.eq.s32.totalorder %s24, 1
      %p141 = por %p139, %p140
      %p143 = scmp.ne.s32.totalorder %s126, %s142
      %p144 = scmp.eq.s32.totalorder %s24, 0
      %p145 = por %p143, %p144
      %s146 = ssub.s32 %s18, %s25
      %p147 = scmp.eq.s32.totalorder %s146, 0
      %s149 = sadd.s32 %s148, 1
      %s150 = scalar_select %p147, %s148, %s149
      %p153 = pneg %p147
      %p154 = scmp.eq.s32.totalorder %s18, 1
      %p155 = por %p153, %p154
      %p156 = scmp.ne.s32.totalorder %s148, %s151
      %p157 = scmp.eq.s32.totalorder %s18, 0
      %p158 = por %p156, %p157
      %p159 = scmp.ne.s32.totalorder %s148, %s151
      %p160 = scmp.eq.s32.totalorder %s23, 1
      %p161 = por %p159, %p160
      %p162 = scmp.ne.s32.totalorder %s151, %s152
      %p163 = scmp.eq.s32.totalorder %s23, 0
      %p164 = por %p162, %p163
      %p165 = scmp.ne.s32.totalorder %s151, %s152
      %p166 = scmp.eq.s32.totalorder %s24, 1
      %p167 = por %p165, %p166
      %p169 = scmp.ne.s32.totalorder %s152, %s168
      %p170 = scmp.eq.s32.totalorder %s24, 0
      %p171 = por %p169, %p170
      %s172 = ssub.s32 %s18, %s25
      %p173 = scmp.eq.s32.totalorder %s172, 0
      %s175 = sadd.s32 %s174, 1
      %s176 = scalar_select %p173, %s174, %s175
      %p179 = pneg %p173
      %p180 = scmp.eq.s32.totalorder %s18, 1
      %p181 = por %p179, %p180
      %p182 = scmp.ne.s32.totalorder %s174, %s177
      %p183 = scmp.eq.s32.totalorder %s18, 0
      %p184 = por %p182, %p183
      %p185 = scmp.ne.s32.totalorder %s174, %s177
      %p186 = scmp.eq.s32.totalorder %s23, 1
      %p187 = por %p185, %p186
      %p188 = scmp.ne.s32.totalorder %s177, %s178
      %p189 = scmp.eq.s32.totalorder %s23, 0
      %p190 = por %p188, %p189
      %p191 = scmp.ne.s32.totalorder %s177, %s178
      %p192 = scmp.eq.s32.totalorder %s24, 1
      %p193 = por %p191, %p192
      %p195 = scmp.ne.s32.totalorder %s178, %s194
      %p196 = scmp.eq.s32.totalorder %s24, 0
      %p197 = por %p195, %p196
      %s198 = ssub.s32 %s18, %s25
      %p199 = scmp.eq.s32.totalorder %s198, 0
      %s201 = sadd.s32 %s200, 1
      %s202 = scalar_select %p199, %s200, %s201
      %p205 = pneg %p199
      %p206 = scmp.eq.s32.totalorder %s18, 1
      %p207 = por %p205, %p206
      %p208 = scmp.ne.s32.totalorder %s200, %s203
      %p209 = scmp.eq.s32.totalorder %s18, 0
      %p210 = por %p208, %p209
      %p211 = scmp.ne.s32.totalorder %s200, %s203
      %p212 = scmp.eq.s32.totalorder %s23, 1
      %p213 = por %p211, %p212
      %p214 = scmp.ne.s32.totalorder %s203, %s204
      %p215 = scmp.eq.s32.totalorder %s23, 0
      %p216 = por %p214, %p215
      %p217 = scmp.ne.s32.totalorder %s203, %s204
      %p218 = scmp.eq.s32.totalorder %s24, 1
      %p219 = por %p217, %p218
      %p221 = scmp.ne.s32.totalorder %s204, %s220
      %p222 = scmp.eq.s32.totalorder %s24, 0
      %p223 = por %p221, %p222
      %s224 = ssub.s32 %s18, %s25
      %p225 = scmp.eq.s32.totalorder %s224, 0
      %s227 = sadd.s32 %s226, 1
      %s228 = scalar_select %p225, %s226, %s227
      %p231 = pneg %p225
      %p232 = scmp.eq.s32.totalorder %s18, 1
      %p233 = por %p231, %p232
      %p234 = scmp.ne.s32.totalorder %s226, %s229
      %p235 = scmp.eq.s32.totalorder %s18, 0
      %p236 = por %p234, %p235
      %p237 = scmp.ne.s32.totalorder %s226, %s229
      %p238 = scmp.eq.s32.totalorder %s23, 1
      %p239 = por %p237, %p238
      %p240 = scmp.ne.s32.totalorder %s229, %s230
      %p241 = scmp.eq.s32.totalorder %s23, 0
      %p242 = por %p240, %p241
      %p243 = scmp.ne.s32.totalorder %s229, %s230
      %p244 = scmp.eq.s32.totalorder %s24, 1
      %p245 = por %p243, %p244
      %p247 = scmp.ne.s32.totalorder %s230, %s246
      %p248 = scmp.eq.s32.totalorder %s24, 0
      %p249 = por %p247, %p248
      %s251 = sadd.s32 %s250, 1
      %p254 = scmp.eq.s32.totalorder %s18, 1
      %p255 = scmp.ne.s32.totalorder %s250, %s252
      %p256 = scmp.eq.s32.totalorder %s18, 0
      %p257 = por %p255, %p256
      %p258 = scmp.ne.s32.totalorder %s250, %s252
      %p259 = scmp.eq.s32.totalorder %s23, 1
      %p260 = por %p258, %p259
      %p261 = scmp.ne.s32.totalorder %s252, %s253
      %p262 = scmp.eq.s32.totalorder %s23, 0
      %p263 = por %p261, %p262
      %p264 = scmp.ne.s32.totalorder %s252, %s253
      %p265 = scmp.eq.s32.totalorder %s24, 1
      %p266 = por %p264, %p265
      %p268 = scmp.ne.s32.totalorder %s253, %s267
      %p269 = scmp.eq.s32.totalorder %s24, 0
      %p270 = por %p268, %p269
      %p271 = scmp.le.s32.totalorder 1, %s18
      %p272 = scmp.lt.s32.totalorder %s18, 3
      %p273 = pnand %p271, %p272
      %p274 = pneg %p273
      // Predicated region
      $region9: #{tpu_custom_call.1} parent=5 // pred_check
        _
      $region10: #{tpu_custom_call.1} parent=5 // pred_check_branch
        %276 = sbr.rel (%p273) target = $region12
      $region11: #{tpu_custom_call.1} parent=5 // pred_region
        %s277 = ssub.s32 %s18, 1
        // Predicated region
        $region13: #{tpu_custom_call.1} parent=11 // pred_check
          %p278 = pneg %p39
        $region14: #{tpu_custom_call.1} parent=11 // pred_check_branch
          %280 = sbr.rel (%p278) target = $region16
        $region15: #{tpu_custom_call.1} parent=11 // pred_region
          %s282 = ssub.s32 256, 256
          %283 = vsyncadd [#allocation3], %s282
          %s284 = sshll.u32 [#allocation2], 4
          %s285 = int_to_ptr.vmem [resolvable:$true] %s284
          %290 = dma.hbm_to_vmem [thread:$0]  %s0, 256, %s285, [#allocation3], 128, 128, 8
        $region16: #{tpu_custom_call.1} parent=11 // pred_fallthru
          _
        // Predicated region
        $region17: #{tpu_custom_call.1} parent=11 // pred_check
          %p291 = pneg %p60
        $region18: #{tpu_custom_call.1} parent=11 // pred_check_branch
          %293 = sbr.rel (%p291) target = $region20
        $region19: #{tpu_custom_call.1} parent=11 // pred_region
          %s295 = ssub.s32 256, 256
          %296 = vsyncadd [#allocation6], %s295
          %s297 = sshll.u32 [#allocation5], 4
          %s298 = int_to_ptr.vmem [resolvable:$true] %s297
          %303 = dma.hbm_to_vmem [thread:$0]  %s1, 256, %s298, [#allocation6], 128, 128, 8
        $region20: #{tpu_custom_call.1} parent=11 // pred_fallthru
          _
      $region12: #{tpu_custom_call.1} parent=5 // pred_fallthru
        _
      %p304 = scmp.lt.s32.totalorder %s18, 2
      // Predicated region
      $region21: #{tpu_custom_call.1} parent=5 // pred_check
        %p305 = pneg %p304
      $region22: #{tpu_custom_call.1} parent=5 // pred_check_branch
        %307 = sbr.rel (%p305) target = $region24
      $region23: #{tpu_custom_call.1} parent=5 // pred_region
        // Predicated region
        $region25: #{tpu_custom_call.1} parent=23 // pred_check
          %p308 = pneg %p80
        $region26: #{tpu_custom_call.1} parent=23 // pred_check_branch
          %310 = sbr.rel (%p308) target = $region28
        $region27: #{tpu_custom_call.1} parent=23 // pred_region
          %s311 = sand.u32 %s18, 1
          %s312 = scalar_lea.sflag [#allocation3], %s311
          %s313 = sand.u32 %s70, 1
          %s314 = smul.addr %s313, 384
          %s315 = scalar_lea.vmem [#allocation7], %s314
          %s317 = ssub.s32 6144, 6144
          %318 = vsyncadd %s312, %s317
          %s319 = smul.addr %s18, 48
          %s320 = smul.addr %s319, 128
          %s321 = scalar_lea.hbm %s2, %s320
          %s322 = sshll.u32 %s315, 4
          %s323 = int_to_ptr.vmem [resolvable:$true] %s322
          %328 = dma.hbm_to_vmem [thread:$0]  %s321, 6144, %s323, %s312, 384, 384, 24
        $region28: #{tpu_custom_call.1} parent=23 // pred_fallthru
          _
        // Predicated region
        $region29: #{tpu_custom_call.1} parent=23 // pred_check
          %p329 = pneg %p106
        $region30: #{tpu_custom_call.1} parent=23 // pred_check_branch
          %331 = sbr.rel (%p329) target = $region32
        $region31: #{tpu_custom_call.1} parent=23 // pred_region
          %p332 = scmp.lt.s32.totalorder %s18, 1
          %s333 = scalar_select %p332, %s18, 1
          %s334 = smul.addr %s333, 3
          %s335 = scalar_lea.vmem %s3, %s334
        $region32: #{tpu_custom_call.1} parent=23 // pred_fallthru
          _
        // Predicated region
        $region33: #{tpu_custom_call.1} parent=23 // pred_check
          %p336 = pneg %p132
        $region34: #{tpu_custom_call.1} parent=23 // pred_check_branch
          %338 = sbr.rel (%p336) target = $region36
        $region35: #{tpu_custom_call.1} parent=23 // pred_region
          %p339 = scmp.lt.s32.totalorder %s18, 1
          %s340 = scalar_select %p339, %s18, 1
          %s341 = smul.addr %s340, 16
          %s342 = smul.addr %s341, 8
          %s343 = scalar_lea.vmem %s4, %s342
        $region36: #{tpu_custom_call.1} parent=23 // pred_fallthru
          _
        // Predicated region
        $region37: #{tpu_custom_call.1} parent=23 // pred_check
          %p344 = pneg %p158
        $region38: #{tpu_custom_call.1} parent=23 // pred_check_branch
          %346 = sbr.rel (%p344) target = $region40
        $region39: #{tpu_custom_call.1} parent=23 // pred_region
          %p347 = scmp.lt.s32.totalorder %s18, 1
          %s348 = scalar_select %p347, %s18, 1
          %s349 = smul.addr %s348, 16
          %s350 = smul.addr %s349, 8
          %s351 = scalar_lea.vmem %s5, %s350
        $region40: #{tpu_custom_call.1} parent=23 // pred_fallthru
          _
        // Predicated region
        $region41: #{tpu_custom_call.1} parent=23 // pred_check
          %p352 = pneg %p184
        $region42: #{tpu_custom_call.1} parent=23 // pred_check_branch
          %354 = sbr.rel (%p352) target = $region44
        $region43: #{tpu_custom_call.1} parent=23 // pred_region
          %p355 = scmp.lt.s32.totalorder %s18, 1
          %s356 = scalar_select %p355, %s18, 1
          %s357 = scalar_lea.vmem %s6, %s356
        $region44: #{tpu_custom_call.1} parent=23 // pred_fallthru
          _
        // Predicated region
        $region45: #{tpu_custom_call.1} parent=23 // pred_check
          %p358 = pneg %p210
        $region46: #{tpu_custom_call.1} parent=23 // pred_check_branch
          %360 = sbr.rel (%p358) target = $region48
        $region47: #{tpu_custom_call.1} parent=23 // pred_region
          %p361 = scmp.lt.s32.totalorder %s18, 1
          %s362 = scalar_select %p361, %s18, 1
          %s363 = smul.addr %s362, 8
          %s364 = smul.addr %s363, 8
          %s365 = scalar_lea.vmem %s7, %s364
        $region48: #{tpu_custom_call.1} parent=23 // pred_fallthru
          _
        // Predicated region
        $region49: #{tpu_custom_call.1} parent=23 // pred_check
          %p366 = pneg %p236
        $region50: #{tpu_custom_call.1} parent=23 // pred_check_branch
          %368 = sbr.rel (%p366) target = $region52
        $region51: #{tpu_custom_call.1} parent=23 // pred_region
          %s369 = sand.u32 %s18, 1
          %s370 = scalar_lea.sflag [#allocation3], %s369
          %s371 = sand.u32 %s226, 1
          %s372 = smul.addr %s371, 8
          %s373 = scalar_lea.vmem [#allocation8], %s372
          %s375 = ssub.s32 128, 128
          %376 = vsyncadd %s370, %s375
          %s377 = smul.addr %s18, 128
          %s378 = scalar_lea.hbm %s8, %s377
          %s380 = sshll.u32 %s373, 4
          %s381 = int_to_ptr.vmem [resolvable:$true] %s380
          %383 = dma.hbm_to_vmem [thread:$0]  %s378, 128, %s381, %s370
        $region52: #{tpu_custom_call.1} parent=23 // pred_fallthru
          _
      $region24: #{tpu_custom_call.1} parent=5 // pred_fallthru
        _
      %p384 = scmp.le.s32.totalorder 1, %s18
      %p385 = scmp.lt.s32.totalorder %s18, 3
      %p386 = pnand %p384, %p385
      %p387 = pneg %p386
      // Predicated region
      $region53: #{tpu_custom_call.1} parent=5 // pred_check
        _
      $region54: #{tpu_custom_call.1} parent=5 // pred_check_branch
        %389 = sbr.rel (%p386) target = $region56
      $region55: #{tpu_custom_call.1} parent=5 // pred_region
        %s390 = ssub.s32 %s18, 1
        // Predicated region
        $region57: #{tpu_custom_call.1} parent=55 // pred_check
          %p391 = pneg %p39
        $region58: #{tpu_custom_call.1} parent=55 // pred_check_branch
          %393 = sbr.rel (%p391) target = $region60
        $region59: #{tpu_custom_call.1} parent=55 // pred_region
          %394 = dma.done [#allocation3], 256
        $region60: #{tpu_custom_call.1} parent=55 // pred_fallthru
          _
        // Predicated region
        $region61: #{tpu_custom_call.1} parent=55 // pred_check
          %p395 = pneg %p60
        $region62: #{tpu_custom_call.1} parent=55 // pred_check_branch
          %397 = sbr.rel (%p395) target = $region64
        $region63: #{tpu_custom_call.1} parent=55 // pred_region
          %398 = dma.done [#allocation6], 256
        $region64: #{tpu_custom_call.1} parent=55 // pred_fallthru
          _
        %s399 = sand.u32 %s23, 1
        %s400 = scalar_lea.sflag [#allocation3], %s399
        %s401 = sand.u32 %s73, 1
        %s402 = smul.addr %s401, 384
        %s403 = scalar_lea.vmem [#allocation7], %s402
        // Predicated region
        $region65: #{tpu_custom_call.1} parent=55 // pred_check
          %p404 = pneg %p86
        $region66: #{tpu_custom_call.1} parent=55 // pred_check_branch
          %406 = sbr.rel (%p404) target = $region68
        $region67: #{tpu_custom_call.1} parent=55 // pred_region
          %407 = dma.done %s400, 6144
        $region68: #{tpu_custom_call.1} parent=55 // pred_fallthru
          _
        %s408 = sand.u32 %s23, 1
        %s409 = scalar_lea.sflag [#allocation3], %s408
        %s410 = sand.u32 %s229, 1
        %s411 = smul.addr %s410, 8
        %s412 = scalar_lea.vmem [#allocation8], %s411
        // Predicated region
        $region69: #{tpu_custom_call.1} parent=55 // pred_check
          %p413 = pneg %p242
        $region70: #{tpu_custom_call.1} parent=55 // pred_check_branch
          %415 = sbr.rel (%p413) target = $region72
        $region71: #{tpu_custom_call.1} parent=55 // pred_region
          %416 = dma.done %s409, 128
        $region72: #{tpu_custom_call.1} parent=55 // pred_fallthru
          _
        %p417 = pneg %p39
        %p418 = pneg %p36
        %p419 = pneg %p60
        %p420 = pneg %p57
        %s421 = sand.u32 %s23, 1
        %s422 = scalar_lea.sflag [#allocation3], %s421
        %s423 = sand.u32 %s73, 1
        %s424 = smul.addr %s423, 384
        %s425 = scalar_lea.vmem [#allocation7], %s424
        %p426 = pneg %p86
        %p427 = pneg %p83
        %p428 = scmp.lt.s32.totalorder %s23, 1
        %s429 = scalar_select %p428, %s23, 1
        %s430 = smul.addr %s429, 3
        %s431 = scalar_lea.vmem %s3, %s430
        %p432 = pneg %p112
        %p433 = pneg %p109
        %p434 = scmp.lt.s32.totalorder %s23, 1
        %s435 = scalar_select %p434, %s23, 1
        %s436 = smul.addr %s435, 16
        %s437 = smul.addr %s436, 8
        %s438 = scalar_lea.vmem %s4, %s437
        %p439 = pneg %p138
        %p440 = pneg %p135
        %p441 = scmp.lt.s32.totalorder %s23, 1
        %s442 = scalar_select %p441, %s23, 1
        %s443 = smul.addr %s442, 16
        %s444 = smul.addr %s443, 8
        %s445 = scalar_lea.vmem %s5, %s444
        %p446 = pneg %p164
        %p447 = pneg %p161
        %p448 = scmp.lt.s32.totalorder %s23, 1
        %s449 = scalar_select %p448, %s23, 1
        %s450 = scalar_lea.vmem %s6, %s449
        %p451 = pneg %p190
        %p452 = pneg %p187
        %p453 = scmp.lt.s32.totalorder %s23, 1
        %s454 = scalar_select %p453, %s23, 1
        %s455 = smul.addr %s454, 8
        %s456 = smul.addr %s455, 8
        %s457 = scalar_lea.vmem %s7, %s456
        %p458 = pneg %p216
        %p459 = pneg %p213
        %s460 = sand.u32 %s23, 1
        %s461 = scalar_lea.sflag [#allocation3], %s460
        %s462 = sand.u32 %s229, 1
        %s463 = smul.addr %s462, 8
        %s464 = scalar_lea.vmem [#allocation8], %s463
        %p465 = pneg %p242
        %p466 = pneg %p239
        %p467 = pneg %p263
        %p468 = pneg %p260
        %p469 = scmp.lt.s32.totalorder %s23, 1
        %s470 = scalar_select %p469, %s23, 1
        %s471 = smul.addr %s470, 3
        %s472 = scalar_lea.vmem %s3, %s471
        %p473 = scmp.lt.s32.totalorder %s23, 1
        %s474 = scalar_select %p473, %s23, 1
        %s475 = smul.addr %s474, 16
        %s476 = smul.addr %s475, 8
        %s477 = scalar_lea.vmem %s4, %s476
        %p478 = scmp.lt.s32.totalorder %s23, 1
        %s479 = scalar_select %p478, %s23, 1
        %s480 = smul.addr %s479, 16
        %s481 = smul.addr %s480, 8
        %s482 = scalar_lea.vmem %s5, %s481
        %p483 = scmp.lt.s32.totalorder %s23, 1
        %s484 = scalar_select %p483, %s23, 1
        %s485 = scalar_lea.vmem %s6, %s484
        %p486 = scmp.lt.s32.totalorder %s23, 1
        %s487 = scalar_select %p486, %s23, 1
        %s488 = smul.addr %s487, 8
        %s489 = smul.addr %s488, 8
        %s490 = scalar_lea.vmem %s7, %s489
        %p491 = scmp.eq.s32.totalorder %s23, 0
        // Predicated region
        $region73: #{tpu_custom_call.1} parent=55 // pred_check
          %p492 = pneg %p491
        $region74: #{tpu_custom_call.1} parent=55 // pred_check_branch
          %494 = sbr.rel (%p492) target = $region76
        $region75: #{tpu_custom_call.1} parent=55 // pred_region
          %v495 = vld [vmem:[#allocation2] sm:$0xff]
          %v496 = vld [vmem:[#allocation2 + $0x8] sm:$0xff]
          %497 = vst [vmem:[#allocation9] sm:$0xff] %v495
          %498 = vst [vmem:[#allocation9 + $0x8] sm:$0xff] %v496
        $region76: #{tpu_custom_call.1} parent=55 // pred_fallthru
          _
        %v499 = vld [vmem:[#allocation9] sm:$0xff]
        %v500 = vld [vmem:[#allocation9 + $0x8] sm:$0xff]
        %v501 = vld [vmem:[%s412] sm:$0xff]
        %502 = vadd.xlane.f32.xlu0 %v499
        %v503 = vpop.xlane.xlu0 %502
        %504 = vadd.xlane.f32.xlu0 %v500
        %v505 = vpop.xlane.xlu0 %504
        %v506 = vrcp.pop 128.0
        %v507 = vmul.f32 %v503, %v506
        %v508 = vmul.f32 %v505, %v506
        %v509 = vsub.f32 %v499, %v507
        %v510 = vsub.f32 %v500, %v508
        %v511 = vmul.f32 %v509, %v509
        %v512 = vmul.f32 %v510, %v510
        %513 = vadd.xlane.f32.xlu0 %v511
        %v514 = vpop.xlane.xlu0 %513
        %515 = vadd.xlane.f32.xlu0 %v512
        %v516 = vpop.xlane.xlu0 %515
        %v517 = vrcp.pop 127.0
        %v518 = vmul.f32 %v514, %v517
        %v519 = vmul.f32 %v516, %v517
        %v520 = vrsqrt.pop %v518
        %v521 = vmul.f32 %v518, %v520
        %vm522 = vcmp.eq.f32.partialorder %v518, inf
        %v523 = vsel %vm522, %v518, %v521
        %vm524 = vcmp.eq.f32.partialorder %v518, 0.0
        %v525 = vand.u32 %v518, 2147483648
        %v526 = vsel %vm524, %v525, %v523
        %v527 = vrsqrt.pop %v519
        %v528 = vmul.f32 %v519, %v527
        %vm529 = vcmp.eq.f32.partialorder %v519, inf
        %v530 = vsel %vm529, %v519, %v528
        %vm531 = vcmp.eq.f32.partialorder %v519, 0.0
        %v532 = vand.u32 %v519, 2147483648
        %v533 = vsel %vm531, %v532, %v530
        %v534 = vadd.f32 %v526, 1e-06
        %v535 = vadd.f32 %v533, 1e-06
        %v536 = vrcp.pop %v534
        %v537 = vrcp.pop %v535
        %v538 = vlaneseq
        %v539 = vshrl.u32 %v538, 7
        %v540 = vsub.s32 2, %v539
        %v541 = vrot.slane %v501, %v540
        %v542 = vmul.f32 %v541, %v509
        %v543 = vmul.f32 %v541, %v510
        %v544 = vmul.f32 %v542, %v536
        %v545 = vmul.f32 %v543, %v537
        %v546 = vlaneseq
        %v547 = vshrl.u32 %v546, 7
        %v548 = vsub.s32 3, %v547
        %v549 = vrot.slane %v501, %v548
        %v550 = vadd.f32 %v544, %v549
        %v551 = vadd.f32 %v545, %v549
        %v552 = vld [vmem:[%s403] sm:$0xff]
        %v553 = vld [vmem:[%s403 + $0x8] sm:$0xff]
        %v554 = vld [vmem:[%s403 + $0x10] sm:$0xff]
        %v555 = vld [vmem:[%s403 + $0x18] sm:$0xff]
        %v556 = vld [vmem:[%s403 + $0x20] sm:$0xff]
        %v557 = vld [vmem:[%s403 + $0x28] sm:$0xff]
        %v558 = vld [vmem:[%s403 + $0x30] sm:$0xff]
        %v559 = vld [vmem:[%s403 + $0x38] sm:$0xff]
        %v560 = vld [vmem:[%s403 + $0x40] sm:$0xff]
        %v561 = vld [vmem:[%s403 + $0x48] sm:$0xff]
        %v562 = vld [vmem:[%s403 + $0x50] sm:$0xff]
        %v563 = vld [vmem:[%s403 + $0x58] sm:$0xff]
        %v564 = vld [vmem:[%s403 + $0x60] sm:$0xff]
        %v565 = vld [vmem:[%s403 + $0x68] sm:$0xff]
        %v566 = vld [vmem:[%s403 + $0x70] sm:$0xff]
        %v567 = vld [vmem:[%s403 + $0x78] sm:$0xff]
        %v568 = vld [vmem:[%s403 + $0x80] sm:$0xff]
        %v569 = vld [vmem:[%s403 + $0x88] sm:$0xff]
        %v570 = vld [vmem:[%s403 + $0x90] sm:$0xff]
        %v571 = vld [vmem:[%s403 + $0x98] sm:$0xff]
        %v572 = vld [vmem:[%s403 + $0xa0] sm:$0xff]
        %v573 = vld [vmem:[%s403 + $0xa8] sm:$0xff]
        %v574 = vld [vmem:[%s403 + $0xb0] sm:$0xff]
        %v575 = vld [vmem:[%s403 + $0xb8] sm:$0xff]
        %v576 = vld [vmem:[%s403 + $0xc0] sm:$0xff]
        %v577 = vld [vmem:[%s403 + $0xc8] sm:$0xff]
        %v578 = vld [vmem:[%s403 + $0xd0] sm:$0xff]
        %v579 = vld [vmem:[%s403 + $0xd8] sm:$0xff]
        %v580 = vld [vmem:[%s403 + $0xe0] sm:$0xff]
        %v581 = vld [vmem:[%s403 + $0xe8] sm:$0xff]
        %v582 = vld [vmem:[%s403 + $0xf0] sm:$0xff]
        %v583 = vld [vmem:[%s403 + $0xf8] sm:$0xff]
        %v584 = vld [vmem:[%s403 + $0x100] sm:$0xff]
        %v585 = vld [vmem:[%s403 + $0x108] sm:$0xff]
        %v586 = vld [vmem:[%s403 + $0x110] sm:$0xff]
        %v587 = vld [vmem:[%s403 + $0x118] sm:$0xff]
        %v588 = vld [vmem:[%s403 + $0x120] sm:$0xff]
        %v589 = vld [vmem:[%s403 + $0x128] sm:$0xff]
        %v590 = vld [vmem:[%s403 + $0x130] sm:$0xff]
        %v591 = vld [vmem:[%s403 + $0x138] sm:$0xff]
        %v592 = vld [vmem:[%s403 + $0x140] sm:$0xff]
        %v593 = vld [vmem:[%s403 + $0x148] sm:$0xff]
        %v594 = vld [vmem:[%s403 + $0x150] sm:$0xff]
        %v595 = vld [vmem:[%s403 + $0x158] sm:$0xff]
        %v596 = vld [vmem:[%s403 + $0x160] sm:$0xff]
        %v597 = vld [vmem:[%s403 + $0x168] sm:$0xff]
        %v598 = vld [vmem:[%s403 + $0x170] sm:$0xff]
        %v599 = vld [vmem:[%s403 + $0x178] sm:$0xff]
        %v600 = vld [vmem:[%s472] sm:$0x7]
        %v602 = vlaneseq
        %v603 = vshrl.u32 %v602, 7
        %v604 = vsub.s32 0, %v603
        %v605 = vrot.slane %v600, %v604
        %v606 = vlaneseq
        %v607 = vshrl.u32 %v606, 7
        %v608 = vsub.s32 1, %v607
        %v609 = vrot.slane %v600, %v608
        %v610 = vlaneseq
        %v611 = vshrl.u32 %v610, 7
        %v612 = vsub.s32 2, %v611
        %v613 = vrot.slane %v600, %v612
        %617 = vmatprep.subr.mxu0 %v598
        %618 = vmatpush1.msra.mxu0 %v597
        %619 = vmatprep.subr.mxu0 %v595
        %620 = vmatpush1.msra.mxu0 %v594
        %621 = vmatprep.subr.mxu0 %v592
        %622 = vmatpush1.msra.mxu0 %v591
        %623 = vmatprep.subr.mxu0 %v589
        %624 = vmatpush1.msra.mxu0 %v588
        %625 = vmatprep.subr.mxu0 %v586
        %626 = vmatpush1.msra.mxu0 %v585
        %627 = vmatprep.subr.mxu0 %v583
        %628 = vmatpush1.msra.mxu0 %v582
        %629 = vmatprep.subr.mxu0 %v580
        %630 = vmatpush1.msra.mxu0 %v579
        %631 = vmatprep.subr.mxu0 %v577
        %632 = vmatpush1.msra.mxu0 %v576
        %633 = vmatprep.subr.mxu0 %v574
        %634 = vmatpush1.msra.mxu0 %v573
        %635 = vmatprep.subr.mxu0 %v571
        %636 = vmatpush1.msra.mxu0 %v570
        %637 = vmatprep.subr.mxu0 %v568
        %638 = vmatpush1.msra.mxu0 %v567
        %639 = vmatprep.subr.mxu0 %v565
        %640 = vmatpush1.msra.mxu0 %v564
        %641 = vmatprep.subr.mxu0 %v562
        %642 = vmatpush1.msra.mxu0 %v561
        %643 = vmatprep.subr.mxu0 %v559
        %644 = vmatpush1.msra.mxu0 %v558
        %645 = vmatprep.subr.mxu0 %v556
        %646 = vmatpush1.msra.mxu0 %v555
        %647 = vmatprep.subr.mxu0 %v553
        %648 = vmatpush1.msra.mxu0 %v552
        %649 = vmatprep.subr.mxu0 0.0
        %650 = vmatpush2.msra.mxu0 0.0
        %651 = vmatprep.subr.mxu0 0.0
        %652 = vmatpush2.msra.mxu0 0.0
        %653 = vmatprep.subr.mxu0 0.0
        %654 = vmatpush2.msra.mxu0 0.0
        %655 = vmatprep.subr.mxu0 0.0
        %656 = vmatpush2.msra.mxu0 0.0
        %657 = vmatprep.subr.mxu0 0.0
        %658 = vmatpush2.msra.mxu0 0.0
        %659 = vmatprep.subr.mxu0 0.0
        %660 = vmatpush2.msra.mxu0 0.0
        %661 = vmatprep.subr.mxu0 0.0
        %662 = vmatpush2.msra.mxu0 0.0
        %663 = vmatprep.subr.mxu0 0.0
        %664 = vmatpush2.msra.mxu0 0.0
        %665 = vmatprep.subr.mxu0 0.0
        %666 = vmatpush2.msra.mxu0 0.0
        %667 = vmatprep.subr.mxu0 0.0
        %668 = vmatpush2.msra.mxu0 0.0
        %669 = vmatprep.subr.mxu0 0.0
        %670 = vmatpush2.msra.mxu0 0.0
        %671 = vmatprep.subr.mxu0 0.0
        %672 = vmatpush2.msra.mxu0 0.0
        %673 = vmatprep.subr.mxu0 0.0
        %674 = vmatpush2.msra.mxu0 0.0
        %675 = vmatprep.subr.mxu0 0.0
        %676 = vmatpush2.msra.mxu0 0.0
        %677 = vmatprep.subr.mxu0 0.0
        %678 = vmatpush2.msra.mxu0 0.0
        %679 = vmatprep.subr.mxu0 0.0
        %680 = vmatpush2.msra.mxu0 0.0
        %681 = vmatprep.mubr.f32.mxu0 0.0
        %682 = vmatmul.mubr.f32.gmra.mxu0 %v550
        %v683 = vpop.f32.mrf.mxu0
        %v684 = vadd.f32 %v605, %v683
        %v685 = vpop.f32.mrf.mxu0
        %v686 = vadd.f32 %v609, %v685
        %687 = vmatprep.mubr.f32.mxu0 0.0
        %688 = vmatmul.mubr.f32.gmra.mxu0 %v551
        %v689 = vpop.f32.mrf.mxu0
        %v690 = vadd.f32 %v605, %v689
        %v691 = vpop.f32.mrf.mxu0
        %v692 = vadd.f32 %v609, %v691
        %693 = vdwg.mxu0
        %694 = vmatprep.subr.mxu0 0.0
        %695 = vmatpush1.msra.mxu0 %v599
        %696 = vmatprep.subr.mxu0 0.0
        %697 = vmatpush1.msra.mxu0 %v596
        %698 = vmatprep.subr.mxu0 0.0
        %699 = vmatpush1.msra.mxu0 %v593
        %700 = vmatprep.subr.mxu0 0.0
        %701 = vmatpush1.msra.mxu0 %v590
        %702 = vmatprep.subr.mxu0 0.0
        %703 = vmatpush1.msra.mxu0 %v587
        %704 = vmatprep.subr.mxu0 0.0
        %705 = vmatpush1.msra.mxu0 %v584
        %706 = vmatprep.subr.mxu0 0.0
        %707 = vmatpush1.msra.mxu0 %v581
        %708 = vmatprep.subr.mxu0 0.0
        %709 = vmatpush1.msra.mxu0 %v578
        %710 = vmatprep.subr.mxu0 0.0
        %711 = vmatpush1.msra.mxu0 %v575
        %712 = vmatprep.subr.mxu0 0.0
        %713 = vmatpush1.msra.mxu0 %v572
        %714 = vmatprep.subr.mxu0 0.0
        %715 = vmatpush1.msra.mxu0 %v569
        %716 = vmatprep.subr.mxu0 0.0
        %717 = vmatpush1.msra.mxu0 %v566
        %718 = vmatprep.subr.mxu0 0.0
        %719 = vmatpush1.msra.mxu0 %v563
        %720 = vmatprep.subr.mxu0 0.0
        %721 = vmatpush1.msra.mxu0 %v560
        %722 = vmatprep.subr.mxu0 0.0
        %723 = vmatpush1.msra.mxu0 %v557
        %724 = vmatprep.subr.mxu0 0.0
        %725 = vmatpush1.msra.mxu0 %v554
        %726 = vmatprep.subr.mxu0 0.0
        %727 = vmatpush2.msra.mxu0 0.0
        %728 = vmatprep.subr.mxu0 0.0
        %729 = vmatpush2.msra.mxu0 0.0
        %730 = vmatprep.subr.mxu0 0.0
        %731 = vmatpush2.msra.mxu0 0.0
        %732 = vmatprep.subr.mxu0 0.0
        %733 = vmatpush2.msra.mxu0 0.0
        %734 = vmatprep.subr.mxu0 0.0
        %735 = vmatpush2.msra.mxu0 0.0
        %736 = vmatprep.subr.mxu0 0.0
        %737 = vmatpush2.msra.mxu0 0.0
        %738 = vmatprep.subr.mxu0 0.0
        %739 = vmatpush2.msra.mxu0 0.0
        %740 = vmatprep.subr.mxu0 0.0
        %741 = vmatpush2.msra.mxu0 0.0
        %742 = vmatprep.subr.mxu0 0.0
        %743 = vmatpush2.msra.mxu0 0.0
        %744 = vmatprep.subr.mxu0 0.0
        %745 = vmatpush2.msra.mxu0 0.0
        %746 = vmatprep.subr.mxu0 0.0
        %747 = vmatpush2.msra.mxu0 0.0
        %748 = vmatprep.subr.mxu0 0.0
        %749 = vmatpush2.msra.mxu0 0.0
        %750 = vmatprep.subr.mxu0 0.0
        %751 = vmatpush2.msra.mxu0 0.0
        %752 = vmatprep.subr.mxu0 0.0
        %753 = vmatpush2.msra.mxu0 0.0
        %754 = vmatprep.subr.mxu0 0.0
        %755 = vmatpush2.msra.mxu0 0.0
        %756 = vmatprep.subr.mxu0 0.0
        %757 = vmatpush2.msra.mxu0 0.0
        %758 = vmatprep.mubr.f32.mxu0 0.0
        %759 = vmatmul.mubr.f32.gmra.mxu0 %v550
        %v760 = vpop.f32.mrf.mxu0
        %v761 = vadd.f32 %v613, %v760
        %v762 = vpop.f32.mrf.mxu0
        %763 = vmatprep.mubr.f32.mxu0 0.0
        %764 = vmatmul.mubr.f32.gmra.mxu0 %v551
        %v765 = vpop.f32.mrf.mxu0
        %v766 = vadd.f32 %v613, %v765
        %v767 = vpop.f32.mrf.mxu0
        %768 = vdwg.mxu0
        %v769 = vld [vmem:[#allocation5] sm:$0xff]
        %v770 = vld [vmem:[#allocation5 + $0x8] sm:$0xff]
        %vm771 = vcmp.eq.f32.partialorder %v769, 0.0
        %vm772 = vcmp.eq.f32.partialorder %v770, 0.0
        %774 = vrot.lane.b32.xlu0 %v684, 96
        %v775 = vpop.permute.xlu0 %774
        %776 = vrot.lane.b32.xlu0 %v684, 64
        %v777 = vpop.permute.xlu0 %776
        %778 = vrot.lane.b32.xlu0 %v684, 32
        %v779 = vpop.permute.xlu0 %778
        %781 = vrot.lane.b32.xlu0 %v686, 96
        %v782 = vpop.permute.xlu0 %781
        %784 = vrot.lane.b32.xlu0 %v686, 64
        %v785 = vpop.permute.xlu0 %784
        %787 = vrot.lane.b32.xlu0 %v686, 32
        %v788 = vpop.permute.xlu0 %787
        %791 = vrot.lane.b32.xlu0 %v761, 96
        %v792 = vpop.permute.xlu0 %791
        %794 = vrot.lane.b32.xlu0 %v761, 64
        %v795 = vpop.permute.xlu0 %794
        %797 = vrot.lane.b32.xlu0 %v761, 32
        %v798 = vpop.permute.xlu0 %797
        %800 = vxpose.xlu0.b32.start [1/16] %v686, 128
        %801 = vxpose.xlu0.b32.cont [2/16] 0.0, 128
        %802 = vxpose.xlu0.b32.cont [3/16] 0.0, 128
        %803 = vxpose.xlu0.b32.cont [4/16] 0.0, 128
        %804 = vxpose.xlu0.b32.cont [5/16] 0.0, 128
        %805 = vxpose.xlu0.b32.cont [6/16] 0.0, 128
        %806 = vxpose.xlu0.b32.cont [7/16] 0.0, 128
        %807 = vxpose.xlu0.b32.cont [8/16] 0.0, 128
        %808 = vxpose.xlu0.b32.cont [9/16] 0.0, 128
        %809 = vxpose.xlu0.b32.cont [10/16] 0.0, 128
        %810 = vxpose.xlu0.b32.cont [11/16] 0.0, 128
        %811 = vxpose.xlu0.b32.cont [12/16] 0.0, 128
        %812 = vxpose.xlu0.b32.cont [13/16] 0.0, 128
        %813 = vxpose.xlu0.b32.cont [14/16] 0.0, 128
        %814 = vxpose.xlu0.b32.cont [15/16] 0.0, 128
        %815 = vxpose.xlu0.b32.end [16/16] 0.0, 128
        %v816 = vpop.trf.xlu0
        %v817 = vpop.trf.xlu0
        %v818 = vpop.trf.xlu0
        %v819 = vpop.trf.xlu0
        %v820 = vpop.trf.xlu0
        %v821 = vpop.trf.xlu0
        %v822 = vpop.trf.xlu0
        %v823 = vpop.trf.xlu0
        %v824 = vpop.trf.xlu0
        %v825 = vpop.trf.xlu0
        %v826 = vpop.trf.xlu0
        %v827 = vpop.trf.xlu0
        %v828 = vpop.trf.xlu0
        %v829 = vpop.trf.xlu0
        %v830 = vpop.trf.xlu0
        %v831 = vpop.trf.xlu0
        %832 = vxpose.xlu0.b32.start [1/16] %v782, 128
        %833 = vxpose.xlu0.b32.cont [2/16] 0.0, 128
        %834 = vxpose.xlu0.b32.cont [3/16] 0.0, 128
        %835 = vxpose.xlu0.b32.cont [4/16] 0.0, 128
        %836 = vxpose.xlu0.b32.cont [5/16] 0.0, 128
        %837 = vxpose.xlu0.b32.cont [6/16] 0.0, 128
        %838 = vxpose.xlu0.b32.cont [7/16] 0.0, 128
        %839 = vxpose.xlu0.b32.cont [8/16] 0.0, 128
        %840 = vxpose.xlu0.b32.cont [9/16] 0.0, 128
        %841 = vxpose.xlu0.b32.cont [10/16] 0.0, 128
        %842 = vxpose.xlu0.b32.cont [11/16] 0.0, 128
        %843 = vxpose.xlu0.b32.cont [12/16] 0.0, 128
        %844 = vxpose.xlu0.b32.cont [13/16] 0.0, 128
        %845 = vxpose.xlu0.b32.cont [14/16] 0.0, 128
        %846 = vxpose.xlu0.b32.cont [15/16] 0.0, 128
        %847 = vxpose.xlu0.b32.end [16/16] 0.0, 128
        %v848 = vpop.trf.xlu0
        %v849 = vpop.trf.xlu0
        %v850 = vpop.trf.xlu0
        %v851 = vpop.trf.xlu0
        %v852 = vpop.trf.xlu0
        %v853 = vpop.trf.xlu0
        %v854 = vpop.trf.xlu0
        %v855 = vpop.trf.xlu0
        %v856 = vpop.trf.xlu0
        %v857 = vpop.trf.xlu0
        %v858 = vpop.trf.xlu0
        %v859 = vpop.trf.xlu0
        %v860 = vpop.trf.xlu0
        %v861 = vpop.trf.xlu0
        %v862 = vpop.trf.xlu0
        %v863 = vpop.trf.xlu0
        %864 = vxpose.xlu0.b32.start [1/16] %v785, 128
        %865 = vxpose.xlu0.b32.cont [2/16] 0.0, 128
        %866 = vxpose.xlu0.b32.cont [3/16] 0.0, 128
        %867 = vxpose.xlu0.b32.cont [4/16] 0.0, 128
        %868 = vxpose.xlu0.b32.cont [5/16] 0.0, 128
        %869 = vxpose.xlu0.b32.cont [6/16] 0.0, 128
        %870 = vxpose.xlu0.b32.cont [7/16] 0.0, 128
        %871 = vxpose.xlu0.b32.cont [8/16] 0.0, 128
        %872 = vxpose.xlu0.b32.cont [9/16] 0.0, 128
        %873 = vxpose.xlu0.b32.cont [10/16] 0.0, 128
        %874 = vxpose.xlu0.b32.cont [11/16] 0.0, 128
        %875 = vxpose.xlu0.b32.cont [12/16] 0.0, 128
        %876 = vxpose.xlu0.b32.cont [13/16] 0.0, 128
        %877 = vxpose.xlu0.b32.cont [14/16] 0.0, 128
        %878 = vxpose.xlu0.b32.cont [15/16] 0.0, 128
        %879 = vxpose.xlu0.b32.end [16/16] 0.0, 128
        %v880 = vpop.trf.xlu0
        %v881 = vpop.trf.xlu0
        %v882 = vpop.trf.xlu0
        %v883 = vpop.trf.xlu0
        %v884 = vpop.trf.xlu0
        %v885 = vpop.trf.xlu0
        %v886 = vpop.trf.xlu0
        %v887 = vpop.trf.xlu0
        %v888 = vpop.trf.xlu0
        %v889 = vpop.trf.xlu0
        %v890 = vpop.trf.xlu0
        %v891 = vpop.trf.xlu0
        %v892 = vpop.trf.xlu0
        %v893 = vpop.trf.xlu0
        %v894 = vpop.trf.xlu0
        %v895 = vpop.trf.xlu0
        %896 = vxpose.xlu0.b32.start [1/16] %v788, 128
        %897 = vxpose.xlu0.b32.cont [2/16] 0.0, 128
        %898 = vxpose.xlu0.b32.cont [3/16] 0.0, 128
        %899 = vxpose.xlu0.b32.cont [4/16] 0.0, 128
        %900 = vxpose.xlu0.b32.cont [5/16] 0.0, 128
        %901 = vxpose.xlu0.b32.cont [6/16] 0.0, 128
        %902 = vxpose.xlu0.b32.cont [7/16] 0.0, 128
        %903 = vxpose.xlu0.b32.cont [8/16] 0.0, 128
        %904 = vxpose.xlu0.b32.cont [9/16] 0.0, 128
        %905 = vxpose.xlu0.b32.cont [10/16] 0.0, 128
        %906 = vxpose.xlu0.b32.cont [11/16] 0.0, 128
        %907 = vxpose.xlu0.b32.cont [12/16] 0.0, 128
        %908 = vxpose.xlu0.b32.cont [13/16] 0.0, 128
        %909 = vxpose.xlu0.b32.cont [14/16] 0.0, 128
        %910 = vxpose.xlu0.b32.cont [15/16] 0.0, 128
        %911 = vxpose.xlu0.b32.end [16/16] 0.0, 128
        %v912 = vpop.trf.xlu0
        %v913 = vpop.trf.xlu0
        %v914 = vpop.trf.xlu0
        %v915 = vpop.trf.xlu0
        %v916 = vpop.trf.xlu0
        %v917 = vpop.trf.xlu0
        %v918 = vpop.trf.xlu0
        %v919 = vpop.trf.xlu0
        %v920 = vpop.trf.xlu0
        %v921 = vpop.trf.xlu0
        %v922 = vpop.trf.xlu0
        %v923 = vpop.trf.xlu0
        %v924 = vpop.trf.xlu0
        %v925 = vpop.trf.xlu0
        %v926 = vpop.trf.xlu0
        %v927 = vpop.trf.xlu0
        %vm928 = vcmask 261120
        %v929 = vsel %vm928, %v684, 0
        %931 = vmatprep.subr.mxu0 0.0
        %932 = vmatpush1.msra.mxu0 0.0
        %933 = vmatprep.subr.mxu0 0.0
        %934 = vmatpush1.msra.mxu0 0.0
        %935 = vmatprep.subr.mxu0 0.0
        %936 = vmatpush1.msra.mxu0 0.0
        %937 = vmatprep.subr.mxu0 0.0
        %938 = vmatpush1.msra.mxu0 0.0
        %939 = vmatprep.subr.mxu0 0.0
        %940 = vmatpush1.msra.mxu0 0.0
        %941 = vmatprep.subr.mxu0 0.0
        %942 = vmatpush1.msra.mxu0 0.0
        %943 = vmatprep.subr.mxu0 0.0
        %944 = vmatpush1.msra.mxu0 0.0
        %945 = vmatprep.subr.mxu0 0.0
        %946 = vmatpush1.msra.mxu0 0.0
        %947 = vmatprep.subr.mxu0 0.0
        %948 = vmatpush1.msra.mxu0 0.0
        %949 = vmatprep.subr.mxu0 0.0
        %950 = vmatpush1.msra.mxu0 0.0
        %951 = vmatprep.subr.mxu0 0.0
        %952 = vmatpush1.msra.mxu0 0.0
        %953 = vmatprep.subr.mxu0 0.0
        %954 = vmatpush1.msra.mxu0 0.0
        %955 = vmatprep.subr.mxu0 0.0
        %956 = vmatpush1.msra.mxu0 %v819
        %957 = vmatprep.subr.mxu0 0.0
        %958 = vmatpush1.msra.mxu0 %v818
        %959 = vmatprep.subr.mxu0 0.0
        %960 = vmatpush1.msra.mxu0 %v817
        %961 = vmatprep.subr.mxu0 0.0
        %962 = vmatpush1.msra.mxu0 %v816
        %963 = vmatprep.subr.mxu0 0.0
        %964 = vmatpush2.msra.mxu0 0.0
        %965 = vmatprep.subr.mxu0 0.0
        %966 = vmatpush2.msra.mxu0 0.0
        %967 = vmatprep.subr.mxu0 0.0
        %968 = vmatpush2.msra.mxu0 0.0
        %969 = vmatprep.subr.mxu0 0.0
        %970 = vmatpush2.msra.mxu0 0.0
        %971 = vmatprep.subr.mxu0 0.0
        %972 = vmatpush2.msra.mxu0 0.0
        %973 = vmatprep.subr.mxu0 0.0
        %974 = vmatpush2.msra.mxu0 0.0
        %975 = vmatprep.subr.mxu0 0.0
        %976 = vmatpush2.msra.mxu0 0.0
        %977 = vmatprep.subr.mxu0 0.0
        %978 = vmatpush2.msra.mxu0 0.0
        %979 = vmatprep.subr.mxu0 0.0
        %980 = vmatpush2.msra.mxu0 0.0
        %981 = vmatprep.subr.mxu0 0.0
        %982 = vmatpush2.msra.mxu0 0.0
        %983 = vmatprep.subr.mxu0 0.0
        %984 = vmatpush2.msra.mxu0 0.0
        %985 = vmatprep.subr.mxu0 0.0
        %986 = vmatpush2.msra.mxu0 0.0
        %987 = vmatprep.subr.mxu0 0.0
        %988 = vmatpush2.msra.mxu0 0.0
        %989 = vmatprep.subr.mxu0 0.0
        %990 = vmatpush2.msra.mxu0 0.0
        %991 = vmatprep.subr.mxu0 0.0
        %992 = vmatpush2.msra.mxu0 0.0
        %993 = vmatprep.subr.mxu0 0.0
        %994 = vmatpush2.msra.mxu0 0.0
        %995 = vmatprep.mubr.f32.mxu0 0.0
        %996 = vmatmul.mubr.f32.gmra.mxu0 %v929
        %v997 = vpop.f32.mrf.mxu0
        %v998 = vadd.f32 0.0, %v997
        %v999 = vpop.f32.mrf.mxu0
        %1000 = vdwg.mxu0
        %v1001 = vsel %vm928, %v775, 0
        %1003 = vmatprep.subr.mxu0 0.0
        %1004 = vmatpush1.msra.mxu0 0.0
        %1005 = vmatprep.subr.mxu0 0.0
        %1006 = vmatpush1.msra.mxu0 0.0
        %1007 = vmatprep.subr.mxu0 0.0
        %1008 = vmatpush1.msra.mxu0 0.0
        %1009 = vmatprep.subr.mxu0 0.0
        %1010 = vmatpush1.msra.mxu0 0.0
        %1011 = vmatprep.subr.mxu0 0.0
        %1012 = vmatpush1.msra.mxu0 0.0
        %1013 = vmatprep.subr.mxu0 0.0
        %1014 = vmatpush1.msra.mxu0 0.0
        %1015 = vmatprep.subr.mxu0 0.0
        %1016 = vmatpush1.msra.mxu0 0.0
        %1017 = vmatprep.subr.mxu0 0.0
        %1018 = vmatpush1.msra.mxu0 0.0
        %1019 = vmatprep.subr.mxu0 0.0
        %1020 = vmatpush1.msra.mxu0 0.0
        %1021 = vmatprep.subr.mxu0 0.0
        %1022 = vmatpush1.msra.mxu0 0.0
        %1023 = vmatprep.subr.mxu0 0.0
        %1024 = vmatpush1.msra.mxu0 0.0
        %1025 = vmatprep.subr.mxu0 0.0
        %1026 = vmatpush1.msra.mxu0 0.0
        %1027 = vmatprep.subr.mxu0 0.0
        %1028 = vmatpush1.msra.mxu0 %v851
        %1029 = vmatprep.subr.mxu0 0.0
        %1030 = vmatpush1.msra.mxu0 %v850
        %1031 = vmatprep.subr.mxu0 0.0
        %1032 = vmatpush1.msra.mxu0 %v849
        %1033 = vmatprep.subr.mxu0 0.0
        %1034 = vmatpush1.msra.mxu0 %v848
        %1035 = vmatprep.subr.mxu0 0.0
        %1036 = vmatpush2.msra.mxu0 0.0
        %1037 = vmatprep.subr.mxu0 0.0
        %1038 = vmatpush2.msra.mxu0 0.0
        %1039 = vmatprep.subr.mxu0 0.0
        %1040 = vmatpush2.msra.mxu0 0.0
        %1041 = vmatprep.subr.mxu0 0.0
        %1042 = vmatpush2.msra.mxu0 0.0
        %1043 = vmatprep.subr.mxu0 0.0
        %1044 = vmatpush2.msra.mxu0 0.0
        %1045 = vmatprep.subr.mxu0 0.0
        %1046 = vmatpush2.msra.mxu0 0.0
        %1047 = vmatprep.subr.mxu0 0.0
        %1048 = vmatpush2.msra.mxu0 0.0
        %1049 = vmatprep.subr.mxu0 0.0
        %1050 = vmatpush2.msra.mxu0 0.0
        %1051 = vmatprep.subr.mxu0 0.0
        %1052 = vmatpush2.msra.mxu0 0.0
        %1053 = vmatprep.subr.mxu0 0.0
        %1054 = vmatpush2.msra.mxu0 0.0
        %1055 = vmatprep.subr.mxu0 0.0
        %1056 = vmatpush2.msra.mxu0 0.0
        %1057 = vmatprep.subr.mxu0 0.0
        %1058 = vmatpush2.msra.mxu0 0.0
        %1059 = vmatprep.subr.mxu0 0.0
        %1060 = vmatpush2.msra.mxu0 0.0
        %1061 = vmatprep.subr.mxu0 0.0
        %1062 = vmatpush2.msra.mxu0 0.0
        %1063 = vmatprep.subr.mxu0 0.0
        %1064 = vmatpush2.msra.mxu0 0.0
        %1065 = vmatprep.subr.mxu0 0.0
        %1066 = vmatpush2.msra.mxu0 0.0
        %1067 = vmatprep.mubr.f32.mxu0 0.0
        %1068 = vmatmul.mubr.f32.gmra.mxu0 %v1001
        %v1069 = vpop.f32.mrf.mxu0
        %v1070 = vadd.f32 0.0, %v1069
        %v1071 = vpop.f32.mrf.mxu0
        %1072 = vdwg.mxu0
        %v1073 = vsel %vm928, %v777, 0
        %1075 = vmatprep.subr.mxu0 0.0
        %1076 = vmatpush1.msra.mxu0 0.0
        %1077 = vmatprep.subr.mxu0 0.0
        %1078 = vmatpush1.msra.mxu0 0.0
        %1079 = vmatprep.subr.mxu0 0.0
        %1080 = vmatpush1.msra.mxu0 0.0
        %1081 = vmatprep.subr.mxu0 0.0
        %1082 = vmatpush1.msra.mxu0 0.0
        %1083 = vmatprep.subr.mxu0 0.0
        %1084 = vmatpush1.msra.mxu0 0.0
        %1085 = vmatprep.subr.mxu0 0.0
        %1086 = vmatpush1.msra.mxu0 0.0
        %1087 = vmatprep.subr.mxu0 0.0
        %1088 = vmatpush1.msra.mxu0 0.0
        %1089 = vmatprep.subr.mxu0 0.0
        %1090 = vmatpush1.msra.mxu0 0.0
        %1091 = vmatprep.subr.mxu0 0.0
        %1092 = vmatpush1.msra.mxu0 0.0
        %1093 = vmatprep.subr.mxu0 0.0
        %1094 = vmatpush1.msra.mxu0 0.0
        %1095 = vmatprep.subr.mxu0 0.0
        %1096 = vmatpush1.msra.mxu0 0.0
        %1097 = vmatprep.subr.mxu0 0.0
        %1098 = vmatpush1.msra.mxu0 0.0
        %1099 = vmatprep.subr.mxu0 0.0
        %1100 = vmatpush1.msra.mxu0 %v883
        %1101 = vmatprep.subr.mxu0 0.0
        %1102 = vmatpush1.msra.mxu0 %v882
        %1103 = vmatprep.subr.mxu0 0.0
        %1104 = vmatpush1.msra.mxu0 %v881
        %1105 = vmatprep.subr.mxu0 0.0
        %1106 = vmatpush1.msra.mxu0 %v880
        %1107 = vmatprep.subr.mxu0 0.0
        %1108 = vmatpush2.msra.mxu0 0.0
        %1109 = vmatprep.subr.mxu0 0.0
        %1110 = vmatpush2.msra.mxu0 0.0
        %1111 = vmatprep.subr.mxu0 0.0
        %1112 = vmatpush2.msra.mxu0 0.0
        %1113 = vmatprep.subr.mxu0 0.0
        %1114 = vmatpush2.msra.mxu0 0.0
        %1115 = vmatprep.subr.mxu0 0.0
        %1116 = vmatpush2.msra.mxu0 0.0
        %1117 = vmatprep.subr.mxu0 0.0
        %1118 = vmatpush2.msra.mxu0 0.0
        %1119 = vmatprep.subr.mxu0 0.0
        %1120 = vmatpush2.msra.mxu0 0.0
        %1121 = vmatprep.subr.mxu0 0.0
        %1122 = vmatpush2.msra.mxu0 0.0
        %1123 = vmatprep.subr.mxu0 0.0
        %1124 = vmatpush2.msra.mxu0 0.0
        %1125 = vmatprep.subr.mxu0 0.0
        %1126 = vmatpush2.msra.mxu0 0.0
        %1127 = vmatprep.subr.mxu0 0.0
        %1128 = vmatpush2.msra.mxu0 0.0
        %1129 = vmatprep.subr.mxu0 0.0
        %1130 = vmatpush2.msra.mxu0 0.0
        %1131 = vmatprep.subr.mxu0 0.0
        %1132 = vmatpush2.msra.mxu0 0.0
        %1133 = vmatprep.subr.mxu0 0.0
        %1134 = vmatpush2.msra.mxu0 0.0
        %1135 = vmatprep.subr.mxu0 0.0
        %1136 = vmatpush2.msra.mxu0 0.0
        %1137 = vmatprep.subr.mxu0 0.0
        %1138 = vmatpush2.msra.mxu0 0.0
        %1139 = vmatprep.mubr.f32.mxu0 0.0
        %1140 = vmatmul.mubr.f32.gmra.mxu0 %v1073
        %v1141 = vpop.f32.mrf.mxu0
        %v1142 = vadd.f32 0.0, %v1141
        %v1143 = vpop.f32.mrf.mxu0
        %1144 = vdwg.mxu0
        %v1145 = vsel %vm928, %v779, 0
        %1147 = vmatprep.subr.mxu0 0.0
        %1148 = vmatpush1.msra.mxu0 0.0
        %1149 = vmatprep.subr.mxu0 0.0
        %1150 = vmatpush1.msra.mxu0 0.0
        %1151 = vmatprep.subr.mxu0 0.0
        %1152 = vmatpush1.msra.mxu0 0.0
        %1153 = vmatprep.subr.mxu0 0.0
        %1154 = vmatpush1.msra.mxu0 0.0
        %1155 = vmatprep.subr.mxu0 0.0
        %1156 = vmatpush1.msra.mxu0 0.0
        %1157 = vmatprep.subr.mxu0 0.0
        %1158 = vmatpush1.msra.mxu0 0.0
        %1159 = vmatprep.subr.mxu0 0.0
        %1160 = vmatpush1.msra.mxu0 0.0
        %1161 = vmatprep.subr.mxu0 0.0
        %1162 = vmatpush1.msra.mxu0 0.0
        %1163 = vmatprep.subr.mxu0 0.0
        %1164 = vmatpush1.msra.mxu0 0.0
        %1165 = vmatprep.subr.mxu0 0.0
        %1166 = vmatpush1.msra.mxu0 0.0
        %1167 = vmatprep.subr.mxu0 0.0
        %1168 = vmatpush1.msra.mxu0 0.0
        %1169 = vmatprep.subr.mxu0 0.0
        %1170 = vmatpush1.msra.mxu0 0.0
        %1171 = vmatprep.subr.mxu0 0.0
        %1172 = vmatpush1.msra.mxu0 %v915
        %1173 = vmatprep.subr.mxu0 0.0
        %1174 = vmatpush1.msra.mxu0 %v914
        %1175 = vmatprep.subr.mxu0 0.0
        %1176 = vmatpush1.msra.mxu0 %v913
        %1177 = vmatprep.subr.mxu0 0.0
        %1178 = vmatpush1.msra.mxu0 %v912
        %1179 = vmatprep.subr.mxu0 0.0
        %1180 = vmatpush2.msra.mxu0 0.0
        %1181 = vmatprep.subr.mxu0 0.0
        %1182 = vmatpush2.msra.mxu0 0.0
        %1183 = vmatprep.subr.mxu0 0.0
        %1184 = vmatpush2.msra.mxu0 0.0
        %1185 = vmatprep.subr.mxu0 0.0
        %1186 = vmatpush2.msra.mxu0 0.0
        %1187 = vmatprep.subr.mxu0 0.0
        %1188 = vmatpush2.msra.mxu0 0.0
        %1189 = vmatprep.subr.mxu0 0.0
        %1190 = vmatpush2.msra.mxu0 0.0
        %1191 = vmatprep.subr.mxu0 0.0
        %1192 = vmatpush2.msra.mxu0 0.0
        %1193 = vmatprep.subr.mxu0 0.0
        %1194 = vmatpush2.msra.mxu0 0.0
        %1195 = vmatprep.subr.mxu0 0.0
        %1196 = vmatpush2.msra.mxu0 0.0
        %1197 = vmatprep.subr.mxu0 0.0
        %1198 = vmatpush2.msra.mxu0 0.0
        %1199 = vmatprep.subr.mxu0 0.0
        %1200 = vmatpush2.msra.mxu0 0.0
        %1201 = vmatprep.subr.mxu0 0.0
        %1202 = vmatpush2.msra.mxu0 0.0
        %1203 = vmatprep.subr.mxu0 0.0
        %1204 = vmatpush2.msra.mxu0 0.0
        %1205 = vmatprep.subr.mxu0 0.0
        %1206 = vmatpush2.msra.mxu0 0.0
        %1207 = vmatprep.subr.mxu0 0.0
        %1208 = vmatpush2.msra.mxu0 0.0
        %1209 = vmatprep.subr.mxu0 0.0
        %1210 = vmatpush2.msra.mxu0 0.0
        %1211 = vmatprep.mubr.f32.mxu0 0.0
        %1212 = vmatmul.mubr.f32.gmra.mxu0 %v1145
        %v1213 = vpop.f32.mrf.mxu0
        %v1214 = vadd.f32 0.0, %v1213
        %v1215 = vpop.f32.mrf.mxu0
        %1216 = vdwg.mxu0
        %v1217 = vmul.f32 %v998, 0.17677669
        %v1218 = vmul.f32 %v1070, 0.17677669
        %v1219 = vmul.f32 %v1142, 0.17677669
        %v1220 = vmul.f32 %v1214, 0.17677669
        %v1221 = vsel %vm771, 1, 0
        %vm1222 = vcmp.eq.s32.totalorder %v1221, 1
        %v1223 = vsel %vm1222, -1e+09, %v1217
        %v1224 = vsel %vm1222, -1e+09, %v1218
        %v1225 = vsel %vm1222, -1e+09, %v1219
        %v1226 = vsel %vm1222, -1e+09, %v1220
        %vm1227 = vcmask 64512
        %v1228 = vsel %vm1227, %v1223, -inf
        %1229 = vmax.xlane.f32.xlu0 %v1228
        %v1230 = vpop.xlane.xlu0 %1229
        %v1231 = vsel %vm1227, %v1224, -inf
        %1232 = vmax.xlane.f32.xlu0 %v1231
        %v1233 = vpop.xlane.xlu0 %1232
        %v1234 = vsel %vm1227, %v1225, -inf
        %1235 = vmax.xlane.f32.xlu0 %v1234
        %v1236 = vpop.xlane.xlu0 %1235
        %v1237 = vsel %vm1227, %v1226, -inf
        %1238 = vmax.xlane.f32.xlu0 %v1237
        %v1239 = vpop.xlane.xlu0 %1238
        %v1240 = vsub.f32 %v1223, %v1230
        %v1241 = vsub.f32 %v1224, %v1233
        %v1242 = vsub.f32 %v1225, %v1236
        %v1243 = vsub.f32 %v1226, %v1239
        %v1244 = vmul.f32 %v1240, 1.442695
        %v1245 = vpow.pop %v1244
        %v1246 = vmul.f32 %v1241, 1.442695
        %v1247 = vpow.pop %v1246
        %v1248 = vmul.f32 %v1242, 1.442695
        %v1249 = vpow.pop %v1248
        %v1250 = vmul.f32 %v1243, 1.442695
        %v1251 = vpow.pop %v1250
        %v1252 = vsel %vm1227, %v1245, 0.0
        %1253 = vadd.xlane.f32.xlu0 %v1252
        %v1254 = vpop.xlane.xlu0 %1253
        %v1255 = vsel %vm1227, %v1247, 0.0
        %1256 = vadd.xlane.f32.xlu0 %v1255
        %v1257 = vpop.xlane.xlu0 %1256
        %v1258 = vsel %vm1227, %v1249, 0.0
        %1259 = vadd.xlane.f32.xlu0 %v1258
        %v1260 = vpop.xlane.xlu0 %1259
        %v1261 = vsel %vm1227, %v1251, 0.0
        %1262 = vadd.xlane.f32.xlu0 %v1261
        %v1263 = vpop.xlane.xlu0 %1262
        %v1264 = vrcp.pop %v1254
        %v1265 = vrcp.pop %v1257
        %v1266 = vrcp.pop %v1260
        %v1267 = vrcp.pop %v1263
        %v1268 = vmul.f32 %v1245, %v1264
        %v1269 = vmul.f32 %v1247, %v1265
        %v1270 = vmul.f32 %v1249, %v1266
        %v1271 = vmul.f32 %v1251, %v1267
        %1272 = vxpose.xlu0.b32.start [1/16] %v761, 128
        %1273 = vxpose.xlu0.b32.cont [2/16] 0.0, 128
        %1274 = vxpose.xlu0.b32.cont [3/16] 0.0, 128
        %1275 = vxpose.xlu0.b32.cont [4/16] 0.0, 128
        %1276 = vxpose.xlu0.b32.cont [5/16] 0.0, 128
        %1277 = vxpose.xlu0.b32.cont [6/16] 0.0, 128
        %1278 = vxpose.xlu0.b32.cont [7/16] 0.0, 128
        %1279 = vxpose.xlu0.b32.cont [8/16] 0.0, 128
        %1280 = vxpose.xlu0.b32.cont [9/16] 0.0, 128
        %1281 = vxpose.xlu0.b32.cont [10/16] 0.0, 128
        %1282 = vxpose.xlu0.b32.cont [11/16] 0.0, 128
        %1283 = vxpose.xlu0.b32.cont [12/16] 0.0, 128
        %1284 = vxpose.xlu0.b32.cont [13/16] 0.0, 128
        %1285 = vxpose.xlu0.b32.cont [14/16] 0.0, 128
        %1286 = vxpose.xlu0.b32.cont [15/16] 0.0, 128
        %1287 = vxpose.xlu0.b32.end [16/16] 0.0, 128
        %v1288 = vpop.trf.xlu0
        %v1289 = vpop.trf.xlu0
        %v1290 = vpop.trf.xlu0
        %v1291 = vpop.trf.xlu0
        %v1292 = vpop.trf.xlu0
        %v1293 = vpop.trf.xlu0
        %v1294 = vpop.trf.xlu0
        %v1295 = vpop.trf.xlu0
        %v1296 = vpop.trf.xlu0
        %v1297 = vpop.trf.xlu0
        %v1298 = vpop.trf.xlu0
        %v1299 = vpop.trf.xlu0
        %v1300 = vpop.trf.xlu0
        %v1301 = vpop.trf.xlu0
        %v1302 = vpop.trf.xlu0
        %v1303 = vpop.trf.xlu0
        %1304 = vxpose.xlu0.b32.start [1/16] %v792, 128
        %1305 = vxpose.xlu0.b32.cont [2/16] 0.0, 128
        %1306 = vxpose.xlu0.b32.cont [3/16] 0.0, 128
        %1307 = vxpose.xlu0.b32.cont [4/16] 0.0, 128
        %1308 = vxpose.xlu0.b32.cont [5/16] 0.0, 128
        %1309 = vxpose.xlu0.b32.cont [6/16] 0.0, 128
        %1310 = vxpose.xlu0.b32.cont [7/16] 0.0, 128
        %1311 = vxpose.xlu0.b32.cont [8/16] 0.0, 128
        %1312 = vxpose.xlu0.b32.cont [9/16] 0.0, 128
        %1313 = vxpose.xlu0.b32.cont [10/16] 0.0, 128
        %1314 = vxpose.xlu0.b32.cont [11/16] 0.0, 128
        %1315 = vxpose.xlu0.b32.cont [12/16] 0.0, 128
        %1316 = vxpose.xlu0.b32.cont [13/16] 0.0, 128
        %1317 = vxpose.xlu0.b32.cont [14/16] 0.0, 128
        %1318 = vxpose.xlu0.b32.cont [15/16] 0.0, 128
        %1319 = vxpose.xlu0.b32.end [16/16] 0.0, 128
        %v1320 = vpop.trf.xlu0
        %v1321 = vpop.trf.xlu0
        %v1322 = vpop.trf.xlu0
        %v1323 = vpop.trf.xlu0
        %v1324 = vpop.trf.xlu0
        %v1325 = vpop.trf.xlu0
        %v1326 = vpop.trf.xlu0
        %v1327 = vpop.trf.xlu0
        %v1328 = vpop.trf.xlu0
        %v1329 = vpop.trf.xlu0
        %v1330 = vpop.trf.xlu0
        %v1331 = vpop.trf.xlu0
        %v1332 = vpop.trf.xlu0
        %v1333 = vpop.trf.xlu0
        %v1334 = vpop.trf.xlu0
        %v1335 = vpop.trf.xlu0
        %1336 = vxpose.xlu0.b32.start [1/16] %v795, 128
        %1337 = vxpose.xlu0.b32.cont [2/16] 0.0, 128
        %1338 = vxpose.xlu0.b32.cont [3/16] 0.0, 128
        %1339 = vxpose.xlu0.b32.cont [4/16] 0.0, 128
        %1340 = vxpose.xlu0.b32.cont [5/16] 0.0, 128
        %1341 = vxpose.xlu0.b32.cont [6/16] 0.0, 128
        %1342 = vxpose.xlu0.b32.cont [7/16] 0.0, 128
        %1343 = vxpose.xlu0.b32.cont [8/16] 0.0, 128
        %1344 = vxpose.xlu0.b32.cont [9/16] 0.0, 128
        %1345 = vxpose.xlu0.b32.cont [10/16] 0.0, 128
        %1346 = vxpose.xlu0.b32.cont [11/16] 0.0, 128
        %1347 = vxpose.xlu0.b32.cont [12/16] 0.0, 128
        %1348 = vxpose.xlu0.b32.cont [13/16] 0.0, 128
        %1349 = vxpose.xlu0.b32.cont [14/16] 0.0, 128
        %1350 = vxpose.xlu0.b32.cont [15/16] 0.0, 128
        %1351 = vxpose.xlu0.b32.end [16/16] 0.0, 128
        %v1352 = vpop.trf.xlu0
        %v1353 = vpop.trf.xlu0
        %v1354 = vpop.trf.xlu0
        %v1355 = vpop.trf.xlu0
        %v1356 = vpop.trf.xlu0
        %v1357 = vpop.trf.xlu0
        %v1358 = vpop.trf.xlu0
        %v1359 = vpop.trf.xlu0
        %v1360 = vpop.trf.xlu0
        %v1361 = vpop.trf.xlu0
        %v1362 = vpop.trf.xlu0
        %v1363 = vpop.trf.xlu0
        %v1364 = vpop.trf.xlu0
        %v1365 = vpop.trf.xlu0
        %v1366 = vpop.trf.xlu0
        %v1367 = vpop.trf.xlu0
        %1368 = vxpose.xlu0.b32.start [1/16] %v798, 128
        %1369 = vxpose.xlu0.b32.cont [2/16] 0.0, 128
        %1370 = vxpose.xlu0.b32.cont [3/16] 0.0, 128
        %1371 = vxpose.xlu0.b32.cont [4/16] 0.0, 128
        %1372 = vxpose.xlu0.b32.cont [5/16] 0.0, 128
        %1373 = vxpose.xlu0.b32.cont [6/16] 0.0, 128
        %1374 = vxpose.xlu0.b32.cont [7/16] 0.0, 128
        %1375 = vxpose.xlu0.b32.cont [8/16] 0.0, 128
        %1376 = vxpose.xlu0.b32.cont [9/16] 0.0, 128
        %1377 = vxpose.xlu0.b32.cont [10/16] 0.0, 128
        %1378 = vxpose.xlu0.b32.cont [11/16] 0.0, 128
        %1379 = vxpose.xlu0.b32.cont [12/16] 0.0, 128
        %1380 = vxpose.xlu0.b32.cont [13/16] 0.0, 128
        %1381 = vxpose.xlu0.b32.cont [14/16] 0.0, 128
        %1382 = vxpose.xlu0.b32.cont [15/16] 0.0, 128
        %1383 = vxpose.xlu0.b32.end [16/16] 0.0, 128
        %v1384 = vpop.trf.xlu0
        %v1385 = vpop.trf.xlu0
        %v1386 = vpop.trf.xlu0
        %v1387 = vpop.trf.xlu0
        %v1388 = vpop.trf.xlu0
        %v1389 = vpop.trf.xlu0
        %v1390 = vpop.trf.xlu0
        %v1391 = vpop.trf.xlu0
        %v1392 = vpop.trf.xlu0
        %v1393 = vpop.trf.xlu0
        %v1394 = vpop.trf.xlu0
        %v1395 = vpop.trf.xlu0
        %v1396 = vpop.trf.xlu0
        %v1397 = vpop.trf.xlu0
        %v1398 = vpop.trf.xlu0
        %v1399 = vpop.trf.xlu0
        %v1401 = vsel %vm1227, %v1288, 0
        %v1404 = vsel %vm1227, %v1289, 0
        %v1407 = vsel %vm1227, %v1290, 0
        %v1410 = vsel %vm1227, %v1291, 0
        %v1413 = vsel %vm1227, %v1268, 0
        %1415 = vmatprep.subr.mxu0 0.0
        %1416 = vmatpush1.xpose.msra.mxu0 0.0
        %1417 = vmatprep.subr.mxu0 0.0
        %1418 = vmatpush1.xpose.msra.mxu0 0.0
        %1419 = vmatprep.subr.mxu0 0.0
        %1420 = vmatpush1.xpose.msra.mxu0 0.0
        %1421 = vmatprep.subr.mxu0 0.0
        %1422 = vmatpush1.xpose.msra.mxu0 0.0
        %1423 = vmatprep.subr.mxu0 0.0
        %1424 = vmatpush1.xpose.msra.mxu0 0.0
        %1425 = vmatprep.subr.mxu0 0.0
        %1426 = vmatpush1.xpose.msra.mxu0 0.0
        %1427 = vmatprep.subr.mxu0 0.0
        %1428 = vmatpush1.xpose.msra.mxu0 0.0
        %1429 = vmatprep.subr.mxu0 0.0
        %1430 = vmatpush1.xpose.msra.mxu0 0.0
        %1431 = vmatprep.subr.mxu0 0.0
        %1432 = vmatpush1.xpose.msra.mxu0 0.0
        %1433 = vmatprep.subr.mxu0 0.0
        %1434 = vmatpush1.xpose.msra.mxu0 0.0
        %1435 = vmatprep.subr.mxu0 0.0
        %1436 = vmatpush1.xpose.msra.mxu0 0.0
        %1437 = vmatprep.subr.mxu0 0.0
        %1438 = vmatpush1.xpose.msra.mxu0 0.0
        %1439 = vmatprep.subr.mxu0 0.0
        %1440 = vmatpush1.xpose.msra.mxu0 0.0
        %1441 = vmatprep.subr.mxu0 0.0
        %1442 = vmatpush1.xpose.msra.mxu0 0.0
        %1443 = vmatprep.subr.mxu0 0.0
        %1444 = vmatpush1.xpose.msra.mxu0 0.0
        %1445 = vmatprep.subr.mxu0 0.0
        %1446 = vmatpush1.xpose.msra.mxu0 %v1413
        %1447 = vmatprep.subr.mxu0 0.0
        %1448 = vmatpush2.xpose.msra.mxu0 0.0
        %1449 = vmatprep.subr.mxu0 0.0
        %1450 = vmatpush2.xpose.msra.mxu0 0.0
        %1451 = vmatprep.subr.mxu0 0.0
        %1452 = vmatpush2.xpose.msra.mxu0 0.0
        %1453 = vmatprep.subr.mxu0 0.0
        %1454 = vmatpush2.xpose.msra.mxu0 0.0
        %1455 = vmatprep.subr.mxu0 0.0
        %1456 = vmatpush2.xpose.msra.mxu0 0.0
        %1457 = vmatprep.subr.mxu0 0.0
        %1458 = vmatpush2.xpose.msra.mxu0 0.0
        %1459 = vmatprep.subr.mxu0 0.0
        %1460 = vmatpush2.xpose.msra.mxu0 0.0
        %1461 = vmatprep.subr.mxu0 0.0
        %1462 = vmatpush2.xpose.msra.mxu0 0.0
        %1463 = vmatprep.subr.mxu0 0.0
        %1464 = vmatpush2.xpose.msra.mxu0 0.0
        %1465 = vmatprep.subr.mxu0 0.0
        %1466 = vmatpush2.xpose.msra.mxu0 0.0
        %1467 = vmatprep.subr.mxu0 0.0
        %1468 = vmatpush2.xpose.msra.mxu0 0.0
        %1469 = vmatprep.subr.mxu0 0.0
        %1470 = vmatpush2.xpose.msra.mxu0 0.0
        %1471 = vmatprep.subr.mxu0 0.0
        %1472 = vmatpush2.xpose.msra.mxu0 0.0
        %1473 = vmatprep.subr.mxu0 0.0
        %1474 = vmatpush2.xpose.msra.mxu0 0.0
        %1475 = vmatprep.subr.mxu0 0.0
        %1476 = vmatpush2.xpose.msra.mxu0 0.0
        %1477 = vmatprep.subr.mxu0 0.0
        %1478 = vmatpush2.xpose.msra.mxu0 0.0
        %1479 = vmatprep.mubr.f32.mxu0 0.0
        %1480 = vmatmul.mubr.f32.gmra.mxu0 %v1401
        %v1481 = vpop.f32.mrf.mxu0
        %v1482 = vadd.f32 0.0, %v1481
        %v1483 = vpop.f32.mrf.mxu0
        %1484 = vmatprep.mubr.f32.mxu0 0.0
        %1485 = vmatmul.mubr.f32.gmra.mxu0 %v1404
        %v1486 = vpop.f32.mrf.mxu0
        %v1487 = vadd.f32 0.0, %v1486
        %v1488 = vpop.f32.mrf.mxu0
        %1489 = vmatprep.mubr.f32.mxu0 0.0
        %1490 = vmatmul.mubr.f32.gmra.mxu0 %v1407
        %v1491 = vpop.f32.mrf.mxu0
        %v1492 = vadd.f32 0.0, %v1491
        %v1493 = vpop.f32.mrf.mxu0
        %1494 = vmatprep.mubr.f32.mxu0 0.0
        %1495 = vmatmul.mubr.f32.gmra.mxu0 %v1410
        %v1496 = vpop.f32.mrf.mxu0
        %v1497 = vadd.f32 0.0, %v1496
        %v1498 = vpop.f32.mrf.mxu0
        %1499 = vdwg.mxu0
        %v1501 = vsel %vm1227, %v1320, 0
        %v1504 = vsel %vm1227, %v1321, 0
        %v1507 = vsel %vm1227, %v1322, 0
        %v1510 = vsel %vm1227, %v1323, 0
        %v1513 = vsel %vm1227, %v1269, 0
        %1515 = vmatprep.subr.mxu0 0.0
        %1516 = vmatpush1.xpose.msra.mxu0 0.0
        %1517 = vmatprep.subr.mxu0 0.0
        %1518 = vmatpush1.xpose.msra.mxu0 0.0
        %1519 = vmatprep.subr.mxu0 0.0
        %1520 = vmatpush1.xpose.msra.mxu0 0.0
        %1521 = vmatprep.subr.mxu0 0.0
        %1522 = vmatpush1.xpose.msra.mxu0 0.0
        %1523 = vmatprep.subr.mxu0 0.0
        %1524 = vmatpush1.xpose.msra.mxu0 0.0
        %1525 = vmatprep.subr.mxu0 0.0
        %1526 = vmatpush1.xpose.msra.mxu0 0.0
        %1527 = vmatprep.subr.mxu0 0.0
        %1528 = vmatpush1.xpose.msra.mxu0 0.0
        %1529 = vmatprep.subr.mxu0 0.0
        %1530 = vmatpush1.xpose.msra.mxu0 0.0
        %1531 = vmatprep.subr.mxu0 0.0
        %1532 = vmatpush1.xpose.msra.mxu0 0.0
        %1533 = vmatprep.subr.mxu0 0.0
        %1534 = vmatpush1.xpose.msra.mxu0 0.0
        %1535 = vmatprep.subr.mxu0 0.0
        %1536 = vmatpush1.xpose.msra.mxu0 0.0
        %1537 = vmatprep.subr.mxu0 0.0
        %1538 = vmatpush1.xpose.msra.mxu0 0.0
        %1539 = vmatprep.subr.mxu0 0.0
        %1540 = vmatpush1.xpose.msra.mxu0 0.0
        %1541 = vmatprep.subr.mxu0 0.0
        %1542 = vmatpush1.xpose.msra.mxu0 0.0
        %1543 = vmatprep.subr.mxu0 0.0
        %1544 = vmatpush1.xpose.msra.mxu0 0.0
        %1545 = vmatprep.subr.mxu0 0.0
        %1546 = vmatpush1.xpose.msra.mxu0 %v1513
        %1547 = vmatprep.subr.mxu0 0.0
        %1548 = vmatpush2.xpose.msra.mxu0 0.0
        %1549 = vmatprep.subr.mxu0 0.0
        %1550 = vmatpush2.xpose.msra.mxu0 0.0
        %1551 = vmatprep.subr.mxu0 0.0
        %1552 = vmatpush2.xpose.msra.mxu0 0.0
        %1553 = vmatprep.subr.mxu0 0.0
        %1554 = vmatpush2.xpose.msra.mxu0 0.0
        %1555 = vmatprep.subr.mxu0 0.0
        %1556 = vmatpush2.xpose.msra.mxu0 0.0
        %1557 = vmatprep.subr.mxu0 0.0
        %1558 = vmatpush2.xpose.msra.mxu0 0.0
        %1559 = vmatprep.subr.mxu0 0.0
        %1560 = vmatpush2.xpose.msra.mxu0 0.0
        %1561 = vmatprep.subr.mxu0 0.0
        %1562 = vmatpush2.xpose.msra.mxu0 0.0
        %1563 = vmatprep.subr.mxu0 0.0
        %1564 = vmatpush2.xpose.msra.mxu0 0.0
        %1565 = vmatprep.subr.mxu0 0.0
        %1566 = vmatpush2.xpose.msra.mxu0 0.0
        %1567 = vmatprep.subr.mxu0 0.0
        %1568 = vmatpush2.xpose.msra.mxu0 0.0
        %1569 = vmatprep.subr.mxu0 0.0
        %1570 = vmatpush2.xpose.msra.mxu0 0.0
        %1571 = vmatprep.subr.mxu0 0.0
        %1572 = vmatpush2.xpose.msra.mxu0 0.0
        %1573 = vmatprep.subr.mxu0 0.0
        %1574 = vmatpush2.xpose.msra.mxu0 0.0
        %1575 = vmatprep.subr.mxu0 0.0
        %1576 = vmatpush2.xpose.msra.mxu0 0.0
        %1577 = vmatprep.subr.mxu0 0.0
        %1578 = vmatpush2.xpose.msra.mxu0 0.0
        %1579 = vmatprep.mubr.f32.mxu0 0.0
        %1580 = vmatmul.mubr.f32.gmra.mxu0 %v1501
        %v1581 = vpop.f32.mrf.mxu0
        %v1582 = vadd.f32 0.0, %v1581
        %v1583 = vpop.f32.mrf.mxu0
        %1584 = vmatprep.mubr.f32.mxu0 0.0
        %1585 = vmatmul.mubr.f32.gmra.mxu0 %v1504
        %v1586 = vpop.f32.mrf.mxu0
        %v1587 = vadd.f32 0.0, %v1586
        %v1588 = vpop.f32.mrf.mxu0
        %1589 = vmatprep.mubr.f32.mxu0 0.0
        %1590 = vmatmul.mubr.f32.gmra.mxu0 %v1507
        %v1591 = vpop.f32.mrf.mxu0
        %v1592 = vadd.f32 0.0, %v1591
        %v1593 = vpop.f32.mrf.mxu0
        %1594 = vmatprep.mubr.f32.mxu0 0.0
        %1595 = vmatmul.mubr.f32.gmra.mxu0 %v1510
        %v1596 = vpop.f32.mrf.mxu0
        %v1597 = vadd.f32 0.0, %v1596
        %v1598 = vpop.f32.mrf.mxu0
        %1599 = vdwg.mxu0
        %v1601 = vsel %vm1227, %v1352, 0
        %v1604 = vsel %vm1227, %v1353, 0
        %v1607 = vsel %vm1227, %v1354, 0
        %v1610 = vsel %vm1227, %v1355, 0
        %v1613 = vsel %vm1227, %v1270, 0
        %1615 = vmatprep.subr.mxu0 0.0
        %1616 = vmatpush1.xpose.msra.mxu0 0.0
        %1617 = vmatprep.subr.mxu0 0.0
        %1618 = vmatpush1.xpose.msra.mxu0 0.0
        %1619 = vmatprep.subr.mxu0 0.0
        %1620 = vmatpush1.xpose.msra.mxu0 0.0
        %1621 = vmatprep.subr.mxu0 0.0
        %1622 = vmatpush1.xpose.msra.mxu0 0.0
        %1623 = vmatprep.subr.mxu0 0.0
        %1624 = vmatpush1.xpose.msra.mxu0 0.0
        %1625 = vmatprep.subr.mxu0 0.0
        %1626 = vmatpush1.xpose.msra.mxu0 0.0
        %1627 = vmatprep.subr.mxu0 0.0
        %1628 = vmatpush1.xpose.msra.mxu0 0.0
        %1629 = vmatprep.subr.mxu0 0.0
        %1630 = vmatpush1.xpose.msra.mxu0 0.0
        %1631 = vmatprep.subr.mxu0 0.0
        %1632 = vmatpush1.xpose.msra.mxu0 0.0
        %1633 = vmatprep.subr.mxu0 0.0
        %1634 = vmatpush1.xpose.msra.mxu0 0.0
        %1635 = vmatprep.subr.mxu0 0.0
        %1636 = vmatpush1.xpose.msra.mxu0 0.0
        %1637 = vmatprep.subr.mxu0 0.0
        %1638 = vmatpush1.xpose.msra.mxu0 0.0
        %1639 = vmatprep.subr.mxu0 0.0
        %1640 = vmatpush1.xpose.msra.mxu0 0.0
        %1641 = vmatprep.subr.mxu0 0.0
        %1642 = vmatpush1.xpose.msra.mxu0 0.0
        %1643 = vmatprep.subr.mxu0 0.0
        %1644 = vmatpush1.xpose.msra.mxu0 0.0
        %1645 = vmatprep.subr.mxu0 0.0
        %1646 = vmatpush1.xpose.msra.mxu0 %v1613
        %1647 = vmatprep.subr.mxu0 0.0
        %1648 = vmatpush2.xpose.msra.mxu0 0.0
        %1649 = vmatprep.subr.mxu0 0.0
        %1650 = vmatpush2.xpose.msra.mxu0 0.0
        %1651 = vmatprep.subr.mxu0 0.0
        %1652 = vmatpush2.xpose.msra.mxu0 0.0
        %1653 = vmatprep.subr.mxu0 0.0
        %1654 = vmatpush2.xpose.msra.mxu0 0.0
        %1655 = vmatprep.subr.mxu0 0.0
        %1656 = vmatpush2.xpose.msra.mxu0 0.0
        %1657 = vmatprep.subr.mxu0 0.0
        %1658 = vmatpush2.xpose.msra.mxu0 0.0
        %1659 = vmatprep.subr.mxu0 0.0
        %1660 = vmatpush2.xpose.msra.mxu0 0.0
        %1661 = vmatprep.subr.mxu0 0.0
        %1662 = vmatpush2.xpose.msra.mxu0 0.0
        %1663 = vmatprep.subr.mxu0 0.0
        %1664 = vmatpush2.xpose.msra.mxu0 0.0
        %1665 = vmatprep.subr.mxu0 0.0
        %1666 = vmatpush2.xpose.msra.mxu0 0.0
        %1667 = vmatprep.subr.mxu0 0.0
        %1668 = vmatpush2.xpose.msra.mxu0 0.0
        %1669 = vmatprep.subr.mxu0 0.0
        %1670 = vmatpush2.xpose.msra.mxu0 0.0
        %1671 = vmatprep.subr.mxu0 0.0
        %1672 = vmatpush2.xpose.msra.mxu0 0.0
        %1673 = vmatprep.subr.mxu0 0.0
        %1674 = vmatpush2.xpose.msra.mxu0 0.0
        %1675 = vmatprep.subr.mxu0 0.0
        %1676 = vmatpush2.xpose.msra.mxu0 0.0
        %1677 = vmatprep.subr.mxu0 0.0
        %1678 = vmatpush2.xpose.msra.mxu0 0.0
        %1679 = vmatprep.mubr.f32.mxu0 0.0
        %1680 = vmatmul.mubr.f32.gmra.mxu0 %v1601
        %v1681 = vpop.f32.mrf.mxu0
        %v1682 = vadd.f32 0.0, %v1681
        %v1683 = vpop.f32.mrf.mxu0
        %1684 = vmatprep.mubr.f32.mxu0 0.0
        %1685 = vmatmul.mubr.f32.gmra.mxu0 %v1604
        %v1686 = vpop.f32.mrf.mxu0
        %v1687 = vadd.f32 0.0, %v1686
        %v1688 = vpop.f32.mrf.mxu0
        %1689 = vmatprep.mubr.f32.mxu0 0.0
        %1690 = vmatmul.mubr.f32.gmra.mxu0 %v1607
        %v1691 = vpop.f32.mrf.mxu0
        %v1692 = vadd.f32 0.0, %v1691
        %v1693 = vpop.f32.mrf.mxu0
        %1694 = vmatprep.mubr.f32.mxu0 0.0
        %1695 = vmatmul.mubr.f32.gmra.mxu0 %v1610
        %v1696 = vpop.f32.mrf.mxu0
        %v1697 = vadd.f32 0.0, %v1696
        %v1698 = vpop.f32.mrf.mxu0
        %1699 = vdwg.mxu0
        %v1701 = vsel %vm1227, %v1384, 0
        %v1704 = vsel %vm1227, %v1385, 0
        %v1707 = vsel %vm1227, %v1386, 0
        %v1710 = vsel %vm1227, %v1387, 0
        %v1713 = vsel %vm1227, %v1271, 0
        %1715 = vmatprep.subr.mxu0 0.0
        %1716 = vmatpush1.xpose.msra.mxu0 0.0
        %1717 = vmatprep.subr.mxu0 0.0
        %1718 = vmatpush1.xpose.msra.mxu0 0.0
        %1719 = vmatprep.subr.mxu0 0.0
        %1720 = vmatpush1.xpose.msra.mxu0 0.0
        %1721 = vmatprep.subr.mxu0 0.0
        %1722 = vmatpush1.xpose.msra.mxu0 0.0
        %1723 = vmatprep.subr.mxu0 0.0
        %1724 = vmatpush1.xpose.msra.mxu0 0.0
        %1725 = vmatprep.subr.mxu0 0.0
        %1726 = vmatpush1.xpose.msra.mxu0 0.0
        %1727 = vmatprep.subr.mxu0 0.0
        %1728 = vmatpush1.xpose.msra.mxu0 0.0
        %1729 = vmatprep.subr.mxu0 0.0
        %1730 = vmatpush1.xpose.msra.mxu0 0.0
        %1731 = vmatprep.subr.mxu0 0.0
        %1732 = vmatpush1.xpose.msra.mxu0 0.0
        %1733 = vmatprep.subr.mxu0 0.0
        %1734 = vmatpush1.xpose.msra.mxu0 0.0
        %1735 = vmatprep.subr.mxu0 0.0
        %1736 = vmatpush1.xpose.msra.mxu0 0.0
        %1737 = vmatprep.subr.mxu0 0.0
        %1738 = vmatpush1.xpose.msra.mxu0 0.0
        %1739 = vmatprep.subr.mxu0 0.0
        %1740 = vmatpush1.xpose.msra.mxu0 0.0
        %1741 = vmatprep.subr.mxu0 0.0
        %1742 = vmatpush1.xpose.msra.mxu0 0.0
        %1743 = vmatprep.subr.mxu0 0.0
        %1744 = vmatpush1.xpose.msra.mxu0 0.0
        %1745 = vmatprep.subr.mxu0 0.0
        %1746 = vmatpush1.xpose.msra.mxu0 %v1713
        %1747 = vmatprep.subr.mxu0 0.0
        %1748 = vmatpush2.xpose.msra.mxu0 0.0
        %1749 = vmatprep.subr.mxu0 0.0
        %1750 = vmatpush2.xpose.msra.mxu0 0.0
        %1751 = vmatprep.subr.mxu0 0.0
        %1752 = vmatpush2.xpose.msra.mxu0 0.0
        %1753 = vmatprep.subr.mxu0 0.0
        %1754 = vmatpush2.xpose.msra.mxu0 0.0
        %1755 = vmatprep.subr.mxu0 0.0
        %1756 = vmatpush2.xpose.msra.mxu0 0.0
        %1757 = vmatprep.subr.mxu0 0.0
        %1758 = vmatpush2.xpose.msra.mxu0 0.0
        %1759 = vmatprep.subr.mxu0 0.0
        %1760 = vmatpush2.xpose.msra.mxu0 0.0
        %1761 = vmatprep.subr.mxu0 0.0
        %1762 = vmatpush2.xpose.msra.mxu0 0.0
        %1763 = vmatprep.subr.mxu0 0.0
        %1764 = vmatpush2.xpose.msra.mxu0 0.0
        %1765 = vmatprep.subr.mxu0 0.0
        %1766 = vmatpush2.xpose.msra.mxu0 0.0
        %1767 = vmatprep.subr.mxu0 0.0
        %1768 = vmatpush2.xpose.msra.mxu0 0.0
        %1769 = vmatprep.subr.mxu0 0.0
        %1770 = vmatpush2.xpose.msra.mxu0 0.0
        %1771 = vmatprep.subr.mxu0 0.0
        %1772 = vmatpush2.xpose.msra.mxu0 0.0
        %1773 = vmatprep.subr.mxu0 0.0
        %1774 = vmatpush2.xpose.msra.mxu0 0.0
        %1775 = vmatprep.subr.mxu0 0.0
        %1776 = vmatpush2.xpose.msra.mxu0 0.0
        %1777 = vmatprep.subr.mxu0 0.0
        %1778 = vmatpush2.xpose.msra.mxu0 0.0
        %1779 = vmatprep.mubr.f32.mxu0 0.0
        %1780 = vmatmul.mubr.f32.gmra.mxu0 %v1701
        %v1781 = vpop.f32.mrf.mxu0
        %v1782 = vadd.f32 0.0, %v1781
        %v1783 = vpop.f32.mrf.mxu0
        %1784 = vmatprep.mubr.f32.mxu0 0.0
        %1785 = vmatmul.mubr.f32.gmra.mxu0 %v1704
        %v1786 = vpop.f32.mrf.mxu0
        %v1787 = vadd.f32 0.0, %v1786
        %v1788 = vpop.f32.mrf.mxu0
        %1789 = vmatprep.mubr.f32.mxu0 0.0
        %1790 = vmatmul.mubr.f32.gmra.mxu0 %v1707
        %v1791 = vpop.f32.mrf.mxu0
        %v1792 = vadd.f32 0.0, %v1791
        %v1793 = vpop.f32.mrf.mxu0
        %1794 = vmatprep.mubr.f32.mxu0 0.0
        %1795 = vmatmul.mubr.f32.gmra.mxu0 %v1710
        %v1796 = vpop.f32.mrf.mxu0
        %v1797 = vadd.f32 0.0, %v1796
        %v1798 = vpop.f32.mrf.mxu0
        %1799 = vdwg.mxu0
        %1800 = vxpose.xlu0.b32.start [1/16] %v1482, 128
        %1801 = vxpose.xlu0.b32.cont [2/16] %v1487, 128
        %1802 = vxpose.xlu0.b32.cont [3/16] %v1492, 128
        %1803 = vxpose.xlu0.b32.cont [4/16] %v1497, 128
        %1804 = vxpose.xlu0.b32.cont [5/16] 0.0, 128
        %1805 = vxpose.xlu0.b32.cont [6/16] 0.0, 128
        %1806 = vxpose.xlu0.b32.cont [7/16] 0.0, 128
        %1807 = vxpose.xlu0.b32.cont [8/16] 0.0, 128
        %1808 = vxpose.xlu0.b32.cont [9/16] 0.0, 128
        %1809 = vxpose.xlu0.b32.cont [10/16] 0.0, 128
        %1810 = vxpose.xlu0.b32.cont [11/16] 0.0, 128
        %1811 = vxpose.xlu0.b32.cont [12/16] 0.0, 128
        %1812 = vxpose.xlu0.b32.cont [13/16] 0.0, 128
        %1813 = vxpose.xlu0.b32.cont [14/16] 0.0, 128
        %1814 = vxpose.xlu0.b32.cont [15/16] 0.0, 128
        %1815 = vxpose.xlu0.b32.end [16/16] 0.0, 128
        %v1816 = vpop.trf.xlu0
        %v1817 = vpop.trf.xlu0
        %v1818 = vpop.trf.xlu0
        %v1819 = vpop.trf.xlu0
        %v1820 = vpop.trf.xlu0
        %v1821 = vpop.trf.xlu0
        %v1822 = vpop.trf.xlu0
        %v1823 = vpop.trf.xlu0
        %v1824 = vpop.trf.xlu0
        %v1825 = vpop.trf.xlu0
        %v1826 = vpop.trf.xlu0
        %v1827 = vpop.trf.xlu0
        %v1828 = vpop.trf.xlu0
        %v1829 = vpop.trf.xlu0
        %v1830 = vpop.trf.xlu0
        %v1831 = vpop.trf.xlu0
        %1832 = vxpose.xlu0.b32.start [1/16] %v1582, 128
        %1833 = vxpose.xlu0.b32.cont [2/16] %v1587, 128
        %1834 = vxpose.xlu0.b32.cont [3/16] %v1592, 128
        %1835 = vxpose.xlu0.b32.cont [4/16] %v1597, 128
        %1836 = vxpose.xlu0.b32.cont [5/16] 0.0, 128
        %1837 = vxpose.xlu0.b32.cont [6/16] 0.0, 128
        %1838 = vxpose.xlu0.b32.cont [7/16] 0.0, 128
        %1839 = vxpose.xlu0.b32.cont [8/16] 0.0, 128
        %1840 = vxpose.xlu0.b32.cont [9/16] 0.0, 128
        %1841 = vxpose.xlu0.b32.cont [10/16] 0.0, 128
        %1842 = vxpose.xlu0.b32.cont [11/16] 0.0, 128
        %1843 = vxpose.xlu0.b32.cont [12/16] 0.0, 128
        %1844 = vxpose.xlu0.b32.cont [13/16] 0.0, 128
        %1845 = vxpose.xlu0.b32.cont [14/16] 0.0, 128
        %1846 = vxpose.xlu0.b32.cont [15/16] 0.0, 128
        %1847 = vxpose.xlu0.b32.end [16/16] 0.0, 128
        %v1848 = vpop.trf.xlu0
        %v1849 = vpop.trf.xlu0
        %v1850 = vpop.trf.xlu0
        %v1851 = vpop.trf.xlu0
        %v1852 = vpop.trf.xlu0
        %v1853 = vpop.trf.xlu0
        %v1854 = vpop.trf.xlu0
        %v1855 = vpop.trf.xlu0
        %v1856 = vpop.trf.xlu0
        %v1857 = vpop.trf.xlu0
        %v1858 = vpop.trf.xlu0
        %v1859 = vpop.trf.xlu0
        %v1860 = vpop.trf.xlu0
        %v1861 = vpop.trf.xlu0
        %v1862 = vpop.trf.xlu0
        %v1863 = vpop.trf.xlu0
        %1864 = vxpose.xlu0.b32.start [1/16] %v1682, 128
        %1865 = vxpose.xlu0.b32.cont [2/16] %v1687, 128
        %1866 = vxpose.xlu0.b32.cont [3/16] %v1692, 128
        %1867 = vxpose.xlu0.b32.cont [4/16] %v1697, 128
        %1868 = vxpose.xlu0.b32.cont [5/16] 0.0, 128
        %1869 = vxpose.xlu0.b32.cont [6/16] 0.0, 128
        %1870 = vxpose.xlu0.b32.cont [7/16] 0.0, 128
        %1871 = vxpose.xlu0.b32.cont [8/16] 0.0, 128
        %1872 = vxpose.xlu0.b32.cont [9/16] 0.0, 128
        %1873 = vxpose.xlu0.b32.cont [10/16] 0.0, 128
        %1874 = vxpose.xlu0.b32.cont [11/16] 0.0, 128
        %1875 = vxpose.xlu0.b32.cont [12/16] 0.0, 128
        %1876 = vxpose.xlu0.b32.cont [13/16] 0.0, 128
        %1877 = vxpose.xlu0.b32.cont [14/16] 0.0, 128
        %1878 = vxpose.xlu0.b32.cont [15/16] 0.0, 128
        %1879 = vxpose.xlu0.b32.end [16/16] 0.0, 128
        %v1880 = vpop.trf.xlu0
        %v1881 = vpop.trf.xlu0
        %v1882 = vpop.trf.xlu0
        %v1883 = vpop.trf.xlu0
        %v1884 = vpop.trf.xlu0
        %v1885 = vpop.trf.xlu0
        %v1886 = vpop.trf.xlu0
        %v1887 = vpop.trf.xlu0
        %v1888 = vpop.trf.xlu0
        %v1889 = vpop.trf.xlu0
        %v1890 = vpop.trf.xlu0
        %v1891 = vpop.trf.xlu0
        %v1892 = vpop.trf.xlu0
        %v1893 = vpop.trf.xlu0
        %v1894 = vpop.trf.xlu0
        %v1895 = vpop.trf.xlu0
        %1896 = vxpose.xlu0.b32.start [1/16] %v1782, 128
        %1897 = vxpose.xlu0.b32.cont [2/16] %v1787, 128
        %1898 = vxpose.xlu0.b32.cont [3/16] %v1792, 128
        %1899 = vxpose.xlu0.b32.cont [4/16] %v1797, 128
        %1900 = vxpose.xlu0.b32.cont [5/16] 0.0, 128
        %1901 = vxpose.xlu0.b32.cont [6/16] 0.0, 128
        %1902 = vxpose.xlu0.b32.cont [7/16] 0.0, 128
        %1903 = vxpose.xlu0.b32.cont [8/16] 0.0, 128
        %1904 = vxpose.xlu0.b32.cont [9/16] 0.0, 128
        %1905 = vxpose.xlu0.b32.cont [10/16] 0.0, 128
        %1906 = vxpose.xlu0.b32.cont [11/16] 0.0, 128
        %1907 = vxpose.xlu0.b32.cont [12/16] 0.0, 128
        %1908 = vxpose.xlu0.b32.cont [13/16] 0.0, 128
        %1909 = vxpose.xlu0.b32.cont [14/16] 0.0, 128
        %1910 = vxpose.xlu0.b32.cont [15/16] 0.0, 128
        %1911 = vxpose.xlu0.b32.end [16/16] 0.0, 128
        %v1912 = vpop.trf.xlu0
        %v1913 = vpop.trf.xlu0
        %v1914 = vpop.trf.xlu0
        %v1915 = vpop.trf.xlu0
        %v1916 = vpop.trf.xlu0
        %v1917 = vpop.trf.xlu0
        %v1918 = vpop.trf.xlu0
        %v1919 = vpop.trf.xlu0
        %v1920 = vpop.trf.xlu0
        %v1921 = vpop.trf.xlu0
        %v1922 = vpop.trf.xlu0
        %v1923 = vpop.trf.xlu0
        %v1924 = vpop.trf.xlu0
        %v1925 = vpop.trf.xlu0
        %v1926 = vpop.trf.xlu0
        %v1927 = vpop.trf.xlu0
        %v1928 = vcombine.low %v1816, %v1880
        %v1929 = vcombine.high %v1816, %v1880
        %v1931 = vunpack.c.l.s4 1983009808
        %v1932 = vunpack.c.0.s8 %v1931
        %v1933 = vlaneseq
        %v1934 = vshrl.u32 %v1933, 7
        %v1935 = vsub.s32 %v1932, %v1934
        %v1936 = vrot.slane %v1928, %v1935
        %v1938 = vunpack.c.l.s4 1983009808
        %v1939 = vunpack.c.0.s8 %v1938
        %v1940 = vlaneseq
        %v1941 = vshrl.u32 %v1940, 7
        %v1942 = vsub.s32 %v1939, %v1941
        %v1943 = vrot.slane %v1929, %v1942
        %v1944 = vcombine.low %v1848, %v1912
        %v1945 = vcombine.high %v1848, %v1912
        %v1947 = vunpack.c.l.s4 1983009808
        %v1948 = vunpack.c.0.s8 %v1947
        %v1949 = vlaneseq
        %v1950 = vshrl.u32 %v1949, 7
        %v1951 = vsub.s32 %v1948, %v1950
        %v1952 = vrot.slane %v1944, %v1951
        %v1954 = vunpack.c.l.s4 1983009808
        %v1955 = vunpack.c.0.s8 %v1954
        %v1956 = vlaneseq
        %v1957 = vshrl.u32 %v1956, 7
        %v1958 = vsub.s32 %v1955, %v1957
        %v1959 = vrot.slane %v1945, %v1958
        %v1960 = vcombine.low %v1936, %v1952
        %v1961 = vcombine.high %v1936, %v1952
        %v1963 = vunpack.c.l.s4 1934713408
        %v1964 = vunpack.c.0.s8 %v1963
        %v1965 = vlaneseq
        %v1966 = vshrl.u32 %v1965, 7
        %v1967 = vsub.s32 %v1964, %v1966
        %v1968 = vrot.slane %v1960, %v1967
        %v1970 = vunpack.c.l.s4 1934713408
        %v1971 = vunpack.c.0.s8 %v1970
        %v1972 = vlaneseq
        %v1973 = vshrl.u32 %v1972, 7
        %v1974 = vsub.s32 %v1971, %v1973
        %v1975 = vrot.slane %v1961, %v1974
        %v1976 = vcombine.low %v1943, %v1959
        %v1977 = vcombine.high %v1943, %v1959
        %v1979 = vunpack.c.l.s4 1934713408
        %v1980 = vunpack.c.0.s8 %v1979
        %v1981 = vlaneseq
        %v1982 = vshrl.u32 %v1981, 7
        %v1983 = vsub.s32 %v1980, %v1982
        %v1984 = vrot.slane %v1976, %v1983
        %v1986 = vunpack.c.l.s4 1934713408
        %v1987 = vunpack.c.0.s8 %v1986
        %v1988 = vlaneseq
        %v1989 = vshrl.u32 %v1988, 7
        %v1990 = vsub.s32 %v1987, %v1989
        %v1991 = vrot.slane %v1977, %v1990
        %v1992 = vcombine.high %v1968, 0.0
        %v1993 = vcombine.high %v1975, 0.0
        %v1994 = vcombine.high %v1984, 0.0
        %v1995 = vcombine.high %v1991, 0.0
        %v1996 = vcombine.low %v1968, %v1975
        %v1998 = vunpack.c.l.s4 1983009808
        %v1999 = vunpack.c.0.s8 %v1998
        %v2000 = vlaneseq
        %v2001 = vshrl.u32 %v2000, 7
        %v2002 = vsub.s32 %v1999, %v2001
        %v2003 = vrot.slane %v1996, %v2002
        %v2004 = vcombine.low %v1992, %v1993
        %v2006 = vunpack.c.l.s4 1983009808
        %v2007 = vunpack.c.0.s8 %v2006
        %v2008 = vlaneseq
        %v2009 = vshrl.u32 %v2008, 7
        %v2010 = vsub.s32 %v2007, %v2009
        %v2011 = vrot.slane %v2004, %v2010
        %v2012 = vcombine.low %v1984, %v1991
        %v2014 = vunpack.c.l.s4 1983009808
        %v2015 = vunpack.c.0.s8 %v2014
        %v2016 = vlaneseq
        %v2017 = vshrl.u32 %v2016, 7
        %v2018 = vsub.s32 %v2015, %v2017
        %v2019 = vrot.slane %v2012, %v2018
        %v2020 = vcombine.low %v1994, %v1995
        %v2022 = vunpack.c.l.s4 1983009808
        %v2023 = vunpack.c.0.s8 %v2022
        %v2024 = vlaneseq
        %v2025 = vshrl.u32 %v2024, 7
        %v2026 = vsub.s32 %v2023, %v2025
        %v2027 = vrot.slane %v2020, %v2026
        %v2028 = vcombine.low %v2003, %v2011
        %v2029 = vcombine.high %v2003, %v2011
        %v2031 = vunpack.c.l.s4 1934713408
        %v2032 = vunpack.c.0.s8 %v2031
        %v2033 = vlaneseq
        %v2034 = vshrl.u32 %v2033, 7
        %v2035 = vsub.s32 %v2032, %v2034
        %v2036 = vrot.slane %v2028, %v2035
        %v2038 = vunpack.c.l.s4 1934713408
        %v2039 = vunpack.c.0.s8 %v2038
        %v2040 = vlaneseq
        %v2041 = vshrl.u32 %v2040, 7
        %v2042 = vsub.s32 %v2039, %v2041
        %v2043 = vrot.slane %v2029, %v2042
        %v2044 = vcombine.low %v2019, %v2027
        %v2045 = vcombine.high %v2019, %v2027
        %v2047 = vunpack.c.l.s4 1934713408
        %v2048 = vunpack.c.0.s8 %v2047
        %v2049 = vlaneseq
        %v2050 = vshrl.u32 %v2049, 7
        %v2051 = vsub.s32 %v2048, %v2050
        %v2052 = vrot.slane %v2044, %v2051
        %v2054 = vunpack.c.l.s4 1934713408
        %v2055 = vunpack.c.0.s8 %v2054
        %v2056 = vlaneseq
        %v2057 = vshrl.u32 %v2056, 7
        %v2058 = vsub.s32 %v2055, %v2057
        %v2059 = vrot.slane %v2045, %v2058
        %v2060 = vcombine.low %v2036, %v2052
        %v2061 = vcombine.high %v2036, %v2052
        %v2062 = vcombine.low %v2043, %v2059
        %v2063 = vcombine.high %v2043, %v2059
        %2065 = vrot.lane.b32.xlu0 %v2061, 32
        %v2066 = vpop.permute.xlu0 %2065
        %2069 = vrot.lane.b32.xlu0 %v2062, 64
        %v2070 = vpop.permute.xlu0 %2069
        %2073 = vrot.lane.b32.xlu0 %v2063, 96
        %v2074 = vpop.permute.xlu0 %2073
        %v2076 = vsel %vm928, %v2060, %v2066
        %vm2077 = vcmask 523264
        %v2078 = vsel %vm2077, %v2076, %v2070
        %vm2079 = vcmask 785408
        %v2080 = vsel %vm2079, %v2078, %v2074
        %2082 = vrot.lane.b32.xlu0 %v690, 96
        %v2083 = vpop.permute.xlu0 %2082
        %2084 = vrot.lane.b32.xlu0 %v690, 64
        %v2085 = vpop.permute.xlu0 %2084
        %2086 = vrot.lane.b32.xlu0 %v690, 32
        %v2087 = vpop.permute.xlu0 %2086
        %2089 = vrot.lane.b32.xlu0 %v692, 96
        %v2090 = vpop.permute.xlu0 %2089
        %2092 = vrot.lane.b32.xlu0 %v692, 64
        %v2093 = vpop.permute.xlu0 %2092
        %2095 = vrot.lane.b32.xlu0 %v692, 32
        %v2096 = vpop.permute.xlu0 %2095
        %2099 = vrot.lane.b32.xlu0 %v766, 96
        %v2100 = vpop.permute.xlu0 %2099
        %2102 = vrot.lane.b32.xlu0 %v766, 64
        %v2103 = vpop.permute.xlu0 %2102
        %2105 = vrot.lane.b32.xlu0 %v766, 32
        %v2106 = vpop.permute.xlu0 %2105
        %2108 = vxpose.xlu0.b32.start [1/16] %v692, 128
        %2109 = vxpose.xlu0.b32.cont [2/16] 0.0, 128
        %2110 = vxpose.xlu0.b32.cont [3/16] 0.0, 128
        %2111 = vxpose.xlu0.b32.cont [4/16] 0.0, 128
        %2112 = vxpose.xlu0.b32.cont [5/16] 0.0, 128
        %2113 = vxpose.xlu0.b32.cont [6/16] 0.0, 128
        %2114 = vxpose.xlu0.b32.cont [7/16] 0.0, 128
        %2115 = vxpose.xlu0.b32.cont [8/16] 0.0, 128
        %2116 = vxpose.xlu0.b32.cont [9/16] 0.0, 128
        %2117 = vxpose.xlu0.b32.cont [10/16] 0.0, 128
        %2118 = vxpose.xlu0.b32.cont [11/16] 0.0, 128
        %2119 = vxpose.xlu0.b32.cont [12/16] 0.0, 128
        %2120 = vxpose.xlu0.b32.cont [13/16] 0.0, 128
        %2121 = vxpose.xlu0.b32.cont [14/16] 0.0, 128
        %2122 = vxpose.xlu0.b32.cont [15/16] 0.0, 128
        %2123 = vxpose.xlu0.b32.end [16/16] 0.0, 128
        %v2124 = vpop.trf.xlu0
        %v2125 = vpop.trf.xlu0
        %v2126 = vpop.trf.xlu0
        %v2127 = vpop.trf.xlu0
        %v2128 = vpop.trf.xlu0
        %v2129 = vpop.trf.xlu0
        %v2130 = vpop.trf.xlu0
        %v2131 = vpop.trf.xlu0
        %v2132 = vpop.trf.xlu0
        %v2133 = vpop.trf.xlu0
        %v2134 = vpop.trf.xlu0
        %v2135 = vpop.trf.xlu0
        %v2136 = vpop.trf.xlu0
        %v2137 = vpop.trf.xlu0
        %v2138 = vpop.trf.xlu0
        %v2139 = vpop.trf.xlu0
        %2140 = vxpose.xlu0.b32.start [1/16] %v2090, 128
        %2141 = vxpose.xlu0.b32.cont [2/16] 0.0, 128
        %2142 = vxpose.xlu0.b32.cont [3/16] 0.0, 128
        %2143 = vxpose.xlu0.b32.cont [4/16] 0.0, 128
        %2144 = vxpose.xlu0.b32.cont [5/16] 0.0, 128
        %2145 = vxpose.xlu0.b32.cont [6/16] 0.0, 128
        %2146 = vxpose.xlu0.b32.cont [7/16] 0.0, 128
        %2147 = vxpose.xlu0.b32.cont [8/16] 0.0, 128
        %2148 = vxpose.xlu0.b32.cont [9/16] 0.0, 128
        %2149 = vxpose.xlu0.b32.cont [10/16] 0.0, 128
        %2150 = vxpose.xlu0.b32.cont [11/16] 0.0, 128
        %2151 = vxpose.xlu0.b32.cont [12/16] 0.0, 128
        %2152 = vxpose.xlu0.b32.cont [13/16] 0.0, 128
        %2153 = vxpose.xlu0.b32.cont [14/16] 0.0, 128
        %2154 = vxpose.xlu0.b32.cont [15/16] 0.0, 128
        %2155 = vxpose.xlu0.b32.end [16/16] 0.0, 128
        %v2156 = vpop.trf.xlu0
        %v2157 = vpop.trf.xlu0
        %v2158 = vpop.trf.xlu0
        %v2159 = vpop.trf.xlu0
        %v2160 = vpop.trf.xlu0
        %v2161 = vpop.trf.xlu0
        %v2162 = vpop.trf.xlu0
        %v2163 = vpop.trf.xlu0
        %v2164 = vpop.trf.xlu0
        %v2165 = vpop.trf.xlu0
        %v2166 = vpop.trf.xlu0
        %v2167 = vpop.trf.xlu0
        %v2168 = vpop.trf.xlu0
        %v2169 = vpop.trf.xlu0
        %v2170 = vpop.trf.xlu0
        %v2171 = vpop.trf.xlu0
        %2172 = vxpose.xlu0.b32.start [1/16] %v2093, 128
        %2173 = vxpose.xlu0.b32.cont [2/16] 0.0, 128
        %2174 = vxpose.xlu0.b32.cont [3/16] 0.0, 128
        %2175 = vxpose.xlu0.b32.cont [4/16] 0.0, 128
        %2176 = vxpose.xlu0.b32.cont [5/16] 0.0, 128
        %2177 = vxpose.xlu0.b32.cont [6/16] 0.0, 128
        %2178 = vxpose.xlu0.b32.cont [7/16] 0.0, 128
        %2179 = vxpose.xlu0.b32.cont [8/16] 0.0, 128
        %2180 = vxpose.xlu0.b32.cont [9/16] 0.0, 128
        %2181 = vxpose.xlu0.b32.cont [10/16] 0.0, 128
        %2182 = vxpose.xlu0.b32.cont [11/16] 0.0, 128
        %2183 = vxpose.xlu0.b32.cont [12/16] 0.0, 128
        %2184 = vxpose.xlu0.b32.cont [13/16] 0.0, 128
        %2185 = vxpose.xlu0.b32.cont [14/16] 0.0, 128
        %2186 = vxpose.xlu0.b32.cont [15/16] 0.0, 128
        %2187 = vxpose.xlu0.b32.end [16/16] 0.0, 128
        %v2188 = vpop.trf.xlu0
        %v2189 = vpop.trf.xlu0
        %v2190 = vpop.trf.xlu0
        %v2191 = vpop.trf.xlu0
        %v2192 = vpop.trf.xlu0
        %v2193 = vpop.trf.xlu0
        %v2194 = vpop.trf.xlu0
        %v2195 = vpop.trf.xlu0
        %v2196 = vpop.trf.xlu0
        %v2197 = vpop.trf.xlu0
        %v2198 = vpop.trf.xlu0
        %v2199 = vpop.trf.xlu0
        %v2200 = vpop.trf.xlu0
        %v2201 = vpop.trf.xlu0
        %v2202 = vpop.trf.xlu0
        %v2203 = vpop.trf.xlu0
        %2204 = vxpose.xlu0.b32.start [1/16] %v2096, 128
        %2205 = vxpose.xlu0.b32.cont [2/16] 0.0, 128
        %2206 = vxpose.xlu0.b32.cont [3/16] 0.0, 128
        %2207 = vxpose.xlu0.b32.cont [4/16] 0.0, 128
        %2208 = vxpose.xlu0.b32.cont [5/16] 0.0, 128
        %2209 = vxpose.xlu0.b32.cont [6/16] 0.0, 128
        %2210 = vxpose.xlu0.b32.cont [7/16] 0.0, 128
        %2211 = vxpose.xlu0.b32.cont [8/16] 0.0, 128
        %2212 = vxpose.xlu0.b32.cont [9/16] 0.0, 128
        %2213 = vxpose.xlu0.b32.cont [10/16] 0.0, 128
        %2214 = vxpose.xlu0.b32.cont [11/16] 0.0, 128
        %2215 = vxpose.xlu0.b32.cont [12/16] 0.0, 128
        %2216 = vxpose.xlu0.b32.cont [13/16] 0.0, 128
        %2217 = vxpose.xlu0.b32.cont [14/16] 0.0, 128
        %2218 = vxpose.xlu0.b32.cont [15/16] 0.0, 128
        %2219 = vxpose.xlu0.b32.end [16/16] 0.0, 128
        %v2220 = vpop.trf.xlu0
        %v2221 = vpop.trf.xlu0
        %v2222 = vpop.trf.xlu0
        %v2223 = vpop.trf.xlu0
        %v2224 = vpop.trf.xlu0
        %v2225 = vpop.trf.xlu0
        %v2226 = vpop.trf.xlu0
        %v2227 = vpop.trf.xlu0
        %v2228 = vpop.trf.xlu0
        %v2229 = vpop.trf.xlu0
        %v2230 = vpop.trf.xlu0
        %v2231 = vpop.trf.xlu0
        %v2232 = vpop.trf.xlu0
        %v2233 = vpop.trf.xlu0
        %v2234 = vpop.trf.xlu0
        %v2235 = vpop.trf.xlu0
        %v2236 = vsel %vm928, %v690, 0
        %2238 = vmatprep.subr.mxu0 0.0
        %2239 = vmatpush1.msra.mxu0 0.0
        %2240 = vmatprep.subr.mxu0 0.0
        %2241 = vmatpush1.msra.mxu0 0.0
        %2242 = vmatprep.subr.mxu0 0.0
        %2243 = vmatpush1.msra.mxu0 0.0
        %2244 = vmatprep.subr.mxu0 0.0
        %2245 = vmatpush1.msra.mxu0 0.0
        %2246 = vmatprep.subr.mxu0 0.0
        %2247 = vmatpush1.msra.mxu0 0.0
        %2248 = vmatprep.subr.mxu0 0.0
        %2249 = vmatpush1.msra.mxu0 0.0
        %2250 = vmatprep.subr.mxu0 0.0
        %2251 = vmatpush1.msra.mxu0 0.0
        %2252 = vmatprep.subr.mxu0 0.0
        %2253 = vmatpush1.msra.mxu0 0.0
        %2254 = vmatprep.subr.mxu0 0.0
        %2255 = vmatpush1.msra.mxu0 0.0
        %2256 = vmatprep.subr.mxu0 0.0
        %2257 = vmatpush1.msra.mxu0 0.0
        %2258 = vmatprep.subr.mxu0 0.0
        %2259 = vmatpush1.msra.mxu0 0.0
        %2260 = vmatprep.subr.mxu0 0.0
        %2261 = vmatpush1.msra.mxu0 0.0
        %2262 = vmatprep.subr.mxu0 0.0
        %2263 = vmatpush1.msra.mxu0 %v2127
        %2264 = vmatprep.subr.mxu0 0.0
        %2265 = vmatpush1.msra.mxu0 %v2126
        %2266 = vmatprep.subr.mxu0 0.0
        %2267 = vmatpush1.msra.mxu0 %v2125
        %2268 = vmatprep.subr.mxu0 0.0
        %2269 = vmatpush1.msra.mxu0 %v2124
        %2270 = vmatprep.subr.mxu0 0.0
        %2271 = vmatpush2.msra.mxu0 0.0
        %2272 = vmatprep.subr.mxu0 0.0
        %2273 = vmatpush2.msra.mxu0 0.0
        %2274 = vmatprep.subr.mxu0 0.0
        %2275 = vmatpush2.msra.mxu0 0.0
        %2276 = vmatprep.subr.mxu0 0.0
        %2277 = vmatpush2.msra.mxu0 0.0
        %2278 = vmatprep.subr.mxu0 0.0
        %2279 = vmatpush2.msra.mxu0 0.0
        %2280 = vmatprep.subr.mxu0 0.0
        %2281 = vmatpush2.msra.mxu0 0.0
        %2282 = vmatprep.subr.mxu0 0.0
        %2283 = vmatpush2.msra.mxu0 0.0
        %2284 = vmatprep.subr.mxu0 0.0
        %2285 = vmatpush2.msra.mxu0 0.0
        %2286 = vmatprep.subr.mxu0 0.0
        %2287 = vmatpush2.msra.mxu0 0.0
        %2288 = vmatprep.subr.mxu0 0.0
        %2289 = vmatpush2.msra.mxu0 0.0
        %2290 = vmatprep.subr.mxu0 0.0
        %2291 = vmatpush2.msra.mxu0 0.0
        %2292 = vmatprep.subr.mxu0 0.0
        %2293 = vmatpush2.msra.mxu0 0.0
        %2294 = vmatprep.subr.mxu0 0.0
        %2295 = vmatpush2.msra.mxu0 0.0
        %2296 = vmatprep.subr.mxu0 0.0
        %2297 = vmatpush2.msra.mxu0 0.0
        %2298 = vmatprep.subr.mxu0 0.0
        %2299 = vmatpush2.msra.mxu0 0.0
        %2300 = vmatprep.subr.mxu0 0.0
        %2301 = vmatpush2.msra.mxu0 0.0
        %2302 = vmatprep.mubr.f32.mxu0 0.0
        %2303 = vmatmul.mubr.f32.gmra.mxu0 %v2236
        %v2304 = vpop.f32.mrf.mxu0
        %v2305 = vadd.f32 0.0, %v2304
        %v2306 = vpop.f32.mrf.mxu0
        %2307 = vdwg.mxu0
        %v2308 = vsel %vm928, %v2083, 0
        %2310 = vmatprep.subr.mxu0 0.0
        %2311 = vmatpush1.msra.mxu0 0.0
        %2312 = vmatprep.subr.mxu0 0.0
        %2313 = vmatpush1.msra.mxu0 0.0
        %2314 = vmatprep.subr.mxu0 0.0
        %2315 = vmatpush1.msra.mxu0 0.0
        %2316 = vmatprep.subr.mxu0 0.0
        %2317 = vmatpush1.msra.mxu0 0.0
        %2318 = vmatprep.subr.mxu0 0.0
        %2319 = vmatpush1.msra.mxu0 0.0
        %2320 = vmatprep.subr.mxu0 0.0
        %2321 = vmatpush1.msra.mxu0 0.0
        %2322 = vmatprep.subr.mxu0 0.0
        %2323 = vmatpush1.msra.mxu0 0.0
        %2324 = vmatprep.subr.mxu0 0.0
        %2325 = vmatpush1.msra.mxu0 0.0
        %2326 = vmatprep.subr.mxu0 0.0
        %2327 = vmatpush1.msra.mxu0 0.0
        %2328 = vmatprep.subr.mxu0 0.0
        %2329 = vmatpush1.msra.mxu0 0.0
        %2330 = vmatprep.subr.mxu0 0.0
        %2331 = vmatpush1.msra.mxu0 0.0
        %2332 = vmatprep.subr.mxu0 0.0
        %2333 = vmatpush1.msra.mxu0 0.0
        %2334 = vmatprep.subr.mxu0 0.0
        %2335 = vmatpush1.msra.mxu0 %v2159
        %2336 = vmatprep.subr.mxu0 0.0
        %2337 = vmatpush1.msra.mxu0 %v2158
        %2338 = vmatprep.subr.mxu0 0.0
        %2339 = vmatpush1.msra.mxu0 %v2157
        %2340 = vmatprep.subr.mxu0 0.0
        %2341 = vmatpush1.msra.mxu0 %v2156
        %2342 = vmatprep.subr.mxu0 0.0
        %2343 = vmatpush2.msra.mxu0 0.0
        %2344 = vmatprep.subr.mxu0 0.0
        %2345 = vmatpush2.msra.mxu0 0.0
        %2346 = vmatprep.subr.mxu0 0.0
        %2347 = vmatpush2.msra.mxu0 0.0
        %2348 = vmatprep.subr.mxu0 0.0
        %2349 = vmatpush2.msra.mxu0 0.0
        %2350 = vmatprep.subr.mxu0 0.0
        %2351 = vmatpush2.msra.mxu0 0.0
        %2352 = vmatprep.subr.mxu0 0.0
        %2353 = vmatpush2.msra.mxu0 0.0
        %2354 = vmatprep.subr.mxu0 0.0
        %2355 = vmatpush2.msra.mxu0 0.0
        %2356 = vmatprep.subr.mxu0 0.0
        %2357 = vmatpush2.msra.mxu0 0.0
        %2358 = vmatprep.subr.mxu0 0.0
        %2359 = vmatpush2.msra.mxu0 0.0
        %2360 = vmatprep.subr.mxu0 0.0
        %2361 = vmatpush2.msra.mxu0 0.0
        %2362 = vmatprep.subr.mxu0 0.0
        %2363 = vmatpush2.msra.mxu0 0.0
        %2364 = vmatprep.subr.mxu0 0.0
        %2365 = vmatpush2.msra.mxu0 0.0
        %2366 = vmatprep.subr.mxu0 0.0
        %2367 = vmatpush2.msra.mxu0 0.0
        %2368 = vmatprep.subr.mxu0 0.0
        %2369 = vmatpush2.msra.mxu0 0.0
        %2370 = vmatprep.subr.mxu0 0.0
        %2371 = vmatpush2.msra.mxu0 0.0
        %2372 = vmatprep.subr.mxu0 0.0
        %2373 = vmatpush2.msra.mxu0 0.0
        %2374 = vmatprep.mubr.f32.mxu0 0.0
        %2375 = vmatmul.mubr.f32.gmra.mxu0 %v2308
        %v2376 = vpop.f32.mrf.mxu0
        %v2377 = vadd.f32 0.0, %v2376
        %v2378 = vpop.f32.mrf.mxu0
        %2379 = vdwg.mxu0
        %v2380 = vsel %vm928, %v2085, 0
        %2382 = vmatprep.subr.mxu0 0.0
        %2383 = vmatpush1.msra.mxu0 0.0
        %2384 = vmatprep.subr.mxu0 0.0
        %2385 = vmatpush1.msra.mxu0 0.0
        %2386 = vmatprep.subr.mxu0 0.0
        %2387 = vmatpush1.msra.mxu0 0.0
        %2388 = vmatprep.subr.mxu0 0.0
        %2389 = vmatpush1.msra.mxu0 0.0
        %2390 = vmatprep.subr.mxu0 0.0
        %2391 = vmatpush1.msra.mxu0 0.0
        %2392 = vmatprep.subr.mxu0 0.0
        %2393 = vmatpush1.msra.mxu0 0.0
        %2394 = vmatprep.subr.mxu0 0.0
        %2395 = vmatpush1.msra.mxu0 0.0
        %2396 = vmatprep.subr.mxu0 0.0
        %2397 = vmatpush1.msra.mxu0 0.0
        %2398 = vmatprep.subr.mxu0 0.0
        %2399 = vmatpush1.msra.mxu0 0.0
        %2400 = vmatprep.subr.mxu0 0.0
        %2401 = vmatpush1.msra.mxu0 0.0
        %2402 = vmatprep.subr.mxu0 0.0
        %2403 = vmatpush1.msra.mxu0 0.0
        %2404 = vmatprep.subr.mxu0 0.0
        %2405 = vmatpush1.msra.mxu0 0.0
        %2406 = vmatprep.subr.mxu0 0.0
        %2407 = vmatpush1.msra.mxu0 %v2191
        %2408 = vmatprep.subr.mxu0 0.0
        %2409 = vmatpush1.msra.mxu0 %v2190
        %2410 = vmatprep.subr.mxu0 0.0
        %2411 = vmatpush1.msra.mxu0 %v2189
        %2412 = vmatprep.subr.mxu0 0.0
        %2413 = vmatpush1.msra.mxu0 %v2188
        %2414 = vmatprep.subr.mxu0 0.0
        %2415 = vmatpush2.msra.mxu0 0.0
        %2416 = vmatprep.subr.mxu0 0.0
        %2417 = vmatpush2.msra.mxu0 0.0
        %2418 = vmatprep.subr.mxu0 0.0
        %2419 = vmatpush2.msra.mxu0 0.0
        %2420 = vmatprep.subr.mxu0 0.0
        %2421 = vmatpush2.msra.mxu0 0.0
        %2422 = vmatprep.subr.mxu0 0.0
        %2423 = vmatpush2.msra.mxu0 0.0
        %2424 = vmatprep.subr.mxu0 0.0
        %2425 = vmatpush2.msra.mxu0 0.0
        %2426 = vmatprep.subr.mxu0 0.0
        %2427 = vmatpush2.msra.mxu0 0.0
        %2428 = vmatprep.subr.mxu0 0.0
        %2429 = vmatpush2.msra.mxu0 0.0
        %2430 = vmatprep.subr.mxu0 0.0
        %2431 = vmatpush2.msra.mxu0 0.0
        %2432 = vmatprep.subr.mxu0 0.0
        %2433 = vmatpush2.msra.mxu0 0.0
        %2434 = vmatprep.subr.mxu0 0.0
        %2435 = vmatpush2.msra.mxu0 0.0
        %2436 = vmatprep.subr.mxu0 0.0
        %2437 = vmatpush2.msra.mxu0 0.0
        %2438 = vmatprep.subr.mxu0 0.0
        %2439 = vmatpush2.msra.mxu0 0.0
        %2440 = vmatprep.subr.mxu0 0.0
        %2441 = vmatpush2.msra.mxu0 0.0
        %2442 = vmatprep.subr.mxu0 0.0
        %2443 = vmatpush2.msra.mxu0 0.0
        %2444 = vmatprep.subr.mxu0 0.0
        %2445 = vmatpush2.msra.mxu0 0.0
        %2446 = vmatprep.mubr.f32.mxu0 0.0
        %2447 = vmatmul.mubr.f32.gmra.mxu0 %v2380
        %v2448 = vpop.f32.mrf.mxu0
        %v2449 = vadd.f32 0.0, %v2448
        %v2450 = vpop.f32.mrf.mxu0
        %2451 = vdwg.mxu0
        %v2452 = vsel %vm928, %v2087, 0
        %2454 = vmatprep.subr.mxu0 0.0
        %2455 = vmatpush1.msra.mxu0 0.0
        %2456 = vmatprep.subr.mxu0 0.0
        %2457 = vmatpush1.msra.mxu0 0.0
        %2458 = vmatprep.subr.mxu0 0.0
        %2459 = vmatpush1.msra.mxu0 0.0
        %2460 = vmatprep.subr.mxu0 0.0
        %2461 = vmatpush1.msra.mxu0 0.0
        %2462 = vmatprep.subr.mxu0 0.0
        %2463 = vmatpush1.msra.mxu0 0.0
        %2464 = vmatprep.subr.mxu0 0.0
        %2465 = vmatpush1.msra.mxu0 0.0
        %2466 = vmatprep.subr.mxu0 0.0
        %2467 = vmatpush1.msra.mxu0 0.0
        %2468 = vmatprep.subr.mxu0 0.0
        %2469 = vmatpush1.msra.mxu0 0.0
        %2470 = vmatprep.subr.mxu0 0.0
        %2471 = vmatpush1.msra.mxu0 0.0
        %2472 = vmatprep.subr.mxu0 0.0
        %2473 = vmatpush1.msra.mxu0 0.0
        %2474 = vmatprep.subr.mxu0 0.0
        %2475 = vmatpush1.msra.mxu0 0.0
        %2476 = vmatprep.subr.mxu0 0.0
        %2477 = vmatpush1.msra.mxu0 0.0
        %2478 = vmatprep.subr.mxu0 0.0
        %2479 = vmatpush1.msra.mxu0 %v2223
        %2480 = vmatprep.subr.mxu0 0.0
        %2481 = vmatpush1.msra.mxu0 %v2222
        %2482 = vmatprep.subr.mxu0 0.0
        %2483 = vmatpush1.msra.mxu0 %v2221
        %2484 = vmatprep.subr.mxu0 0.0
        %2485 = vmatpush1.msra.mxu0 %v2220
        %2486 = vmatprep.subr.mxu0 0.0
        %2487 = vmatpush2.msra.mxu0 0.0
        %2488 = vmatprep.subr.mxu0 0.0
        %2489 = vmatpush2.msra.mxu0 0.0
        %2490 = vmatprep.subr.mxu0 0.0
        %2491 = vmatpush2.msra.mxu0 0.0
        %2492 = vmatprep.subr.mxu0 0.0
        %2493 = vmatpush2.msra.mxu0 0.0
        %2494 = vmatprep.subr.mxu0 0.0
        %2495 = vmatpush2.msra.mxu0 0.0
        %2496 = vmatprep.subr.mxu0 0.0
        %2497 = vmatpush2.msra.mxu0 0.0
        %2498 = vmatprep.subr.mxu0 0.0
        %2499 = vmatpush2.msra.mxu0 0.0
        %2500 = vmatprep.subr.mxu0 0.0
        %2501 = vmatpush2.msra.mxu0 0.0
        %2502 = vmatprep.subr.mxu0 0.0
        %2503 = vmatpush2.msra.mxu0 0.0
        %2504 = vmatprep.subr.mxu0 0.0
        %2505 = vmatpush2.msra.mxu0 0.0
        %2506 = vmatprep.subr.mxu0 0.0
        %2507 = vmatpush2.msra.mxu0 0.0
        %2508 = vmatprep.subr.mxu0 0.0
        %2509 = vmatpush2.msra.mxu0 0.0
        %2510 = vmatprep.subr.mxu0 0.0
        %2511 = vmatpush2.msra.mxu0 0.0
        %2512 = vmatprep.subr.mxu0 0.0
        %2513 = vmatpush2.msra.mxu0 0.0
        %2514 = vmatprep.subr.mxu0 0.0
        %2515 = vmatpush2.msra.mxu0 0.0
        %2516 = vmatprep.subr.mxu0 0.0
        %2517 = vmatpush2.msra.mxu0 0.0
        %2518 = vmatprep.mubr.f32.mxu0 0.0
        %2519 = vmatmul.mubr.f32.gmra.mxu0 %v2452
        %v2520 = vpop.f32.mrf.mxu0
        %v2521 = vadd.f32 0.0, %v2520
        %v2522 = vpop.f32.mrf.mxu0
        %2523 = vdwg.mxu0
        %v2524 = vmul.f32 %v2305, 0.17677669
        %v2525 = vmul.f32 %v2377, 0.17677669
        %v2526 = vmul.f32 %v2449, 0.17677669
        %v2527 = vmul.f32 %v2521, 0.17677669
        %v2528 = vsel %vm772, 1, 0
        %vm2529 = vcmp.eq.s32.totalorder %v2528, 1
        %v2530 = vsel %vm2529, -1e+09, %v2524
        %v2531 = vsel %vm2529, -1e+09, %v2525
        %v2532 = vsel %vm2529, -1e+09, %v2526
        %v2533 = vsel %vm2529, -1e+09, %v2527
        %v2534 = vsel %vm1227, %v2530, -inf
        %2535 = vmax.xlane.f32.xlu0 %v2534
        %v2536 = vpop.xlane.xlu0 %2535
        %v2537 = vsel %vm1227, %v2531, -inf
        %2538 = vmax.xlane.f32.xlu0 %v2537
        %v2539 = vpop.xlane.xlu0 %2538
        %v2540 = vsel %vm1227, %v2532, -inf
        %2541 = vmax.xlane.f32.xlu0 %v2540
        %v2542 = vpop.xlane.xlu0 %2541
        %v2543 = vsel %vm1227, %v2533, -inf
        %2544 = vmax.xlane.f32.xlu0 %v2543
        %v2545 = vpop.xlane.xlu0 %2544
        %v2546 = vsub.f32 %v2530, %v2536
        %v2547 = vsub.f32 %v2531, %v2539
        %v2548 = vsub.f32 %v2532, %v2542
        %v2549 = vsub.f32 %v2533, %v2545
        %v2550 = vmul.f32 %v2546, 1.442695
        %v2551 = vpow.pop %v2550
        %v2552 = vmul.f32 %v2547, 1.442695
        %v2553 = vpow.pop %v2552
        %v2554 = vmul.f32 %v2548, 1.442695
        %v2555 = vpow.pop %v2554
        %v2556 = vmul.f32 %v2549, 1.442695
        %v2557 = vpow.pop %v2556
        %v2558 = vsel %vm1227, %v2551, 0.0
        %2559 = vadd.xlane.f32.xlu0 %v2558
        %v2560 = vpop.xlane.xlu0 %2559
        %v2561 = vsel %vm1227, %v2553, 0.0
        %2562 = vadd.xlane.f32.xlu0 %v2561
        %v2563 = vpop.xlane.xlu0 %2562
        %v2564 = vsel %vm1227, %v2555, 0.0
        %2565 = vadd.xlane.f32.xlu0 %v2564
        %v2566 = vpop.xlane.xlu0 %2565
        %v2567 = vsel %vm1227, %v2557, 0.0
        %2568 = vadd.xlane.f32.xlu0 %v2567
        %v2569 = vpop.xlane.xlu0 %2568
        %v2570 = vrcp.pop %v2560
        %v2571 = vrcp.pop %v2563
        %v2572 = vrcp.pop %v2566
        %v2573 = vrcp.pop %v2569
        %v2574 = vmul.f32 %v2551, %v2570
        %v2575 = vmul.f32 %v2553, %v2571
        %v2576 = vmul.f32 %v2555, %v2572
        %v2577 = vmul.f32 %v2557, %v2573
        %2578 = vxpose.xlu0.b32.start [1/16] %v766, 128
        %2579 = vxpose.xlu0.b32.cont [2/16] 0.0, 128
        %2580 = vxpose.xlu0.b32.cont [3/16] 0.0, 128
        %2581 = vxpose.xlu0.b32.cont [4/16] 0.0, 128
        %2582 = vxpose.xlu0.b32.cont [5/16] 0.0, 128
        %2583 = vxpose.xlu0.b32.cont [6/16] 0.0, 128
        %2584 = vxpose.xlu0.b32.cont [7/16] 0.0, 128
        %2585 = vxpose.xlu0.b32.cont [8/16] 0.0, 128
        %2586 = vxpose.xlu0.b32.cont [9/16] 0.0, 128
        %2587 = vxpose.xlu0.b32.cont [10/16] 0.0, 128
        %2588 = vxpose.xlu0.b32.cont [11/16] 0.0, 128
        %2589 = vxpose.xlu0.b32.cont [12/16] 0.0, 128
        %2590 = vxpose.xlu0.b32.cont [13/16] 0.0, 128
        %2591 = vxpose.xlu0.b32.cont [14/16] 0.0, 128
        %2592 = vxpose.xlu0.b32.cont [15/16] 0.0, 128
        %2593 = vxpose.xlu0.b32.end [16/16] 0.0, 128
        %v2594 = vpop.trf.xlu0
        %v2595 = vpop.trf.xlu0
        %v2596 = vpop.trf.xlu0
        %v2597 = vpop.trf.xlu0
        %v2598 = vpop.trf.xlu0
        %v2599 = vpop.trf.xlu0
        %v2600 = vpop.trf.xlu0
        %v2601 = vpop.trf.xlu0
        %v2602 = vpop.trf.xlu0
        %v2603 = vpop.trf.xlu0
        %v2604 = vpop.trf.xlu0
        %v2605 = vpop.trf.xlu0
        %v2606 = vpop.trf.xlu0
        %v2607 = vpop.trf.xlu0
        %v2608 = vpop.trf.xlu0
        %v2609 = vpop.trf.xlu0
        %2610 = vxpose.xlu0.b32.start [1/16] %v2100, 128
        %2611 = vxpose.xlu0.b32.cont [2/16] 0.0, 128
        %2612 = vxpose.xlu0.b32.cont [3/16] 0.0, 128
        %2613 = vxpose.xlu0.b32.cont [4/16] 0.0, 128
        %2614 = vxpose.xlu0.b32.cont [5/16] 0.0, 128
        %2615 = vxpose.xlu0.b32.cont [6/16] 0.0, 128
        %2616 = vxpose.xlu0.b32.cont [7/16] 0.0, 128
        %2617 = vxpose.xlu0.b32.cont [8/16] 0.0, 128
        %2618 = vxpose.xlu0.b32.cont [9/16] 0.0, 128
        %2619 = vxpose.xlu0.b32.cont [10/16] 0.0, 128
        %2620 = vxpose.xlu0.b32.cont [11/16] 0.0, 128
        %2621 = vxpose.xlu0.b32.cont [12/16] 0.0, 128
        %2622 = vxpose.xlu0.b32.cont [13/16] 0.0, 128
        %2623 = vxpose.xlu0.b32.cont [14/16] 0.0, 128
        %2624 = vxpose.xlu0.b32.cont [15/16] 0.0, 128
        %2625 = vxpose.xlu0.b32.end [16/16] 0.0, 128
        %v2626 = vpop.trf.xlu0
        %v2627 = vpop.trf.xlu0
        %v2628 = vpop.trf.xlu0
        %v2629 = vpop.trf.xlu0
        %v2630 = vpop.trf.xlu0
        %v2631 = vpop.trf.xlu0
        %v2632 = vpop.trf.xlu0
        %v2633 = vpop.trf.xlu0
        %v2634 = vpop.trf.xlu0
        %v2635 = vpop.trf.xlu0
        %v2636 = vpop.trf.xlu0
        %v2637 = vpop.trf.xlu0
        %v2638 = vpop.trf.xlu0
        %v2639 = vpop.trf.xlu0
        %v2640 = vpop.trf.xlu0
        %v2641 = vpop.trf.xlu0
        %2642 = vxpose.xlu0.b32.start [1/16] %v2103, 128
        %2643 = vxpose.xlu0.b32.cont [2/16] 0.0, 128
        %2644 = vxpose.xlu0.b32.cont [3/16] 0.0, 128
        %2645 = vxpose.xlu0.b32.cont [4/16] 0.0, 128
        %2646 = vxpose.xlu0.b32.cont [5/16] 0.0, 128
        %2647 = vxpose.xlu0.b32.cont [6/16] 0.0, 128
        %2648 = vxpose.xlu0.b32.cont [7/16] 0.0, 128
        %2649 = vxpose.xlu0.b32.cont [8/16] 0.0, 128
        %2650 = vxpose.xlu0.b32.cont [9/16] 0.0, 128
        %2651 = vxpose.xlu0.b32.cont [10/16] 0.0, 128
        %2652 = vxpose.xlu0.b32.cont [11/16] 0.0, 128
        %2653 = vxpose.xlu0.b32.cont [12/16] 0.0, 128
        %2654 = vxpose.xlu0.b32.cont [13/16] 0.0, 128
        %2655 = vxpose.xlu0.b32.cont [14/16] 0.0, 128
        %2656 = vxpose.xlu0.b32.cont [15/16] 0.0, 128
        %2657 = vxpose.xlu0.b32.end [16/16] 0.0, 128
        %v2658 = vpop.trf.xlu0
        %v2659 = vpop.trf.xlu0
        %v2660 = vpop.trf.xlu0
        %v2661 = vpop.trf.xlu0
        %v2662 = vpop.trf.xlu0
        %v2663 = vpop.trf.xlu0
        %v2664 = vpop.trf.xlu0
        %v2665 = vpop.trf.xlu0
        %v2666 = vpop.trf.xlu0
        %v2667 = vpop.trf.xlu0
        %v2668 = vpop.trf.xlu0
        %v2669 = vpop.trf.xlu0
        %v2670 = vpop.trf.xlu0
        %v2671 = vpop.trf.xlu0
        %v2672 = vpop.trf.xlu0
        %v2673 = vpop.trf.xlu0
        %2674 = vxpose.xlu0.b32.start [1/16] %v2106, 128
        %2675 = vxpose.xlu0.b32.cont [2/16] 0.0, 128
        %2676 = vxpose.xlu0.b32.cont [3/16] 0.0, 128
        %2677 = vxpose.xlu0.b32.cont [4/16] 0.0, 128
        %2678 = vxpose.xlu0.b32.cont [5/16] 0.0, 128
        %2679 = vxpose.xlu0.b32.cont [6/16] 0.0, 128
        %2680 = vxpose.xlu0.b32.cont [7/16] 0.0, 128
        %2681 = vxpose.xlu0.b32.cont [8/16] 0.0, 128
        %2682 = vxpose.xlu0.b32.cont [9/16] 0.0, 128
        %2683 = vxpose.xlu0.b32.cont [10/16] 0.0, 128
        %2684 = vxpose.xlu0.b32.cont [11/16] 0.0, 128
        %2685 = vxpose.xlu0.b32.cont [12/16] 0.0, 128
        %2686 = vxpose.xlu0.b32.cont [13/16] 0.0, 128
        %2687 = vxpose.xlu0.b32.cont [14/16] 0.0, 128
        %2688 = vxpose.xlu0.b32.cont [15/16] 0.0, 128
        %2689 = vxpose.xlu0.b32.end [16/16] 0.0, 128
        %v2690 = vpop.trf.xlu0
        %v2691 = vpop.trf.xlu0
        %v2692 = vpop.trf.xlu0
        %v2693 = vpop.trf.xlu0
        %v2694 = vpop.trf.xlu0
        %v2695 = vpop.trf.xlu0
        %v2696 = vpop.trf.xlu0
        %v2697 = vpop.trf.xlu0
        %v2698 = vpop.trf.xlu0
        %v2699 = vpop.trf.xlu0
        %v2700 = vpop.trf.xlu0
        %v2701 = vpop.trf.xlu0
        %v2702 = vpop.trf.xlu0
        %v2703 = vpop.trf.xlu0
        %v2704 = vpop.trf.xlu0
        %v2705 = vpop.trf.xlu0
        %v2707 = vsel %vm1227, %v2594, 0
        %v2710 = vsel %vm1227, %v2595, 0
        %v2713 = vsel %vm1227, %v2596, 0
        %v2716 = vsel %vm1227, %v2597, 0
        %v2719 = vsel %vm1227, %v2574, 0
        %2721 = vmatprep.subr.mxu0 0.0
        %2722 = vmatpush1.xpose.msra.mxu0 0.0
        %2723 = vmatprep.subr.mxu0 0.0
        %2724 = vmatpush1.xpose.msra.mxu0 0.0
        %2725 = vmatprep.subr.mxu0 0.0
        %2726 = vmatpush1.xpose.msra.mxu0 0.0
        %2727 = vmatprep.subr.mxu0 0.0
        %2728 = vmatpush1.xpose.msra.mxu0 0.0
        %2729 = vmatprep.subr.mxu0 0.0
        %2730 = vmatpush1.xpose.msra.mxu0 0.0
        %2731 = vmatprep.subr.mxu0 0.0
        %2732 = vmatpush1.xpose.msra.mxu0 0.0
        %2733 = vmatprep.subr.mxu0 0.0
        %2734 = vmatpush1.xpose.msra.mxu0 0.0
        %2735 = vmatprep.subr.mxu0 0.0
        %2736 = vmatpush1.xpose.msra.mxu0 0.0
        %2737 = vmatprep.subr.mxu0 0.0
        %2738 = vmatpush1.xpose.msra.mxu0 0.0
        %2739 = vmatprep.subr.mxu0 0.0
        %2740 = vmatpush1.xpose.msra.mxu0 0.0
        %2741 = vmatprep.subr.mxu0 0.0
        %2742 = vmatpush1.xpose.msra.mxu0 0.0
        %2743 = vmatprep.subr.mxu0 0.0
        %2744 = vmatpush1.xpose.msra.mxu0 0.0
        %2745 = vmatprep.subr.mxu0 0.0
        %2746 = vmatpush1.xpose.msra.mxu0 0.0
        %2747 = vmatprep.subr.mxu0 0.0
        %2748 = vmatpush1.xpose.msra.mxu0 0.0
        %2749 = vmatprep.subr.mxu0 0.0
        %2750 = vmatpush1.xpose.msra.mxu0 0.0
        %2751 = vmatprep.subr.mxu0 0.0
        %2752 = vmatpush1.xpose.msra.mxu0 %v2719
        %2753 = vmatprep.subr.mxu0 0.0
        %2754 = vmatpush2.xpose.msra.mxu0 0.0
        %2755 = vmatprep.subr.mxu0 0.0
        %2756 = vmatpush2.xpose.msra.mxu0 0.0
        %2757 = vmatprep.subr.mxu0 0.0
        %2758 = vmatpush2.xpose.msra.mxu0 0.0
        %2759 = vmatprep.subr.mxu0 0.0
        %2760 = vmatpush2.xpose.msra.mxu0 0.0
        %2761 = vmatprep.subr.mxu0 0.0
        %2762 = vmatpush2.xpose.msra.mxu0 0.0
        %2763 = vmatprep.subr.mxu0 0.0
        %2764 = vmatpush2.xpose.msra.mxu0 0.0
        %2765 = vmatprep.subr.mxu0 0.0
        %2766 = vmatpush2.xpose.msra.mxu0 0.0
        %2767 = vmatprep.subr.mxu0 0.0
        %2768 = vmatpush2.xpose.msra.mxu0 0.0
        %2769 = vmatprep.subr.mxu0 0.0
        %2770 = vmatpush2.xpose.msra.mxu0 0.0
        %2771 = vmatprep.subr.mxu0 0.0
        %2772 = vmatpush2.xpose.msra.mxu0 0.0
        %2773 = vmatprep.subr.mxu0 0.0
        %2774 = vmatpush2.xpose.msra.mxu0 0.0
        %2775 = vmatprep.subr.mxu0 0.0
        %2776 = vmatpush2.xpose.msra.mxu0 0.0
        %2777 = vmatprep.subr.mxu0 0.0
        %2778 = vmatpush2.xpose.msra.mxu0 0.0
        %2779 = vmatprep.subr.mxu0 0.0
        %2780 = vmatpush2.xpose.msra.mxu0 0.0
        %2781 = vmatprep.subr.mxu0 0.0
        %2782 = vmatpush2.xpose.msra.mxu0 0.0
        %2783 = vmatprep.subr.mxu0 0.0
        %2784 = vmatpush2.xpose.msra.mxu0 0.0
        %2785 = vmatprep.mubr.f32.mxu0 0.0
        %2786 = vmatmul.mubr.f32.gmra.mxu0 %v2707
        %v2787 = vpop.f32.mrf.mxu0
        %v2788 = vadd.f32 0.0, %v2787
        %v2789 = vpop.f32.mrf.mxu0
        %2790 = vmatprep.mubr.f32.mxu0 0.0
        %2791 = vmatmul.mubr.f32.gmra.mxu0 %v2710
        %v2792 = vpop.f32.mrf.mxu0
        %v2793 = vadd.f32 0.0, %v2792
        %v2794 = vpop.f32.mrf.mxu0
        %2795 = vmatprep.mubr.f32.mxu0 0.0
        %2796 = vmatmul.mubr.f32.gmra.mxu0 %v2713
        %v2797 = vpop.f32.mrf.mxu0
        %v2798 = vadd.f32 0.0, %v2797
        %v2799 = vpop.f32.mrf.mxu0
        %2800 = vmatprep.mubr.f32.mxu0 0.0
        %2801 = vmatmul.mubr.f32.gmra.mxu0 %v2716
        %v2802 = vpop.f32.mrf.mxu0
        %v2803 = vadd.f32 0.0, %v2802
        %v2804 = vpop.f32.mrf.mxu0
        %2805 = vdwg.mxu0
        %v2807 = vsel %vm1227, %v2626, 0
        %v2810 = vsel %vm1227, %v2627, 0
        %v2813 = vsel %vm1227, %v2628, 0
        %v2816 = vsel %vm1227, %v2629, 0
        %v2819 = vsel %vm1227, %v2575, 0
        %2821 = vmatprep.subr.mxu0 0.0
        %2822 = vmatpush1.xpose.msra.mxu0 0.0
        %2823 = vmatprep.subr.mxu0 0.0
        %2824 = vmatpush1.xpose.msra.mxu0 0.0
        %2825 = vmatprep.subr.mxu0 0.0
        %2826 = vmatpush1.xpose.msra.mxu0 0.0
        %2827 = vmatprep.subr.mxu0 0.0
        %2828 = vmatpush1.xpose.msra.mxu0 0.0
        %2829 = vmatprep.subr.mxu0 0.0
        %2830 = vmatpush1.xpose.msra.mxu0 0.0
        %2831 = vmatprep.subr.mxu0 0.0
        %2832 = vmatpush1.xpose.msra.mxu0 0.0
        %2833 = vmatprep.subr.mxu0 0.0
        %2834 = vmatpush1.xpose.msra.mxu0 0.0
        %2835 = vmatprep.subr.mxu0 0.0
        %2836 = vmatpush1.xpose.msra.mxu0 0.0
        %2837 = vmatprep.subr.mxu0 0.0
        %2838 = vmatpush1.xpose.msra.mxu0 0.0
        %2839 = vmatprep.subr.mxu0 0.0
        %2840 = vmatpush1.xpose.msra.mxu0 0.0
        %2841 = vmatprep.subr.mxu0 0.0
        %2842 = vmatpush1.xpose.msra.mxu0 0.0
        %2843 = vmatprep.subr.mxu0 0.0
        %2844 = vmatpush1.xpose.msra.mxu0 0.0
        %2845 = vmatprep.subr.mxu0 0.0
        %2846 = vmatpush1.xpose.msra.mxu0 0.0
        %2847 = vmatprep.subr.mxu0 0.0
        %2848 = vmatpush1.xpose.msra.mxu0 0.0
        %2849 = vmatprep.subr.mxu0 0.0
        %2850 = vmatpush1.xpose.msra.mxu0 0.0
        %2851 = vmatprep.subr.mxu0 0.0
        %2852 = vmatpush1.xpose.msra.mxu0 %v2819
        %2853 = vmatprep.subr.mxu0 0.0
        %2854 = vmatpush2.xpose.msra.mxu0 0.0
        %2855 = vmatprep.subr.mxu0 0.0
        %2856 = vmatpush2.xpose.msra.mxu0 0.0
        %2857 = vmatprep.subr.mxu0 0.0
        %2858 = vmatpush2.xpose.msra.mxu0 0.0
        %2859 = vmatprep.subr.mxu0 0.0
        %2860 = vmatpush2.xpose.msra.mxu0 0.0
        %2861 = vmatprep.subr.mxu0 0.0
        %2862 = vmatpush2.xpose.msra.mxu0 0.0
        %2863 = vmatprep.subr.mxu0 0.0
        %2864 = vmatpush2.xpose.msra.mxu0 0.0
        %2865 = vmatprep.subr.mxu0 0.0
        %2866 = vmatpush2.xpose.msra.mxu0 0.0
        %2867 = vmatprep.subr.mxu0 0.0
        %2868 = vmatpush2.xpose.msra.mxu0 0.0
        %2869 = vmatprep.subr.mxu0 0.0
        %2870 = vmatpush2.xpose.msra.mxu0 0.0
        %2871 = vmatprep.subr.mxu0 0.0
        %2872 = vmatpush2.xpose.msra.mxu0 0.0
        %2873 = vmatprep.subr.mxu0 0.0
        %2874 = vmatpush2.xpose.msra.mxu0 0.0
        %2875 = vmatprep.subr.mxu0 0.0
        %2876 = vmatpush2.xpose.msra.mxu0 0.0
        %2877 = vmatprep.subr.mxu0 0.0
        %2878 = vmatpush2.xpose.msra.mxu0 0.0
        %2879 = vmatprep.subr.mxu0 0.0
        %2880 = vmatpush2.xpose.msra.mxu0 0.0
        %2881 = vmatprep.subr.mxu0 0.0
        %2882 = vmatpush2.xpose.msra.mxu0 0.0
        %2883 = vmatprep.subr.mxu0 0.0
        %2884 = vmatpush2.xpose.msra.mxu0 0.0
        %2885 = vmatprep.mubr.f32.mxu0 0.0
        %2886 = vmatmul.mubr.f32.gmra.mxu0 %v2807
        %v2887 = vpop.f32.mrf.mxu0
        %v2888 = vadd.f32 0.0, %v2887
        %v2889 = vpop.f32.mrf.mxu0
        %2890 = vmatprep.mubr.f32.mxu0 0.0
        %2891 = vmatmul.mubr.f32.gmra.mxu0 %v2810
        %v2892 = vpop.f32.mrf.mxu0
        %v2893 = vadd.f32 0.0, %v2892
        %v2894 = vpop.f32.mrf.mxu0
        %2895 = vmatprep.mubr.f32.mxu0 0.0
        %2896 = vmatmul.mubr.f32.gmra.mxu0 %v2813
        %v2897 = vpop.f32.mrf.mxu0
        %v2898 = vadd.f32 0.0, %v2897
        %v2899 = vpop.f32.mrf.mxu0
        %2900 = vmatprep.mubr.f32.mxu0 0.0
        %2901 = vmatmul.mubr.f32.gmra.mxu0 %v2816
        %v2902 = vpop.f32.mrf.mxu0
        %v2903 = vadd.f32 0.0, %v2902
        %v2904 = vpop.f32.mrf.mxu0
        %2905 = vdwg.mxu0
        %v2907 = vsel %vm1227, %v2658, 0
        %v2910 = vsel %vm1227, %v2659, 0
        %v2913 = vsel %vm1227, %v2660, 0
        %v2916 = vsel %vm1227, %v2661, 0
        %v2919 = vsel %vm1227, %v2576, 0
        %2921 = vmatprep.subr.mxu0 0.0
        %2922 = vmatpush1.xpose.msra.mxu0 0.0
        %2923 = vmatprep.subr.mxu0 0.0
        %2924 = vmatpush1.xpose.msra.mxu0 0.0
        %2925 = vmatprep.subr.mxu0 0.0
        %2926 = vmatpush1.xpose.msra.mxu0 0.0
        %2927 = vmatprep.subr.mxu0 0.0
        %2928 = vmatpush1.xpose.msra.mxu0 0.0
        %2929 = vmatprep.subr.mxu0 0.0
        %2930 = vmatpush1.xpose.msra.mxu0 0.0
        %2931 = vmatprep.subr.mxu0 0.0
        %2932 = vmatpush1.xpose.msra.mxu0 0.0
        %2933 = vmatprep.subr.mxu0 0.0
        %2934 = vmatpush1.xpose.msra.mxu0 0.0
        %2935 = vmatprep.subr.mxu0 0.0
        %2936 = vmatpush1.xpose.msra.mxu0 0.0
        %2937 = vmatprep.subr.mxu0 0.0
        %2938 = vmatpush1.xpose.msra.mxu0 0.0
        %2939 = vmatprep.subr.mxu0 0.0
        %2940 = vmatpush1.xpose.msra.mxu0 0.0
        %2941 = vmatprep.subr.mxu0 0.0
        %2942 = vmatpush1.xpose.msra.mxu0 0.0
        %2943 = vmatprep.subr.mxu0 0.0
        %2944 = vmatpush1.xpose.msra.mxu0 0.0
        %2945 = vmatprep.subr.mxu0 0.0
        %2946 = vmatpush1.xpose.msra.mxu0 0.0
        %2947 = vmatprep.subr.mxu0 0.0
        %2948 = vmatpush1.xpose.msra.mxu0 0.0
        %2949 = vmatprep.subr.mxu0 0.0
        %2950 = vmatpush1.xpose.msra.mxu0 0.0
        %2951 = vmatprep.subr.mxu0 0.0
        %2952 = vmatpush1.xpose.msra.mxu0 %v2919
        %2953 = vmatprep.subr.mxu0 0.0
        %2954 = vmatpush2.xpose.msra.mxu0 0.0
        %2955 = vmatprep.subr.mxu0 0.0
        %2956 = vmatpush2.xpose.msra.mxu0 0.0
        %2957 = vmatprep.subr.mxu0 0.0
        %2958 = vmatpush2.xpose.msra.mxu0 0.0
        %2959 = vmatprep.subr.mxu0 0.0
        %2960 = vmatpush2.xpose.msra.mxu0 0.0
        %2961 = vmatprep.subr.mxu0 0.0
        %2962 = vmatpush2.xpose.msra.mxu0 0.0
        %2963 = vmatprep.subr.mxu0 0.0
        %2964 = vmatpush2.xpose.msra.mxu0 0.0
        %2965 = vmatprep.subr.mxu0 0.0
        %2966 = vmatpush2.xpose.msra.mxu0 0.0
        %2967 = vmatprep.subr.mxu0 0.0
        %2968 = vmatpush2.xpose.msra.mxu0 0.0
        %2969 = vmatprep.subr.mxu0 0.0
        %2970 = vmatpush2.xpose.msra.mxu0 0.0
        %2971 = vmatprep.subr.mxu0 0.0
        %2972 = vmatpush2.xpose.msra.mxu0 0.0
        %2973 = vmatprep.subr.mxu0 0.0
        %2974 = vmatpush2.xpose.msra.mxu0 0.0
        %2975 = vmatprep.subr.mxu0 0.0
        %2976 = vmatpush2.xpose.msra.mxu0 0.0
        %2977 = vmatprep.subr.mxu0 0.0
        %2978 = vmatpush2.xpose.msra.mxu0 0.0
        %2979 = vmatprep.subr.mxu0 0.0
        %2980 = vmatpush2.xpose.msra.mxu0 0.0
        %2981 = vmatprep.subr.mxu0 0.0
        %2982 = vmatpush2.xpose.msra.mxu0 0.0
        %2983 = vmatprep.subr.mxu0 0.0
        %2984 = vmatpush2.xpose.msra.mxu0 0.0
        %2985 = vmatprep.mubr.f32.mxu0 0.0
        %2986 = vmatmul.mubr.f32.gmra.mxu0 %v2907
        %v2987 = vpop.f32.mrf.mxu0
        %v2988 = vadd.f32 0.0, %v2987
        %v2989 = vpop.f32.mrf.mxu0
        %2990 = vmatprep.mubr.f32.mxu0 0.0
        %2991 = vmatmul.mubr.f32.gmra.mxu0 %v2910
        %v2992 = vpop.f32.mrf.mxu0
        %v2993 = vadd.f32 0.0, %v2992
        %v2994 = vpop.f32.mrf.mxu0
        %2995 = vmatprep.mubr.f32.mxu0 0.0
        %2996 = vmatmul.mubr.f32.gmra.mxu0 %v2913
        %v2997 = vpop.f32.mrf.mxu0
        %v2998 = vadd.f32 0.0, %v2997
        %v2999 = vpop.f32.mrf.mxu0
        %3000 = vmatprep.mubr.f32.mxu0 0.0
        %3001 = vmatmul.mubr.f32.gmra.mxu0 %v2916
        %v3002 = vpop.f32.mrf.mxu0
        %v3003 = vadd.f32 0.0, %v3002
        %v3004 = vpop.f32.mrf.mxu0
        %3005 = vdwg.mxu0
        %v3007 = vsel %vm1227, %v2690, 0
        %v3010 = vsel %vm1227, %v2691, 0
        %v3013 = vsel %vm1227, %v2692, 0
        %v3016 = vsel %vm1227, %v2693, 0
        %v3019 = vsel %vm1227, %v2577, 0
        %3021 = vmatprep.subr.mxu0 0.0
        %3022 = vmatpush1.xpose.msra.mxu0 0.0
        %3023 = vmatprep.subr.mxu0 0.0
        %3024 = vmatpush1.xpose.msra.mxu0 0.0
        %3025 = vmatprep.subr.mxu0 0.0
        %3026 = vmatpush1.xpose.msra.mxu0 0.0
        %3027 = vmatprep.subr.mxu0 0.0
        %3028 = vmatpush1.xpose.msra.mxu0 0.0
        %3029 = vmatprep.subr.mxu0 0.0
        %3030 = vmatpush1.xpose.msra.mxu0 0.0
        %3031 = vmatprep.subr.mxu0 0.0
        %3032 = vmatpush1.xpose.msra.mxu0 0.0
        %3033 = vmatprep.subr.mxu0 0.0
        %3034 = vmatpush1.xpose.msra.mxu0 0.0
        %3035 = vmatprep.subr.mxu0 0.0
        %3036 = vmatpush1.xpose.msra.mxu0 0.0
        %3037 = vmatprep.subr.mxu0 0.0
        %3038 = vmatpush1.xpose.msra.mxu0 0.0
        %3039 = vmatprep.subr.mxu0 0.0
        %3040 = vmatpush1.xpose.msra.mxu0 0.0
        %3041 = vmatprep.subr.mxu0 0.0
        %3042 = vmatpush1.xpose.msra.mxu0 0.0
        %3043 = vmatprep.subr.mxu0 0.0
        %3044 = vmatpush1.xpose.msra.mxu0 0.0
        %3045 = vmatprep.subr.mxu0 0.0
        %3046 = vmatpush1.xpose.msra.mxu0 0.0
        %3047 = vmatprep.subr.mxu0 0.0
        %3048 = vmatpush1.xpose.msra.mxu0 0.0
        %3049 = vmatprep.subr.mxu0 0.0
        %3050 = vmatpush1.xpose.msra.mxu0 0.0
        %3051 = vmatprep.subr.mxu0 0.0
        %3052 = vmatpush1.xpose.msra.mxu0 %v3019
        %3053 = vmatprep.subr.mxu0 0.0
        %3054 = vmatpush2.xpose.msra.mxu0 0.0
        %3055 = vmatprep.subr.mxu0 0.0
        %3056 = vmatpush2.xpose.msra.mxu0 0.0
        %3057 = vmatprep.subr.mxu0 0.0
        %3058 = vmatpush2.xpose.msra.mxu0 0.0
        %3059 = vmatprep.subr.mxu0 0.0
        %3060 = vmatpush2.xpose.msra.mxu0 0.0
        %3061 = vmatprep.subr.mxu0 0.0
        %3062 = vmatpush2.xpose.msra.mxu0 0.0
        %3063 = vmatprep.subr.mxu0 0.0
        %3064 = vmatpush2.xpose.msra.mxu0 0.0
        %3065 = vmatprep.subr.mxu0 0.0
        %3066 = vmatpush2.xpose.msra.mxu0 0.0
        %3067 = vmatprep.subr.mxu0 0.0
        %3068 = vmatpush2.xpose.msra.mxu0 0.0
        %3069 = vmatprep.subr.mxu0 0.0
        %3070 = vmatpush2.xpose.msra.mxu0 0.0
        %3071 = vmatprep.subr.mxu0 0.0
        %3072 = vmatpush2.xpose.msra.mxu0 0.0
        %3073 = vmatprep.subr.mxu0 0.0
        %3074 = vmatpush2.xpose.msra.mxu0 0.0
        %3075 = vmatprep.subr.mxu0 0.0
        %3076 = vmatpush2.xpose.msra.mxu0 0.0
        %3077 = vmatprep.subr.mxu0 0.0
        %3078 = vmatpush2.xpose.msra.mxu0 0.0
        %3079 = vmatprep.subr.mxu0 0.0
        %3080 = vmatpush2.xpose.msra.mxu0 0.0
        %3081 = vmatprep.subr.mxu0 0.0
        %3082 = vmatpush2.xpose.msra.mxu0 0.0
        %3083 = vmatprep.subr.mxu0 0.0
        %3084 = vmatpush2.xpose.msra.mxu0 0.0
        %3085 = vmatprep.mubr.f32.mxu0 0.0
        %3086 = vmatmul.mubr.f32.gmra.mxu0 %v3007
        %v3087 = vpop.f32.mrf.mxu0
        %v3088 = vadd.f32 0.0, %v3087
        %v3089 = vpop.f32.mrf.mxu0
        %3090 = vmatprep.mubr.f32.mxu0 0.0
        %3091 = vmatmul.mubr.f32.gmra.mxu0 %v3010
        %v3092 = vpop.f32.mrf.mxu0
        %v3093 = vadd.f32 0.0, %v3092
        %v3094 = vpop.f32.mrf.mxu0
        %3095 = vmatprep.mubr.f32.mxu0 0.0
        %3096 = vmatmul.mubr.f32.gmra.mxu0 %v3013
        %v3097 = vpop.f32.mrf.mxu0
        %v3098 = vadd.f32 0.0, %v3097
        %v3099 = vpop.f32.mrf.mxu0
        %3100 = vmatprep.mubr.f32.mxu0 0.0
        %3101 = vmatmul.mubr.f32.gmra.mxu0 %v3016
        %v3102 = vpop.f32.mrf.mxu0
        %v3103 = vadd.f32 0.0, %v3102
        %v3104 = vpop.f32.mrf.mxu0
        %3105 = vdwg.mxu0
        %3106 = vxpose.xlu0.b32.start [1/16] %v2788, 128
        %3107 = vxpose.xlu0.b32.cont [2/16] %v2793, 128
        %3108 = vxpose.xlu0.b32.cont [3/16] %v2798, 128
        %3109 = vxpose.xlu0.b32.cont [4/16] %v2803, 128
        %3110 = vxpose.xlu0.b32.cont [5/16] 0.0, 128
        %3111 = vxpose.xlu0.b32.cont [6/16] 0.0, 128
        %3112 = vxpose.xlu0.b32.cont [7/16] 0.0, 128
        %3113 = vxpose.xlu0.b32.cont [8/16] 0.0, 128
        %3114 = vxpose.xlu0.b32.cont [9/16] 0.0, 128
        %3115 = vxpose.xlu0.b32.cont [10/16] 0.0, 128
        %3116 = vxpose.xlu0.b32.cont [11/16] 0.0, 128
        %3117 = vxpose.xlu0.b32.cont [12/16] 0.0, 128
        %3118 = vxpose.xlu0.b32.cont [13/16] 0.0, 128
        %3119 = vxpose.xlu0.b32.cont [14/16] 0.0, 128
        %3120 = vxpose.xlu0.b32.cont [15/16] 0.0, 128
        %3121 = vxpose.xlu0.b32.end [16/16] 0.0, 128
        %v3122 = vpop.trf.xlu0
        %v3123 = vpop.trf.xlu0
        %v3124 = vpop.trf.xlu0
        %v3125 = vpop.trf.xlu0
        %v3126 = vpop.trf.xlu0
        %v3127 = vpop.trf.xlu0
        %v3128 = vpop.trf.xlu0
        %v3129 = vpop.trf.xlu0
        %v3130 = vpop.trf.xlu0
        %v3131 = vpop.trf.xlu0
        %v3132 = vpop.trf.xlu0
        %v3133 = vpop.trf.xlu0
        %v3134 = vpop.trf.xlu0
        %v3135 = vpop.trf.xlu0
        %v3136 = vpop.trf.xlu0
        %v3137 = vpop.trf.xlu0
        %3138 = vxpose.xlu0.b32.start [1/16] %v2888, 128
        %3139 = vxpose.xlu0.b32.cont [2/16] %v2893, 128
        %3140 = vxpose.xlu0.b32.cont [3/16] %v2898, 128
        %3141 = vxpose.xlu0.b32.cont [4/16] %v2903, 128
        %3142 = vxpose.xlu0.b32.cont [5/16] 0.0, 128
        %3143 = vxpose.xlu0.b32.cont [6/16] 0.0, 128
        %3144 = vxpose.xlu0.b32.cont [7/16] 0.0, 128
        %3145 = vxpose.xlu0.b32.cont [8/16] 0.0, 128
        %3146 = vxpose.xlu0.b32.cont [9/16] 0.0, 128
        %3147 = vxpose.xlu0.b32.cont [10/16] 0.0, 128
        %3148 = vxpose.xlu0.b32.cont [11/16] 0.0, 128
        %3149 = vxpose.xlu0.b32.cont [12/16] 0.0, 128
        %3150 = vxpose.xlu0.b32.cont [13/16] 0.0, 128
        %3151 = vxpose.xlu0.b32.cont [14/16] 0.0, 128
        %3152 = vxpose.xlu0.b32.cont [15/16] 0.0, 128
        %3153 = vxpose.xlu0.b32.end [16/16] 0.0, 128
        %v3154 = vpop.trf.xlu0
        %v3155 = vpop.trf.xlu0
        %v3156 = vpop.trf.xlu0
        %v3157 = vpop.trf.xlu0
        %v3158 = vpop.trf.xlu0
        %v3159 = vpop.trf.xlu0
        %v3160 = vpop.trf.xlu0
        %v3161 = vpop.trf.xlu0
        %v3162 = vpop.trf.xlu0
        %v3163 = vpop.trf.xlu0
        %v3164 = vpop.trf.xlu0
        %v3165 = vpop.trf.xlu0
        %v3166 = vpop.trf.xlu0
        %v3167 = vpop.trf.xlu0
        %v3168 = vpop.trf.xlu0
        %v3169 = vpop.trf.xlu0
        %3170 = vxpose.xlu0.b32.start [1/16] %v2988, 128
        %3171 = vxpose.xlu0.b32.cont [2/16] %v2993, 128
        %3172 = vxpose.xlu0.b32.cont [3/16] %v2998, 128
        %3173 = vxpose.xlu0.b32.cont [4/16] %v3003, 128
        %3174 = vxpose.xlu0.b32.cont [5/16] 0.0, 128
        %3175 = vxpose.xlu0.b32.cont [6/16] 0.0, 128
        %3176 = vxpose.xlu0.b32.cont [7/16] 0.0, 128
        %3177 = vxpose.xlu0.b32.cont [8/16] 0.0, 128
        %3178 = vxpose.xlu0.b32.cont [9/16] 0.0, 128
        %3179 = vxpose.xlu0.b32.cont [10/16] 0.0, 128
        %3180 = vxpose.xlu0.b32.cont [11/16] 0.0, 128
        %3181 = vxpose.xlu0.b32.cont [12/16] 0.0, 128
        %3182 = vxpose.xlu0.b32.cont [13/16] 0.0, 128
        %3183 = vxpose.xlu0.b32.cont [14/16] 0.0, 128
        %3184 = vxpose.xlu0.b32.cont [15/16] 0.0, 128
        %3185 = vxpose.xlu0.b32.end [16/16] 0.0, 128
        %v3186 = vpop.trf.xlu0
        %v3187 = vpop.trf.xlu0
        %v3188 = vpop.trf.xlu0
        %v3189 = vpop.trf.xlu0
        %v3190 = vpop.trf.xlu0
        %v3191 = vpop.trf.xlu0
        %v3192 = vpop.trf.xlu0
        %v3193 = vpop.trf.xlu0
        %v3194 = vpop.trf.xlu0
        %v3195 = vpop.trf.xlu0
        %v3196 = vpop.trf.xlu0
        %v3197 = vpop.trf.xlu0
        %v3198 = vpop.trf.xlu0
        %v3199 = vpop.trf.xlu0
        %v3200 = vpop.trf.xlu0
        %v3201 = vpop.trf.xlu0
        %3202 = vxpose.xlu0.b32.start [1/16] %v3088, 128
        %3203 = vxpose.xlu0.b32.cont [2/16] %v3093, 128
        %3204 = vxpose.xlu0.b32.cont [3/16] %v3098, 128
        %3205 = vxpose.xlu0.b32.cont [4/16] %v3103, 128
        %3206 = vxpose.xlu0.b32.cont [5/16] 0.0, 128
        %3207 = vxpose.xlu0.b32.cont [6/16] 0.0, 128
        %3208 = vxpose.xlu0.b32.cont [7/16] 0.0, 128
        %3209 = vxpose.xlu0.b32.cont [8/16] 0.0, 128
        %3210 = vxpose.xlu0.b32.cont [9/16] 0.0, 128
        %3211 = vxpose.xlu0.b32.cont [10/16] 0.0, 128
        %3212 = vxpose.xlu0.b32.cont [11/16] 0.0, 128
        %3213 = vxpose.xlu0.b32.cont [12/16] 0.0, 128
        %3214 = vxpose.xlu0.b32.cont [13/16] 0.0, 128
        %3215 = vxpose.xlu0.b32.cont [14/16] 0.0, 128
        %3216 = vxpose.xlu0.b32.cont [15/16] 0.0, 128
        %3217 = vxpose.xlu0.b32.end [16/16] 0.0, 128
        %v3218 = vpop.trf.xlu0
        %v3219 = vpop.trf.xlu0
        %v3220 = vpop.trf.xlu0
        %v3221 = vpop.trf.xlu0
        %v3222 = vpop.trf.xlu0
        %v3223 = vpop.trf.xlu0
        %v3224 = vpop.trf.xlu0
        %v3225 = vpop.trf.xlu0
        %v3226 = vpop.trf.xlu0
        %v3227 = vpop.trf.xlu0
        %v3228 = vpop.trf.xlu0
        %v3229 = vpop.trf.xlu0
        %v3230 = vpop.trf.xlu0
        %v3231 = vpop.trf.xlu0
        %v3232 = vpop.trf.xlu0
        %v3233 = vpop.trf.xlu0
        %v3234 = vcombine.low %v3122, %v3186
        %v3235 = vcombine.high %v3122, %v3186
        %v3237 = vunpack.c.l.s4 1983009808
        %v3238 = vunpack.c.0.s8 %v3237
        %v3239 = vlaneseq
        %v3240 = vshrl.u32 %v3239, 7
        %v3241 = vsub.s32 %v3238, %v3240
        %v3242 = vrot.slane %v3234, %v3241
        %v3244 = vunpack.c.l.s4 1983009808
        %v3245 = vunpack.c.0.s8 %v3244
        %v3246 = vlaneseq
        %v3247 = vshrl.u32 %v3246, 7
        %v3248 = vsub.s32 %v3245, %v3247
        %v3249 = vrot.slane %v3235, %v3248
        %v3250 = vcombine.low %v3154, %v3218
        %v3251 = vcombine.high %v3154, %v3218
        %v3253 = vunpack.c.l.s4 1983009808
        %v3254 = vunpack.c.0.s8 %v3253
        %v3255 = vlaneseq
        %v3256 = vshrl.u32 %v3255, 7
        %v3257 = vsub.s32 %v3254, %v3256
        %v3258 = vrot.slane %v3250, %v3257
        %v3260 = vunpack.c.l.s4 1983009808
        %v3261 = vunpack.c.0.s8 %v3260
        %v3262 = vlaneseq
        %v3263 = vshrl.u32 %v3262, 7
        %v3264 = vsub.s32 %v3261, %v3263
        %v3265 = vrot.slane %v3251, %v3264
        %v3266 = vcombine.low %v3242, %v3258
        %v3267 = vcombine.high %v3242, %v3258
        %v3269 = vunpack.c.l.s4 1934713408
        %v3270 = vunpack.c.0.s8 %v3269
        %v3271 = vlaneseq
        %v3272 = vshrl.u32 %v3271, 7
        %v3273 = vsub.s32 %v3270, %v3272
        %v3274 = vrot.slane %v3266, %v3273
        %v3276 = vunpack.c.l.s4 1934713408
        %v3277 = vunpack.c.0.s8 %v3276
        %v3278 = vlaneseq
        %v3279 = vshrl.u32 %v3278, 7
        %v3280 = vsub.s32 %v3277, %v3279
        %v3281 = vrot.slane %v3267, %v3280
        %v3282 = vcombine.low %v3249, %v3265
        %v3283 = vcombine.high %v3249, %v3265
        %v3285 = vunpack.c.l.s4 1934713408
        %v3286 = vunpack.c.0.s8 %v3285
        %v3287 = vlaneseq
        %v3288 = vshrl.u32 %v3287, 7
        %v3289 = vsub.s32 %v3286, %v3288
        %v3290 = vrot.slane %v3282, %v3289
        %v3292 = vunpack.c.l.s4 1934713408
        %v3293 = vunpack.c.0.s8 %v3292
        %v3294 = vlaneseq
        %v3295 = vshrl.u32 %v3294, 7
        %v3296 = vsub.s32 %v3293, %v3295
        %v3297 = vrot.slane %v3283, %v3296
        %v3298 = vcombine.high %v3274, 0.0
        %v3299 = vcombine.high %v3281, 0.0
        %v3300 = vcombine.high %v3290, 0.0
        %v3301 = vcombine.high %v3297, 0.0
        %v3302 = vcombine.low %v3274, %v3281
        %v3304 = vunpack.c.l.s4 1983009808
        %v3305 = vunpack.c.0.s8 %v3304
        %v3306 = vlaneseq
        %v3307 = vshrl.u32 %v3306, 7
        %v3308 = vsub.s32 %v3305, %v3307
        %v3309 = vrot.slane %v3302, %v3308
        %v3310 = vcombine.low %v3298, %v3299
        %v3312 = vunpack.c.l.s4 1983009808
        %v3313 = vunpack.c.0.s8 %v3312
        %v3314 = vlaneseq
        %v3315 = vshrl.u32 %v3314, 7
        %v3316 = vsub.s32 %v3313, %v3315
        %v3317 = vrot.slane %v3310, %v3316
        %v3318 = vcombine.low %v3290, %v3297
        %v3320 = vunpack.c.l.s4 1983009808
        %v3321 = vunpack.c.0.s8 %v3320
        %v3322 = vlaneseq
        %v3323 = vshrl.u32 %v3322, 7
        %v3324 = vsub.s32 %v3321, %v3323
        %v3325 = vrot.slane %v3318, %v3324
        %v3326 = vcombine.low %v3300, %v3301
        %v3328 = vunpack.c.l.s4 1983009808
        %v3329 = vunpack.c.0.s8 %v3328
        %v3330 = vlaneseq
        %v3331 = vshrl.u32 %v3330, 7
        %v3332 = vsub.s32 %v3329, %v3331
        %v3333 = vrot.slane %v3326, %v3332
        %v3334 = vcombine.low %v3309, %v3317
        %v3335 = vcombine.high %v3309, %v3317
        %v3337 = vunpack.c.l.s4 1934713408
        %v3338 = vunpack.c.0.s8 %v3337
        %v3339 = vlaneseq
        %v3340 = vshrl.u32 %v3339, 7
        %v3341 = vsub.s32 %v3338, %v3340
        %v3342 = vrot.slane %v3334, %v3341
        %v3344 = vunpack.c.l.s4 1934713408
        %v3345 = vunpack.c.0.s8 %v3344
        %v3346 = vlaneseq
        %v3347 = vshrl.u32 %v3346, 7
        %v3348 = vsub.s32 %v3345, %v3347
        %v3349 = vrot.slane %v3335, %v3348
        %v3350 = vcombine.low %v3325, %v3333
        %v3351 = vcombine.high %v3325, %v3333
        %v3353 = vunpack.c.l.s4 1934713408
        %v3354 = vunpack.c.0.s8 %v3353
        %v3355 = vlaneseq
        %v3356 = vshrl.u32 %v3355, 7
        %v3357 = vsub.s32 %v3354, %v3356
        %v3358 = vrot.slane %v3350, %v3357
        %v3360 = vunpack.c.l.s4 1934713408
        %v3361 = vunpack.c.0.s8 %v3360
        %v3362 = vlaneseq
        %v3363 = vshrl.u32 %v3362, 7
        %v3364 = vsub.s32 %v3361, %v3363
        %v3365 = vrot.slane %v3351, %v3364
        %v3366 = vcombine.low %v3342, %v3358
        %v3367 = vcombine.high %v3342, %v3358
        %v3368 = vcombine.low %v3349, %v3365
        %v3369 = vcombine.high %v3349, %v3365
        %3371 = vrot.lane.b32.xlu0 %v3367, 32
        %v3372 = vpop.permute.xlu0 %3371
        %3375 = vrot.lane.b32.xlu0 %v3368, 64
        %v3376 = vpop.permute.xlu0 %3375
        %3379 = vrot.lane.b32.xlu0 %v3369, 96
        %v3380 = vpop.permute.xlu0 %3379
        %v3382 = vsel %vm928, %v3366, %v3372
        %v3383 = vsel %vm2077, %v3382, %v3376
        %v3384 = vsel %vm2079, %v3383, %v3380
        %v3385 = vld [vmem:[%s477] sm:$0xff]
        %v3386 = vld [vmem:[%s477 + $0x8] sm:$0xff]
        %v3387 = vld [vmem:[%s477 + $0x10] sm:$0xff]
        %v3388 = vld [vmem:[%s477 + $0x18] sm:$0xff]
        %v3389 = vld [vmem:[%s477 + $0x20] sm:$0xff]
        %v3390 = vld [vmem:[%s477 + $0x28] sm:$0xff]
        %v3391 = vld [vmem:[%s477 + $0x30] sm:$0xff]
        %v3392 = vld [vmem:[%s477 + $0x38] sm:$0xff]
        %v3393 = vld [vmem:[%s477 + $0x40] sm:$0xff]
        %v3394 = vld [vmem:[%s477 + $0x48] sm:$0xff]
        %v3395 = vld [vmem:[%s477 + $0x50] sm:$0xff]
        %v3396 = vld [vmem:[%s477 + $0x58] sm:$0xff]
        %v3397 = vld [vmem:[%s477 + $0x60] sm:$0xff]
        %v3398 = vld [vmem:[%s477 + $0x68] sm:$0xff]
        %v3399 = vld [vmem:[%s477 + $0x70] sm:$0xff]
        %v3400 = vld [vmem:[%s477 + $0x78] sm:$0xff]
        %3401 = vmatprep.subr.mxu0 0.0
        %3402 = vmatpush1.msra.mxu0 %v3400
        %3403 = vmatprep.subr.mxu0 0.0
        %3404 = vmatpush1.msra.mxu0 %v3399
        %3405 = vmatprep.subr.mxu0 0.0
        %3406 = vmatpush1.msra.mxu0 %v3398
        %3407 = vmatprep.subr.mxu0 0.0
        %3408 = vmatpush1.msra.mxu0 %v3397
        %3409 = vmatprep.subr.mxu0 0.0
        %3410 = vmatpush1.msra.mxu0 %v3396
        %3411 = vmatprep.subr.mxu0 0.0
        %3412 = vmatpush1.msra.mxu0 %v3395
        %3413 = vmatprep.subr.mxu0 0.0
        %3414 = vmatpush1.msra.mxu0 %v3394
        %3415 = vmatprep.subr.mxu0 0.0
        %3416 = vmatpush1.msra.mxu0 %v3393
        %3417 = vmatprep.subr.mxu0 0.0
        %3418 = vmatpush1.msra.mxu0 %v3392
        %3419 = vmatprep.subr.mxu0 0.0
        %3420 = vmatpush1.msra.mxu0 %v3391
        %3421 = vmatprep.subr.mxu0 0.0
        %3422 = vmatpush1.msra.mxu0 %v3390
        %3423 = vmatprep.subr.mxu0 0.0
        %3424 = vmatpush1.msra.mxu0 %v3389
        %3425 = vmatprep.subr.mxu0 0.0
        %3426 = vmatpush1.msra.mxu0 %v3388
        %3427 = vmatprep.subr.mxu0 0.0
        %3428 = vmatpush1.msra.mxu0 %v3387
        %3429 = vmatprep.subr.mxu0 0.0
        %3430 = vmatpush1.msra.mxu0 %v3386
        %3431 = vmatprep.subr.mxu0 0.0
        %3432 = vmatpush1.msra.mxu0 %v3385
        %3433 = vmatprep.subr.mxu0 0.0
        %3434 = vmatpush2.msra.mxu0 0.0
        %3435 = vmatprep.subr.mxu0 0.0
        %3436 = vmatpush2.msra.mxu0 0.0
        %3437 = vmatprep.subr.mxu0 0.0
        %3438 = vmatpush2.msra.mxu0 0.0
        %3439 = vmatprep.subr.mxu0 0.0
        %3440 = vmatpush2.msra.mxu0 0.0
        %3441 = vmatprep.subr.mxu0 0.0
        %3442 = vmatpush2.msra.mxu0 0.0
        %3443 = vmatprep.subr.mxu0 0.0
        %3444 = vmatpush2.msra.mxu0 0.0
        %3445 = vmatprep.subr.mxu0 0.0
        %3446 = vmatpush2.msra.mxu0 0.0
        %3447 = vmatprep.subr.mxu0 0.0
        %3448 = vmatpush2.msra.mxu0 0.0
        %3449 = vmatprep.subr.mxu0 0.0
        %3450 = vmatpush2.msra.mxu0 0.0
        %3451 = vmatprep.subr.mxu0 0.0
        %3452 = vmatpush2.msra.mxu0 0.0
        %3453 = vmatprep.subr.mxu0 0.0
        %3454 = vmatpush2.msra.mxu0 0.0
        %3455 = vmatprep.subr.mxu0 0.0
        %3456 = vmatpush2.msra.mxu0 0.0
        %3457 = vmatprep.subr.mxu0 0.0
        %3458 = vmatpush2.msra.mxu0 0.0
        %3459 = vmatprep.subr.mxu0 0.0
        %3460 = vmatpush2.msra.mxu0 0.0
        %3461 = vmatprep.subr.mxu0 0.0
        %3462 = vmatpush2.msra.mxu0 0.0
        %3463 = vmatprep.subr.mxu0 0.0
        %3464 = vmatpush2.msra.mxu0 0.0
        %3465 = vmatprep.mubr.f32.mxu0 0.0
        %3466 = vmatmul.mubr.f32.gmra.mxu0 %v2080
        %v3467 = vpop.f32.mrf.mxu0
        %v3468 = vadd.f32 0.0, %v3467
        %v3469 = vpop.f32.mrf.mxu0
        %3470 = vmatprep.mubr.f32.mxu0 0.0
        %3471 = vmatmul.mubr.f32.gmra.mxu0 %v3384
        %v3472 = vpop.f32.mrf.mxu0
        %v3473 = vadd.f32 0.0, %v3472
        %v3474 = vpop.f32.mrf.mxu0
        %3475 = vdwg.mxu0
        %v3476 = vadd.f32 %v499, %v3468
        %v3477 = vadd.f32 %v500, %v3473
        %v3478 = vlaneseq
        %v3479 = vshrl.u32 %v3478, 7
        %v3480 = vsub.s32 0, %v3479
        %v3481 = vrot.slane %v501, %v3480
        %v3482 = vadd.f32 %v3476, %v3481
        %v3483 = vadd.f32 %v3477, %v3481
        %3484 = vadd.xlane.f32.xlu0 %v3482
        %v3485 = vpop.xlane.xlu0 %3484
        %3486 = vadd.xlane.f32.xlu0 %v3483
        %v3487 = vpop.xlane.xlu0 %3486
        %v3488 = vmul.f32 %v3485, %v506
        %v3489 = vmul.f32 %v3487, %v506
        %v3490 = vsub.f32 %v3482, %v3488
        %v3491 = vsub.f32 %v3483, %v3489
        %v3492 = vmul.f32 %v3490, %v3490
        %v3493 = vmul.f32 %v3491, %v3491
        %3494 = vadd.xlane.f32.xlu0 %v3492
        %v3495 = vpop.xlane.xlu0 %3494
        %3496 = vadd.xlane.f32.xlu0 %v3493
        %v3497 = vpop.xlane.xlu0 %3496
        %v3498 = vmul.f32 %v3495, %v517
        %v3499 = vmul.f32 %v3497, %v517
        %v3500 = vrsqrt.pop %v3498
        %v3501 = vmul.f32 %v3498, %v3500
        %vm3502 = vcmp.eq.f32.partialorder %v3498, inf
        %v3503 = vsel %vm3502, %v3498, %v3501
        %vm3504 = vcmp.eq.f32.partialorder %v3498, 0.0
        %v3505 = vand.u32 %v3498, 2147483648
        %v3506 = vsel %vm3504, %v3505, %v3503
        %v3507 = vrsqrt.pop %v3499
        %v3508 = vmul.f32 %v3499, %v3507
        %vm3509 = vcmp.eq.f32.partialorder %v3499, inf
        %v3510 = vsel %vm3509, %v3499, %v3508
        %vm3511 = vcmp.eq.f32.partialorder %v3499, 0.0
        %v3512 = vand.u32 %v3499, 2147483648
        %v3513 = vsel %vm3511, %v3512, %v3510
        %v3514 = vadd.f32 %v3506, 1e-06
        %v3515 = vadd.f32 %v3513, 1e-06
        %v3516 = vrcp.pop %v3514
        %v3517 = vrcp.pop %v3515
        %v3518 = vlaneseq
        %v3519 = vshrl.u32 %v3518, 7
        %v3520 = vsub.s32 4, %v3519
        %v3521 = vrot.slane %v501, %v3520
        %v3522 = vmul.f32 %v3521, %v3490
        %v3523 = vmul.f32 %v3521, %v3491
        %v3524 = vmul.f32 %v3522, %v3516
        %v3525 = vmul.f32 %v3523, %v3517
        %v3526 = vlaneseq
        %v3527 = vshrl.u32 %v3526, 7
        %v3528 = vsub.s32 5, %v3527
        %v3529 = vrot.slane %v501, %v3528
        %v3530 = vadd.f32 %v3524, %v3529
        %v3531 = vadd.f32 %v3525, %v3529
        %v3532 = vld [vmem:[%s482] sm:$0xff]
        %v3533 = vld [vmem:[%s482 + $0x8] sm:$0xff]
        %v3534 = vld [vmem:[%s482 + $0x10] sm:$0xff]
        %v3535 = vld [vmem:[%s482 + $0x18] sm:$0xff]
        %v3536 = vld [vmem:[%s482 + $0x20] sm:$0xff]
        %v3537 = vld [vmem:[%s482 + $0x28] sm:$0xff]
        %v3538 = vld [vmem:[%s482 + $0x30] sm:$0xff]
        %v3539 = vld [vmem:[%s482 + $0x38] sm:$0xff]
        %v3540 = vld [vmem:[%s482 + $0x40] sm:$0xff]
        %v3541 = vld [vmem:[%s482 + $0x48] sm:$0xff]
        %v3542 = vld [vmem:[%s482 + $0x50] sm:$0xff]
        %v3543 = vld [vmem:[%s482 + $0x58] sm:$0xff]
        %v3544 = vld [vmem:[%s482 + $0x60] sm:$0xff]
        %v3545 = vld [vmem:[%s482 + $0x68] sm:$0xff]
        %v3546 = vld [vmem:[%s482 + $0x70] sm:$0xff]
        %v3547 = vld [vmem:[%s482 + $0x78] sm:$0xff]
        %v3548 = vld [vmem:[%s485] sm:$0x1]
        %v3550 = vlaneseq
        %v3551 = vshrl.u32 %v3550, 7
        %v3552 = vsub.s32 0, %v3551
        %v3553 = vrot.slane %v3548, %v3552
        %3555 = vmatprep.subr.mxu0 0.0
        %3556 = vmatpush1.msra.mxu0 %v3547
        %3557 = vmatprep.subr.mxu0 0.0
        %3558 = vmatpush1.msra.mxu0 %v3546
        %3559 = vmatprep.subr.mxu0 0.0
        %3560 = vmatpush1.msra.mxu0 %v3545
        %3561 = vmatprep.subr.mxu0 0.0
        %3562 = vmatpush1.msra.mxu0 %v3544
        %3563 = vmatprep.subr.mxu0 0.0
        %3564 = vmatpush1.msra.mxu0 %v3543
        %3565 = vmatprep.subr.mxu0 0.0
        %3566 = vmatpush1.msra.mxu0 %v3542
        %3567 = vmatprep.subr.mxu0 0.0
        %3568 = vmatpush1.msra.mxu0 %v3541
        %3569 = vmatprep.subr.mxu0 0.0
        %3570 = vmatpush1.msra.mxu0 %v3540
        %3571 = vmatprep.subr.mxu0 0.0
        %3572 = vmatpush1.msra.mxu0 %v3539
        %3573 = vmatprep.subr.mxu0 0.0
        %3574 = vmatpush1.msra.mxu0 %v3538
        %3575 = vmatprep.subr.mxu0 0.0
        %3576 = vmatpush1.msra.mxu0 %v3537
        %3577 = vmatprep.subr.mxu0 0.0
        %3578 = vmatpush1.msra.mxu0 %v3536
        %3579 = vmatprep.subr.mxu0 0.0
        %3580 = vmatpush1.msra.mxu0 %v3535
        %3581 = vmatprep.subr.mxu0 0.0
        %3582 = vmatpush1.msra.mxu0 %v3534
        %3583 = vmatprep.subr.mxu0 0.0
        %3584 = vmatpush1.msra.mxu0 %v3533
        %3585 = vmatprep.subr.mxu0 0.0
        %3586 = vmatpush1.msra.mxu0 %v3532
        %3587 = vmatprep.subr.mxu0 0.0
        %3588 = vmatpush2.msra.mxu0 0.0
        %3589 = vmatprep.subr.mxu0 0.0
        %3590 = vmatpush2.msra.mxu0 0.0
        %3591 = vmatprep.subr.mxu0 0.0
        %3592 = vmatpush2.msra.mxu0 0.0
        %3593 = vmatprep.subr.mxu0 0.0
        %3594 = vmatpush2.msra.mxu0 0.0
        %3595 = vmatprep.subr.mxu0 0.0
        %3596 = vmatpush2.msra.mxu0 0.0
        %3597 = vmatprep.subr.mxu0 0.0
        %3598 = vmatpush2.msra.mxu0 0.0
        %3599 = vmatprep.subr.mxu0 0.0
        %3600 = vmatpush2.msra.mxu0 0.0
        %3601 = vmatprep.subr.mxu0 0.0
        %3602 = vmatpush2.msra.mxu0 0.0
        %3603 = vmatprep.subr.mxu0 0.0
        %3604 = vmatpush2.msra.mxu0 0.0
        %3605 = vmatprep.subr.mxu0 0.0
        %3606 = vmatpush2.msra.mxu0 0.0
        %3607 = vmatprep.subr.mxu0 0.0
        %3608 = vmatpush2.msra.mxu0 0.0
        %3609 = vmatprep.subr.mxu0 0.0
        %3610 = vmatpush2.msra.mxu0 0.0
        %3611 = vmatprep.subr.mxu0 0.0
        %3612 = vmatpush2.msra.mxu0 0.0
        %3613 = vmatprep.subr.mxu0 0.0
        %3614 = vmatpush2.msra.mxu0 0.0
        %3615 = vmatprep.subr.mxu0 0.0
        %3616 = vmatpush2.msra.mxu0 0.0
        %3617 = vmatprep.subr.mxu0 0.0
        %3618 = vmatpush2.msra.mxu0 0.0
        %3619 = vmatprep.mubr.f32.mxu0 0.0
        %3620 = vmatmul.mubr.f32.gmra.mxu0 %v3530
        %v3621 = vpop.f32.mrf.mxu0
        %v3622 = vadd.f32 %v3553, %v3621
        %v3623 = vpop.f32.mrf.mxu0
        %3624 = vmatprep.mubr.f32.mxu0 0.0
        %3625 = vmatmul.mubr.f32.gmra.mxu0 %v3531
        %v3626 = vpop.f32.mrf.mxu0
        %v3627 = vadd.f32 %v3553, %v3626
        %v3628 = vpop.f32.mrf.mxu0
        %3629 = vdwg.mxu0
        %v3630 = vmax.f32 %v3622, 0.0
        %v3631 = vmax.f32 %v3627, 0.0
        %v3632 = vld [vmem:[%s490] sm:$0xff]
        %v3633 = vld [vmem:[%s490 + $0x8] sm:$0xff]
        %v3634 = vld [vmem:[%s490 + $0x10] sm:$0xff]
        %v3635 = vld [vmem:[%s490 + $0x18] sm:$0xff]
        %v3636 = vld [vmem:[%s490 + $0x20] sm:$0xff]
        %v3637 = vld [vmem:[%s490 + $0x28] sm:$0xff]
        %v3638 = vld [vmem:[%s490 + $0x30] sm:$0xff]
        %v3639 = vld [vmem:[%s490 + $0x38] sm:$0xff]
        %v3641 = vsel %vm2077, %v3630, 0
        %v3644 = vsel %vm2077, %v3631, 0
        %3646 = vmatprep.subr.mxu0 0.0
        %3647 = vmatpush1.msra.mxu0 0.0
        %3648 = vmatprep.subr.mxu0 0.0
        %3649 = vmatpush1.msra.mxu0 0.0
        %3650 = vmatprep.subr.mxu0 0.0
        %3651 = vmatpush1.msra.mxu0 0.0
        %3652 = vmatprep.subr.mxu0 0.0
        %3653 = vmatpush1.msra.mxu0 0.0
        %3654 = vmatprep.subr.mxu0 0.0
        %3655 = vmatpush1.msra.mxu0 0.0
        %3656 = vmatprep.subr.mxu0 0.0
        %3657 = vmatpush1.msra.mxu0 0.0
        %3658 = vmatprep.subr.mxu0 0.0
        %3659 = vmatpush1.msra.mxu0 0.0
        %3660 = vmatprep.subr.mxu0 0.0
        %3661 = vmatpush1.msra.mxu0 0.0
        %3662 = vmatprep.subr.mxu0 0.0
        %3663 = vmatpush1.msra.mxu0 %v3639
        %3664 = vmatprep.subr.mxu0 0.0
        %3665 = vmatpush1.msra.mxu0 %v3638
        %3666 = vmatprep.subr.mxu0 0.0
        %3667 = vmatpush1.msra.mxu0 %v3637
        %3668 = vmatprep.subr.mxu0 0.0
        %3669 = vmatpush1.msra.mxu0 %v3636
        %3670 = vmatprep.subr.mxu0 0.0
        %3671 = vmatpush1.msra.mxu0 %v3635
        %3672 = vmatprep.subr.mxu0 0.0
        %3673 = vmatpush1.msra.mxu0 %v3634
        %3674 = vmatprep.subr.mxu0 0.0
        %3675 = vmatpush1.msra.mxu0 %v3633
        %3676 = vmatprep.subr.mxu0 0.0
        %3677 = vmatpush1.msra.mxu0 %v3632
        %3678 = vmatprep.subr.mxu0 0.0
        %3679 = vmatpush2.msra.mxu0 0.0
        %3680 = vmatprep.subr.mxu0 0.0
        %3681 = vmatpush2.msra.mxu0 0.0
        %3682 = vmatprep.subr.mxu0 0.0
        %3683 = vmatpush2.msra.mxu0 0.0
        %3684 = vmatprep.subr.mxu0 0.0
        %3685 = vmatpush2.msra.mxu0 0.0
        %3686 = vmatprep.subr.mxu0 0.0
        %3687 = vmatpush2.msra.mxu0 0.0
        %3688 = vmatprep.subr.mxu0 0.0
        %3689 = vmatpush2.msra.mxu0 0.0
        %3690 = vmatprep.subr.mxu0 0.0
        %3691 = vmatpush2.msra.mxu0 0.0
        %3692 = vmatprep.subr.mxu0 0.0
        %3693 = vmatpush2.msra.mxu0 0.0
        %3694 = vmatprep.subr.mxu0 0.0
        %3695 = vmatpush2.msra.mxu0 0.0
        %3696 = vmatprep.subr.mxu0 0.0
        %3697 = vmatpush2.msra.mxu0 0.0
        %3698 = vmatprep.subr.mxu0 0.0
        %3699 = vmatpush2.msra.mxu0 0.0
        %3700 = vmatprep.subr.mxu0 0.0
        %3701 = vmatpush2.msra.mxu0 0.0
        %3702 = vmatprep.subr.mxu0 0.0
        %3703 = vmatpush2.msra.mxu0 0.0
        %3704 = vmatprep.subr.mxu0 0.0
        %3705 = vmatpush2.msra.mxu0 0.0
        %3706 = vmatprep.subr.mxu0 0.0
        %3707 = vmatpush2.msra.mxu0 0.0
        %3708 = vmatprep.subr.mxu0 0.0
        %3709 = vmatpush2.msra.mxu0 0.0
        %3710 = vmatprep.mubr.f32.mxu0 0.0
        %3711 = vmatmul.mubr.f32.gmra.mxu0 %v3641
        %v3712 = vpop.f32.mrf.mxu0
        %v3713 = vadd.f32 0.0, %v3712
        %v3714 = vpop.f32.mrf.mxu0
        %3715 = vmatprep.mubr.f32.mxu0 0.0
        %3716 = vmatmul.mubr.f32.gmra.mxu0 %v3644
        %v3717 = vpop.f32.mrf.mxu0
        %v3718 = vadd.f32 0.0, %v3717
        %v3719 = vpop.f32.mrf.mxu0
        %3720 = vdwg.mxu0
        %v3721 = vadd.f32 %v3482, %v3713
        %v3722 = vadd.f32 %v3483, %v3718
        %v3723 = vlaneseq
        %v3724 = vshrl.u32 %v3723, 7
        %v3725 = vsub.s32 1, %v3724
        %v3726 = vrot.slane %v501, %v3725
        %v3727 = vadd.f32 %v3721, %v3726
        %v3728 = vadd.f32 %v3722, %v3726
        %p3729 = scmp.lt.s32.totalorder %s23, 1
        // Predicated region
        $region77: #{tpu_custom_call.1} parent=55 // pred_check
          %p3730 = pneg %p3729
        $region78: #{tpu_custom_call.1} parent=55 // pred_check_branch
          %3732 = sbr.rel (%p3730) target = $region80
        $region79: #{tpu_custom_call.1} parent=55 // pred_region
          %3733 = vst [vmem:[#allocation9] sm:$0xff] %v3727
          %3734 = vst [vmem:[#allocation9 + $0x8] sm:$0xff] %v3728
        $region80: #{tpu_custom_call.1} parent=55 // pred_fallthru
          _
        %p3735 = scmp.eq.s32.totalorder %s23, 1
        // Predicated region
        $region81: #{tpu_custom_call.1} parent=55 // pred_check
          %p3736 = pneg %p3735
        $region82: #{tpu_custom_call.1} parent=55 // pred_check_branch
          %3738 = sbr.rel (%p3736) target = $region84
        $region83: #{tpu_custom_call.1} parent=55 // pred_region
          %3739 = vadd.xlane.f32.xlu0 %v3727
          %v3740 = vpop.xlane.xlu0 %3739
          %3741 = vadd.xlane.f32.xlu0 %v3728
          %v3742 = vpop.xlane.xlu0 %3741
          %v3743 = vmul.f32 %v3740, %v506
          %v3744 = vmul.f32 %v3742, %v506
          %v3745 = vsub.f32 %v3727, %v3743
          %v3746 = vsub.f32 %v3728, %v3744
          %v3747 = vmul.f32 %v3745, %v3745
          %v3748 = vmul.f32 %v3746, %v3746
          %3749 = vadd.xlane.f32.xlu0 %v3747
          %v3750 = vpop.xlane.xlu0 %3749
          %3751 = vadd.xlane.f32.xlu0 %v3748
          %v3752 = vpop.xlane.xlu0 %3751
          %v3753 = vmul.f32 %v3750, %v517
          %v3754 = vmul.f32 %v3752, %v517
          %v3755 = vrsqrt.pop %v3753
          %v3756 = vmul.f32 %v3753, %v3755
          %vm3757 = vcmp.eq.f32.partialorder %v3753, inf
          %v3758 = vsel %vm3757, %v3753, %v3756
          %vm3759 = vcmp.eq.f32.partialorder %v3753, 0.0
          %v3760 = vand.u32 %v3753, 2147483648
          %v3761 = vsel %vm3759, %v3760, %v3758
          %v3762 = vrsqrt.pop %v3754
          %v3763 = vmul.f32 %v3754, %v3762
          %vm3764 = vcmp.eq.f32.partialorder %v3754, inf
          %v3765 = vsel %vm3764, %v3754, %v3763
          %vm3766 = vcmp.eq.f32.partialorder %v3754, 0.0
          %v3767 = vand.u32 %v3754, 2147483648
          %v3768 = vsel %vm3766, %v3767, %v3765
          %v3769 = vadd.f32 %v3761, 1e-06
          %v3770 = vadd.f32 %v3768, 1e-06
          %v3771 = vrcp.pop %v3769
          %v3772 = vrcp.pop %v3770
          %v3773 = vlaneseq
          %v3774 = vshrl.u32 %v3773, 7
          %v3775 = vsub.s32 6, %v3774
          %v3776 = vrot.slane %v501, %v3775
          %v3777 = vmul.f32 %v3776, %v3745
          %v3778 = vmul.f32 %v3776, %v3746
          %v3779 = vmul.f32 %v3777, %v3771
          %v3780 = vmul.f32 %v3778, %v3772
          %v3781 = vlaneseq
          %v3782 = vshrl.u32 %v3781, 7
          %v3783 = vsub.s32 7, %v3782
          %v3784 = vrot.slane %v501, %v3783
          %v3785 = vadd.f32 %v3779, %v3784
          %v3786 = vadd.f32 %v3780, %v3784
          %3787 = vst [vmem:[#allocation9] sm:$0xff] %v3785
          %3788 = vst [vmem:[#allocation9 + $0x8] sm:$0xff] %v3786
        $region84: #{tpu_custom_call.1} parent=55 // pred_fallthru
          _
        // Predicated region
        $region85: #{tpu_custom_call.1} parent=55 // pred_check
          %p3789 = pneg %p260
        $region86: #{tpu_custom_call.1} parent=55 // pred_check_branch
          %3791 = sbr.rel (%p3789) target = $region88
        $region87: #{tpu_custom_call.1} parent=55 // pred_region
          %s3793 = ssub.s32 256, 256
          %3794 = vsyncadd [#allocation4], %s3793
          %s3795 = sshll.u32 [#allocation9], 4
          %s3796 = int_to_ptr.vmem [resolvable:$true] %s3795
          %3801 = dma.vmem_to_hbm [thread:$0]  %s3796, 256, %s9, [#allocation4], 128, 128, 8
        $region88: #{tpu_custom_call.1} parent=55 // pred_fallthru
          _
        // Predicated region
        $region89: #{tpu_custom_call.1} parent=55 // pred_check
          %p3802 = pneg %p260
        $region90: #{tpu_custom_call.1} parent=55 // pred_check_branch
          %3804 = sbr.rel (%p3802) target = $region92
        $region91: #{tpu_custom_call.1} parent=55 // pred_region
          %3805 = dma.done [#allocation4], 256
        $region92: #{tpu_custom_call.1} parent=55 // pred_fallthru
          _
      $region56: #{tpu_custom_call.1} parent=5 // pred_fallthru
        _
      %p3806 = scmp.le.s32.totalorder 2, %s18
      // Predicated region
      $region93: #{tpu_custom_call.1} parent=5 // pred_check
        %p3807 = pneg %p3806
      $region94: #{tpu_custom_call.1} parent=5 // pred_check_branch
        %3809 = sbr.rel (%p3807) target = $region96
      $region95: #{tpu_custom_call.1} parent=5 // pred_region
        %s3810 = ssub.s32 %s18, 2
      $region96: #{tpu_custom_call.1} parent=5 // pred_fallthru
        _
    $region6: #{tpu_custom_call.1} parent=1 // loop_footer
      %s22 = sadd.s32 1, %s18
    $region7: #{tpu_custom_call.1} parent=1 // loop_footer_branch
      %17 = sbr.rel target = $region3
    $region8: #{tpu_custom_call.1} parent=1 // loop_exit
      _
    %3811 = vsyncpa [#allocation3], 1
    %s3812 = scalar_lea.sflag [#allocation3], 1
    %3813 = vsyncpa %s3812, 1
    %3814 = vsyncpa [#allocation6], 1
    %3815 = vsyncpa [#allocation4], 1
    %s3816 = scalar_lea.sflag [#allocation4], 1
    %3817 = vsyncpa %s3816, 1

</llo_original>
